<compile_context>
chip_gen: v7x
topology: tpu7x:2x2x1
jax: 0.10.0
libtpu: 0.0.40
codegen_flags: <defaults>
</compile_context>

<pallas_src>
import functools

import jax
import jax.numpy as jnp
from jax.experimental import pallas as pl
from jax.experimental.pallas import tpu as pltpu

NEG_SLOPE = 0.01  # nn.LeakyReLU default negative slope


def _round_up(x, m):
    return ((x + m - 1) // m) * m


@functools.lru_cache(maxsize=1)
def _exp_bf16_ok():
    """bf16 EUP exp is a win on v6e/v7x; v5e and older have no bf16 EUP/VPU."""
    try:
        kind = jax.devices()[0].device_kind.lower()
    except Exception:
        return True
    return not any(g in kind for g in ("v2", "v3", "v4", "v5"))


# ---------------------------------------------------------------------------
# Pallas kernels
# ---------------------------------------------------------------------------
def _chain_kernel(*refs, n_layers, acts):
    """y = (((x @ W0 + b0) act) @ W1 + b1) act ... for a row tile."""
    x_ref = refs[0]
    o_ref = refs[-1]
    h = x_ref[...].astype(jnp.bfloat16)
    for l in range(n_layers):
        w = refs[1 + 2 * l][...]
        b = refs[2 + 2 * l][...]
        h = jnp.dot(h, w, preferred_element_type=jnp.float32) + b
        if acts[l]:
            h = jnp.where(h >= 0, h, NEG_SLOPE * h)
        if l < n_layers - 1:
            h = h.astype(jnp.bfloat16)
    o_ref[...] = h.astype(o_ref.dtype)


def linear_chain(x2d, layers, acts, *, tm_max=1024, out_dtype=jnp.float32):
    """Apply a fused chain of (w, b) layers (BN folded) to (M, Cin) rows."""
    m, cin = x2d.shape
    cout = layers[-1][0].shape[1]
    tm = min(tm_max, _round_up(m, 8))
    mp = _round_up(m, tm)
    xp = x2d if mp == m else jnp.pad(x2d, ((0, mp - m), (0, 0)))

    in_specs = [pl.BlockSpec((tm, cin), lambda i: (i, 0))]
    args = [xp]
    for (w, b) in layers:
        in_specs.append(pl.BlockSpec(w.shape, lambda i: (0, 0)))
        in_specs.append(pl.BlockSpec((1, w.shape[1]), lambda i: (0, 0)))
        args.append(w)
        args.append(b.reshape(1, -1))

    out = pl.pallas_call(
        functools.partial(_chain_kernel, n_layers=len(layers), acts=tuple(acts)),
        out_shape=jax.ShapeDtypeStruct((mp, cout), out_dtype),
        grid=(mp // tm,),
        in_specs=in_specs,
        out_specs=pl.BlockSpec((tm, cout), lambda i: (i, 0)),
        compiler_params=pltpu.CompilerParams(dimension_semantics=("parallel",)),
    )(*args)
    return out[:m] if mp != m else out


def _embed2_max_kernel(x_ref, w1_ref, b1_ref, w2_ref, b2_ref, o_ref, *, knn, tn):
    # x_ref: (K, tn, C) neighbor features.  Stack neighbors along the sublane
    # axis -> a single (K*tn, C) operand, run both LBRD matmuls once (2 MXU
    # pushes instead of 2*K), then take the neighbor max of the K sublane slabs.
    h = jnp.concatenate([x_ref[j].astype(jnp.bfloat16) for j in range(knn)],
                        axis=0)                                          # (K*tn, C)
    h = jnp.dot(h, w1_ref[...], preferred_element_type=jnp.float32) + b1_ref[...]
    h = jnp.where(h >= 0, h, NEG_SLOPE * h)
    h = jnp.dot(h.astype(jnp.bfloat16), w2_ref[...],
                preferred_element_type=jnp.float32) + b2_ref[...]
    h = jnp.where(h >= 0, h, NEG_SLOPE * h)                              # (K*tn, Cout)
    m = h[0:tn, :]
    for j in range(1, knn):
        m = jnp.maximum(m, h[j * tn:(j + 1) * tn, :])
    o_ref[...] = m


def embed2_max(feat, w1, b1, w2, b2, *, tn_max=1024):
    """feat: (B, K, N, C) bf16 -> max_k(LBRD(LBRD(feat))) -> (B, N, Cout) f32."""
    bsz, knn, n, c = feat.shape
    cmid, cout = w1.shape[1], w2.shape[1]
    tn = min(tn_max, _round_up(n, 8))
    npad = _round_up(n, tn)
    if npad != n:
        feat = jnp.pad(feat, ((0, 0), (0, 0), (0, npad - n), (0, 0)))
    out = pl.pallas_call(
        functools.partial(_embed2_max_kernel, knn=knn, tn=tn),
        out_shape=jax.ShapeDtypeStruct((bsz, npad, cout), jnp.float32),
        grid=(bsz, npad // tn),
        in_specs=[
            pl.BlockSpec((None, knn, tn, c), lambda b, i: (b, 0, i, 0)),
            pl.BlockSpec((c, cmid), lambda b, i: (0, 0)),
            pl.BlockSpec((1, cmid), lambda b, i: (0, 0)),
            pl.BlockSpec((cmid, cout), lambda b, i: (0, 0)),
            pl.BlockSpec((1, cout), lambda b, i: (0, 0)),
        ],
        out_specs=pl.BlockSpec((None, tn, cout), lambda b, i: (b, i, 0)),
        compiler_params=pltpu.CompilerParams(
            dimension_semantics=("parallel", "parallel")),
    )(feat, w1, b1.reshape(1, -1), w2, b2.reshape(1, -1))
    return out[:, :n] if npad != n else out


def _attn_tile(n, cap=512):
    """Largest key-tile (multiple of 8) dividing n, capped at `cap`."""
    if n <= cap:
        return n, 1
    if n % 8 == 0:
        for t in range(cap, 7, -8):
            if n % t == 0:
                return t, n // t
    return n, 1  # fallback: untiled (only hit for awkward N)


def _oa_kernel(x_ref, wq_ref, wk_ref, wv_ref, wp_ref, bp_ref, o_ref,
               *, tk, n_tiles, exp_bf16):
    # One batch element of the Offset-Attention block, key-axis column-blocked
    # so only an (N, tk) attention tile is live in VMEM at any time.
    x = x_ref[...]                                                       # (N, C) f32
    n, c = x.shape
    xb = x.astype(jnp.bfloat16)
    qb = jnp.dot(xb, wq_ref[...],
                 preferred_element_type=jnp.float32).astype(jnp.bfloat16)  # (N, co)

    acc = jnp.zeros((n, c), jnp.float32)
    rowsum = jnp.zeros((n, 1), jnp.float32)
    for j in range(n_tiles):
        xt = xb[j * tk:(j + 1) * tk, :]                                  # (tk, C)
        kt = jnp.dot(xt, wk_ref[...], preferred_element_type=jnp.float32)  # (tk, co)
        vt = jnp.dot(xt, wv_ref[...], preferred_element_type=jnp.float32)  # (tk, C)
        # energy[i, jj] = q_i . k_jj  (contract the co axis)
        energy = jax.lax.dot_general(
            qb, kt.astype(jnp.bfloat16),
            (((1,), (1,)), ((), ())), preferred_element_type=jnp.float32)  # (N, tk)
        # torch softmax(dim=1) on (B, N, N) == per-column softmax (over axis 0);
        # columns are fully contained in this tile, so no online-softmax needed.
        e = energy - jnp.max(energy, axis=0, keepdims=True)
        if exp_bf16:
            a = jnp.exp(e.astype(jnp.bfloat16)).astype(jnp.float32)
        else:
            a = jnp.exp(e)
        a = a * pl.reciprocal(jnp.sum(a, axis=0, keepdims=True), approx=True)
        rowsum = rowsum + jnp.sum(a, axis=1, keepdims=True)
        acc = acc + jnp.dot(a.astype(jnp.bfloat16), vt.astype(jnp.bfloat16),
                            preferred_element_type=jnp.float32)          # (N, C)

    x_r = acc * pl.reciprocal(1e-9 + rowsum, approx=True)
    d = (x - x_r).astype(jnp.bfloat16)
    y = jnp.dot(d, wp_ref[...], preferred_element_type=jnp.float32) + bp_ref[...]
    y = jnp.where(y >= 0, y, NEG_SLOPE * y)
    o_ref[...] = y + x


def oa_layer(x, p):
    b, n, c = x.shape
    tk, n_tiles = _attn_tile(n)
    # TODO(synk): with grid=(b,) and small B, one v7x TensorCore can idle; a
    # two-pass formulation that also row-tiles the output would keep both busy.
    return pl.pallas_call(
        functools.partial(_oa_kernel, tk=tk, n_tiles=n_tiles,
                          exp_bf16=_exp_bf16_ok()),
        out_shape=jax.ShapeDtypeStruct((b, n, c), jnp.float32),
        grid=(b,),
        in_specs=[
            pl.BlockSpec((None, n, c), lambda i: (i, 0, 0)),
            pl.BlockSpec(p["wq"].shape, lambda i: (0, 0)),
            pl.BlockSpec(p["wk"].shape, lambda i: (0, 0)),
            pl.BlockSpec(p["wv"].shape, lambda i: (0, 0)),
            pl.BlockSpec(p["wp"].shape, lambda i: (0, 0)),
            pl.BlockSpec((1, c), lambda i: (0, 0)),
        ],
        out_specs=pl.BlockSpec((None, n, c), lambda i: (i, 0, 0)),
        compiler_params=pltpu.CompilerParams(dimension_semantics=("parallel",)),
    )(x, p["wq"], p["wk"], p["wv"], p["wp"], p["bp"].reshape(1, -1))


def _gf_kernel(x_ref, mx_ref, mn_ref):
    x = x_ref[...].astype(jnp.float32)                   # (N, G)
    mx_ref[...] = jnp.max(x, axis=0, keepdims=True)
    mn_ref[...] = jnp.mean(x, axis=0, keepdims=True)


def global_features(x):
    b, n, g = x.shape
    return pl.pallas_call(
        _gf_kernel,
        out_shape=(jax.ShapeDtypeStruct((b, 1, g), jnp.float32),
                   jax.ShapeDtypeStruct((b, 1, g), jnp.float32)),
        grid=(b,),
        in_specs=[pl.BlockSpec((None, n, g), lambda i: (i, 0, 0))],
        out_specs=(pl.BlockSpec((None, 1, g), lambda i: (i, 0, 0)),
                   pl.BlockSpec((None, 1, g), lambda i: (i, 0, 0))),
        compiler_params=pltpu.CompilerParams(dimension_semantics=("parallel",)),
    )(x)


def _head_kernel(x_ref, b1_ref, w1_ref, w2_ref, b2_ref, w3_ref, b3_ref, o_ref):
    # Fused segmentation head: lbrd1 -> lbrd2 -> linear.
    # b1_ref already contains gf/category contribution + BN shift (per batch).
    h = jnp.dot(x_ref[...].astype(jnp.bfloat16), w1_ref[...],
                preferred_element_type=jnp.float32) + b1_ref[...]
    h = jnp.where(h >= 0, h, NEG_SLOPE * h)
    h = jnp.dot(h.astype(jnp.bfloat16), w2_ref[...],
                preferred_element_type=jnp.float32) + b2_ref[...]
    h = jnp.where(h >= 0, h, NEG_SLOPE * h)
    o_ref[...] = jnp.dot(h.astype(jnp.bfloat16), w3_ref[...],
                         preferred_element_type=jnp.float32) + b3_ref[...]


def seg_head(xg, bias1, w1x, w2, b2, w3, b3, *, tn_max=1024):
    bsz, n, g = xg.shape
    c2 = w2.shape[0]
    ncls = w3.shape[1]
    tn = min(tn_max, _round_up(n, 8))
    npad = _round_up(n, tn)
    if npad != n:
        xg = jnp.pad(xg, ((0, 0), (0, npad - n), (0, 0)))
    bias1_r = bias1.reshape(bsz, 1, c2)
    out = pl.pallas_call(
        _head_kernel,
        out_shape=jax.ShapeDtypeStruct((bsz, npad, ncls), jnp.float32),
        grid=(bsz, npad // tn),
        in_specs=[
            pl.BlockSpec((None, tn, g), lambda b, i: (b, i, 0)),
            pl.BlockSpec((None, 1, c2), lambda b, i: (b, 0, 0)),
            pl.BlockSpec((g, c2), lambda b, i: (0, 0)),
            pl.BlockSpec((c2, c2), lambda b, i: (0, 0)),
            pl.BlockSpec((1, c2), lambda b, i: (0, 0)),
            pl.BlockSpec((c2, ncls), lambda b, i: (0, 0)),
            pl.BlockSpec((1, ncls), lambda b, i: (0, 0)),
        ],
        out_specs=pl.BlockSpec((None, tn, ncls), lambda b, i: (b, i, 0)),
        compiler_params=pltpu.CompilerParams(
            dimension_semantics=("parallel", "parallel")),
    )(xg, bias1_r, w1x, w2, b2.reshape(1, -1), w3, b3.reshape(1, -1))
    return out[:, :n] if npad != n else out


# ---------------------------------------------------------------------------
# Parameter initialization (deterministic, synthetic; BN eval stats folded)
# ---------------------------------------------------------------------------
def _conv_weight(key, cout, cin):
    # stored pre-transposed as (Cin, Cout) so kernels compute x @ w
    return jax.random.normal(key, (cin, cout), jnp.float32) / jnp.sqrt(cin)


def _bn_affine(key, c, eps=1e-5):
    k1, k2, k3, k4 = jax.random.split(key, 4)
    gamma = jax.random.uniform(k1, (c,), minval=0.8, maxval=1.2)
    beta = jax.random.normal(k2, (c,)) * 0.1
    rmean = jax.random.normal(k3, (c,)) * 0.1
    rvar = jax.random.uniform(k4, (c,), minval=0.8, maxval=1.2)
    scale = gamma / jnp.sqrt(rvar + eps)
    shift = beta - rmean * scale
    return scale.astype(jnp.float32), shift.astype(jnp.float32)


def _lbrd_params(key, cin, cout):
    # BN scale folded into the weight columns; only a bias remains.
    kw, kb = jax.random.split(key)
    w = _conv_weight(kw, cout, cin)
    s, sh = _bn_affine(kb, cout)
    return {"w": (w * s[None, :]).astype(jnp.bfloat16), "b": sh}


def _lbrd_split_params(key, cin_x, cin_g, cout):
    # LBRD whose input is [per-point features | per-batch broadcast features];
    # the broadcast part ("wg") is applied once per batch in plain JAX.
    kw, kb = jax.random.split(key)
    w = _conv_weight(kw, cout, cin_x + cin_g)
    s, sh = _bn_affine(kb, cout)
    w = w * s[None, :]
    return {"wx": w[:cin_x].astype(jnp.bfloat16), "wg": w[cin_x:], "b": sh}


def _oa_params(key, c, co):
    ks = jax.random.split(key, 4)
    proj = _lbrd_params(ks[3], c, c)
    return {"wq": _conv_weight(ks[0], co, c).astype(jnp.bfloat16),
            "wk": _conv_weight(ks[1], co, c).astype(jnp.bfloat16),
            "wv": _conv_weight(ks[2], c, c).astype(jnp.bfloat16),
            "wp": proj["w"], "bp": proj["b"]}


def init_params(key, dim_in=3, dim_embed=16, global_feats=32, dim_cat=8, n_classes=5):
    keys = jax.random.split(key, 16)
    c2 = 2 * dim_embed
    co = dim_embed // 4
    return {
        "embed1": [_lbrd_params(keys[0], dim_in, dim_embed),
                   _lbrd_params(keys[1], dim_embed, dim_embed)],
        "embed2": [_lbrd_params(keys[2], c2, c2),
                   _lbrd_params(keys[3], c2, c2)],
        "oa1": _oa_params(keys[4], c2, co),
        "oa2": _oa_params(keys[5], c2, co),
        "oa3": _oa_params(keys[6], c2, co),
        "oa4": _oa_params(keys[7], c2, co),
        "lbr1": _lbrd_params(keys[8], dim_embed * 8, global_feats),
        "emb_table": jax.random.normal(keys[9], (2, dim_cat), jnp.float32),
        "embed_conv_w": _conv_weight(keys[10], dim_cat, dim_cat),
        "embed_conv_b": jax.random.normal(keys[11], (dim_cat,), jnp.float32) * 0.1,
        "lbrd1": _lbrd_split_params(keys[12], global_feats,
                                    global_feats * 2 + dim_cat, c2),
        "lbrd2": _lbrd_params(keys[13], c2, c2),
        "linear_w": _conv_weight(keys[14], n_classes, c2).astype(jnp.bfloat16),
        "linear_b": jax.random.normal(keys[15], (n_classes,), jnp.float32) * 0.1,
    }


# ---------------------------------------------------------------------------
# Forward pass (PCTransformer -> PCTsegmentation, eval semantics)
# ---------------------------------------------------------------------------
def pct_forward(params, x, category, knn_k=4):
    b, n, _ = x.shape

    # ---- NeighborEmbedding: embed1 (two fused LBRDs), bf16 output stream ----
    e1 = params["embed1"]
    h = linear_chain(x.reshape(b * n, -1),
                     [(e1[0]["w"], e1[0]["b"]), (e1[1]["w"], e1[1]["b"])],
                     acts=(True, True), out_dtype=jnp.bfloat16
                     ).reshape(b, n, -1)                              # (B, N, E) bf16

    # TODO(synk): kdneighGPU is an external CUDA op; implemented as feature-space
    # kNN grouping with [neighbor - center, center] channel concat (standard PCT).
    # The distance/top_k/gather stay in XLA (bf16 inputs, f32 accumulation).
    # TODO(synk): a tiled Pallas kNN (q-row tiles, h resident in VMEM) would keep
    # the (B, N, N) distance matrix out of HBM entirely.
    h32 = h.astype(jnp.float32)
    sq = jnp.sum(h32 * h32, axis=-1)
    dist = (sq[:, :, None]
            - 2.0 * jnp.einsum("bnc,bmc->bnm", h, h,
                               preferred_element_type=jnp.float32)
            + sq[:, None, :])
    _, idx = jax.lax.top_k(-dist, knn_k)                             # (B, N, k)
    idx_t = jnp.swapaxes(idx, 1, 2)                                  # (B, k, N)
    gathered = jax.vmap(lambda f, i: f[i])(h, idx_t)                 # (B, k, N, E) bf16
    center = jnp.broadcast_to(h[:, None, :, :], gathered.shape)
    feat = jnp.concatenate([gathered - center, center], axis=-1)     # (B, k, N, 2E) bf16

    # ---- embed2 (two fused LBRDs, single stacked matmul) + neighbor max ----
    e2 = params["embed2"]
    x_e = embed2_max(feat, e2[0]["w"], e2[0]["b"], e2[1]["w"], e2[1]["b"])  # (B,N,2E) f32

    # ---- Offset-Attention stack (column-blocked softmax) ----
    oa1 = oa_layer(x_e, params["oa1"])
    oa2 = oa_layer(oa1, params["oa2"])
    oa3 = oa_layer(oa2, params["oa3"])
    oa4 = oa_layer(oa3, params["oa4"])
    xcat = jnp.concatenate([oa1, oa2, oa3, oa4], axis=2)             # (B, N, 8E)

    lbr1 = params["lbr1"]
    xg = linear_chain(xcat.reshape(b * n, -1), [(lbr1["w"], lbr1["b"])],
                      acts=(True,), out_dtype=jnp.bfloat16
                      ).reshape(b, n, -1)                            # (B, N, G) bf16

    # ---- Segmentation head ----
    # Tiny per-batch pieces stay in plain JAX (category embedding + conv, and
    # the per-batch global-feature contribution to lbrd1's bias).
    cat_emb = params["emb_table"][category]                          # (B, dim_cat)
    cat_emb = cat_emb @ params["embed_conv_w"] + params["embed_conv_b"]
    gfmax, gfmean = global_features(xg)                              # (B, 1, G) each
    gf = jnp.concatenate([gfmax[:, 0], gfmean[:, 0], cat_emb], axis=1)  # (B, 2G+cat)
    bias1 = gf @ params["lbrd1"]["wg"] + params["lbrd1"]["b"]        # (B, C2)

    logits = seg_head(xg, bias1,
                      params["lbrd1"]["wx"],
                      params["lbrd2"]["w"], params["lbrd2"]["b"],
                      params["linear_w"], params["linear_b"])        # (B, N, k)
    return logits


if __name__ == "__main__":
    key = jax.random.PRNGKey(0)
    kp, kx, kc = jax.random.split(key, 3)
    B, N, DIM_IN, N_CLASSES = 2, 8, 3, 5
    params = init_params(kp, dim_in=DIM_IN, dim_embed=16, global_feats=32,
                         dim_cat=8, n_classes=N_CLASSES)
    x = jax.random.normal(kx, (B, N, DIM_IN), jnp.float32)           # point cloud
    category = jax.random.randint(kc, (B,), 0, 2).astype(jnp.int32)  # "jaw" category
    out = jax.jit(pct_forward)(params, x, category)
    out = jax.block_until_ready(out)
    assert out.shape == (B, N, N_CLASSES) and out.dtype == jnp.float32
    print("KERNEL_OK")
</pallas_src>

<mosaic_0001>
module attributes {stable_mosaic.version = 11 : i64} {
  func.func @_chain_kernel(%arg0: i32, %arg1: memref<16x3xf32, #tpu.memory_space<vmem>>, %arg2: memref<3x16xbf16, #tpu.memory_space<vmem>>, %arg3: memref<1x16xf32, #tpu.memory_space<vmem>>, %arg4: memref<16x16xbf16, #tpu.memory_space<vmem>>, %arg5: memref<1x16xf32, #tpu.memory_space<vmem>>, %arg6: memref<16x16xbf16, #tpu.memory_space<vmem>>) attributes {dimension_semantics = [#tpu.dimension_semantics<parallel>], iteration_bounds = array<i64: 1>, scalar_prefetch = 0 : i64, scratch_operands = 0 : i64, tpu.core_type = #tpu.core_type<tc>, window_params = [{transform_indices = @transform_0, window_bounds = array<i64: 16, 3>}, {pipeline_mode = #tpu.pipeline_mode<synchronous>, transform_indices = @transform_1, window_bounds = array<i64: 3, 16>}, {pipeline_mode = #tpu.pipeline_mode<synchronous>, transform_indices = @transform_2, window_bounds = array<i64: 1, 16>}, {pipeline_mode = #tpu.pipeline_mode<synchronous>, transform_indices = @transform_3, window_bounds = array<i64: 16, 16>}, {pipeline_mode = #tpu.pipeline_mode<synchronous>, transform_indices = @transform_4, window_bounds = array<i64: 1, 16>}, {transform_indices = @transform_5, window_bounds = array<i64: 16, 16>}]} {
    %c0 = arith.constant 0 : index
    %c0_0 = arith.constant 0 : index
    %0 = vector.load %arg1[%c0, %c0_0] : memref<16x3xf32, #tpu.memory_space<vmem>>, vector<16x3xf32>
    %1 = arith.truncf %0 : vector<16x3xf32> to vector<16x3xbf16>
    %c0_1 = arith.constant 0 : index
    %c0_2 = arith.constant 0 : index
    %2 = vector.load %arg2[%c0_1, %c0_2] : memref<3x16xbf16, #tpu.memory_space<vmem>>, vector<3x16xbf16>
    %c0_3 = arith.constant 0 : index
    %c0_4 = arith.constant 0 : index
    %3 = vector.load %arg3[%c0_3, %c0_4] : memref<1x16xf32, #tpu.memory_space<vmem>>, vector<1x16xf32>
    %cst = arith.constant dense<0.000000e+00> : vector<16x16xf32>
    %4 = tpu.matmul %1, %2, %cst {dimension_numbers = #tpu.dot_dimension_numbers<[1], [0], [0], [1], [0, 0, 1, 1], [], []>} : vector<16x3xbf16>, vector<3x16xbf16>, vector<16x16xf32> -> vector<16x16xf32>
    %5 = vector.broadcast %3 : vector<1x16xf32> to vector<16x16xf32>
    %6 = arith.addf %4, %5 : vector<16x16xf32>
    %cst_5 = arith.constant 0.000000e+00 : f32
    %7 = vector.broadcast %cst_5 : f32 to vector<16x16xf32>
    %8 = arith.cmpf oge, %6, %7 : vector<16x16xf32>
    %cst_6 = arith.constant 0.00999999977 : f32
    %9 = vector.broadcast %cst_6 : f32 to vector<16x16xf32>
    %10 = arith.mulf %9, %6 : vector<16x16xf32>
    %11 = arith.select %8, %6, %10 : vector<16x16xi1>, vector<16x16xf32>
    %12 = arith.truncf %11 : vector<16x16xf32> to vector<16x16xbf16>
    %c0_7 = arith.constant 0 : index
    %c0_8 = arith.constant 0 : index
    %13 = vector.load %arg4[%c0_7, %c0_8] : memref<16x16xbf16, #tpu.memory_space<vmem>>, vector<16x16xbf16>
    %c0_9 = arith.constant 0 : index
    %c0_10 = arith.constant 0 : index
    %14 = vector.load %arg5[%c0_9, %c0_10] : memref<1x16xf32, #tpu.memory_space<vmem>>, vector<1x16xf32>
    %cst_11 = arith.constant dense<0.000000e+00> : vector<16x16xf32>
    %15 = tpu.matmul %12, %13, %cst_11 {dimension_numbers = #tpu.dot_dimension_numbers<[1], [0], [0], [1], [0, 0, 1, 1], [], []>} : vector<16x16xbf16>, vector<16x16xbf16>, vector<16x16xf32> -> vector<16x16xf32>
    %16 = vector.broadcast %14 : vector<1x16xf32> to vector<16x16xf32>
    %17 = arith.addf %15, %16 : vector<16x16xf32>
    %cst_12 = arith.constant 0.000000e+00 : f32
    %18 = vector.broadcast %cst_12 : f32 to vector<16x16xf32>
    %19 = arith.cmpf oge, %17, %18 : vector<16x16xf32>
    %cst_13 = arith.constant 0.00999999977 : f32
    %20 = vector.broadcast %cst_13 : f32 to vector<16x16xf32>
    %21 = arith.mulf %20, %17 : vector<16x16xf32>
    %22 = arith.select %19, %17, %21 : vector<16x16xi1>, vector<16x16xf32>
    %23 = arith.truncf %22 : vector<16x16xf32> to vector<16x16xbf16>
    %c0_14 = arith.constant 0 : index
    %c0_15 = arith.constant 0 : index
    %24 = vector.load %arg6[%c0_14, %c0_15] : memref<16x16xbf16, #tpu.memory_space<vmem>>, vector<16x16xbf16>
    tpu.vector_store %arg6[%c0_14, %c0_15], %23 {strides = array<i32>} : memref<16x16xbf16, #tpu.memory_space<vmem>>, vector<16x16xbf16>,
    return
  }
  func.func @transform_0(%arg0: i32) -> (i32, i32) {
    %c0_i32 = arith.constant 0 : i32
    %c0_i32_0 = arith.constant 0 : i32
    return %arg0, %c0_i32 : i32, i32
  }
  func.func @transform_1(%arg0: i32) -> (i32, i32) {
    %c0_i32 = arith.constant 0 : i32
    %c0_i32_0 = arith.constant 0 : i32
    %c0_i32_1 = arith.constant 0 : i32
    return %c0_i32, %c0_i32_0 : i32, i32
  }
  func.func @transform_2(%arg0: i32) -> (i32, i32) {
    %c0_i32 = arith.constant 0 : i32
    %c0_i32_0 = arith.constant 0 : i32
    %c0_i32_1 = arith.constant 0 : i32
    return %c0_i32, %c0_i32_0 : i32, i32
  }
  func.func @transform_3(%arg0: i32) -> (i32, i32) {
    %c0_i32 = arith.constant 0 : i32
    %c0_i32_0 = arith.constant 0 : i32
    %c0_i32_1 = arith.constant 0 : i32
    return %c0_i32, %c0_i32_0 : i32, i32
  }
  func.func @transform_4(%arg0: i32) -> (i32, i32) {
    %c0_i32 = arith.constant 0 : i32
    %c0_i32_0 = arith.constant 0 : i32
    %c0_i32_1 = arith.constant 0 : i32
    return %c0_i32, %c0_i32_0 : i32, i32
  }
  func.func @transform_5(%arg0: i32) -> (i32, i32) {
    %c0_i32 = arith.constant 0 : i32
    %c0_i32_0 = arith.constant 0 : i32
    return %arg0, %c0_i32 : i32, i32
  }
}

module attributes {stable_mosaic.version = 11 : i64} {
  func.func @_embed2_max_kernel(%arg0: i32, %arg1: i32, %arg2: memref<1x4x8x32xbf16, #tpu.memory_space<vmem>>, %arg3: memref<32x32xbf16, #tpu.memory_space<vmem>>, %arg4: memref<1x32xf32, #tpu.memory_space<vmem>>, %arg5: memref<32x32xbf16, #tpu.memory_space<vmem>>, %arg6: memref<1x32xf32, #tpu.memory_space<vmem>>, %arg7: memref<1x8x32xf32, #tpu.memory_space<vmem>>) attributes {dimension_semantics = [#tpu.dimension_semantics<parallel>, #tpu.dimension_semantics<parallel>], iteration_bounds = array<i64: 2, 1>, scalar_prefetch = 0 : i64, scratch_operands = 0 : i64, tpu.core_type = #tpu.core_type<tc>, window_params = [{transform_indices = @transform_0, window_bounds = array<i64: 1, 4, 8, 32>}, {pipeline_mode = #tpu.pipeline_mode<synchronous>, transform_indices = @transform_1, window_bounds = array<i64: 32, 32>}, {pipeline_mode = #tpu.pipeline_mode<synchronous>, transform_indices = @transform_2, window_bounds = array<i64: 1, 32>}, {pipeline_mode = #tpu.pipeline_mode<synchronous>, transform_indices = @transform_3, window_bounds = array<i64: 32, 32>}, {pipeline_mode = #tpu.pipeline_mode<synchronous>, transform_indices = @transform_4, window_bounds = array<i64: 1, 32>}, {transform_indices = @transform_5, window_bounds = array<i64: 1, 8, 32>}]} {
    %c0 = arith.constant 0 : index
    %c0_0 = arith.constant 0 : index
    %c0_1 = arith.constant 0 : index
    %c0_2 = arith.constant 0 : index
    %0 = vector.load %arg2[%c0, %c0_0, %c0_1, %c0_2] : memref<1x4x8x32xbf16, #tpu.memory_space<vmem>>, vector<1x1x8x32xbf16>
    %1 = vector.shape_cast %0 : vector<1x1x8x32xbf16> to vector<8x32xbf16>
    %c0_3 = arith.constant 0 : index
    %c1 = arith.constant 1 : index
    %c0_4 = arith.constant 0 : index
    %c0_5 = arith.constant 0 : index
    %2 = vector.load %arg2[%c0_3, %c1, %c0_4, %c0_5] : memref<1x4x8x32xbf16, #tpu.memory_space<vmem>>, vector<1x1x8x32xbf16>
    %3 = vector.shape_cast %2 : vector<1x1x8x32xbf16> to vector<8x32xbf16>
    %c0_6 = arith.constant 0 : index
    %c2 = arith.constant 2 : index
    %c0_7 = arith.constant 0 : index
    %c0_8 = arith.constant 0 : index
    %4 = vector.load %arg2[%c0_6, %c2, %c0_7, %c0_8] : memref<1x4x8x32xbf16, #tpu.memory_space<vmem>>, vector<1x1x8x32xbf16>
    %5 = vector.shape_cast %4 : vector<1x1x8x32xbf16> to vector<8x32xbf16>
    %c0_9 = arith.constant 0 : index
    %c3 = arith.constant 3 : index
    %c0_10 = arith.constant 0 : index
    %c0_11 = arith.constant 0 : index
    %6 = vector.load %arg2[%c0_9, %c3, %c0_10, %c0_11] : memref<1x4x8x32xbf16, #tpu.memory_space<vmem>>, vector<1x1x8x32xbf16>
    %7 = vector.shape_cast %6 : vector<1x1x8x32xbf16> to vector<8x32xbf16>
    %8 = tpu.concatenate %1, %3, %5, %7 in 0 : vector<8x32xbf16>, vector<8x32xbf16>, vector<8x32xbf16>, vector<8x32xbf16> -> vector<32x32xbf16>
    %c0_12 = arith.constant 0 : index
    %c0_13 = arith.constant 0 : index
    %9 = vector.load %arg3[%c0_12, %c0_13] : memref<32x32xbf16, #tpu.memory_space<vmem>>, vector<32x32xbf16>
    %cst = arith.constant dense<0.000000e+00> : vector<32x32xf32>
    %10 = tpu.matmul %8, %9, %cst {dimension_numbers = #tpu.dot_dimension_numbers<[1], [0], [0], [1], [0, 0, 1, 1], [], []>} : vector<32x32xbf16>, vector<32x32xbf16>, vector<32x32xf32> -> vector<32x32xf32>
    %c0_14 = arith.constant 0 : index
    %c0_15 = arith.constant 0 : index
    %11 = vector.load %arg4[%c0_14, %c0_15] : memref<1x32xf32, #tpu.memory_space<vmem>>, vector<1x32xf32>
    %12 = vector.broadcast %11 : vector<1x32xf32> to vector<32x32xf32>
    %13 = arith.addf %10, %12 : vector<32x32xf32>
    %cst_16 = arith.constant 0.000000e+00 : f32
    %14 = vector.broadcast %cst_16 : f32 to vector<32x32xf32>
    %15 = arith.cmpf oge, %13, %14 : vector<32x32xf32>
    %cst_17 = arith.constant 0.00999999977 : f32
    %16 = vector.broadcast %cst_17 : f32 to vector<32x32xf32>
    %17 = arith.mulf %16, %13 : vector<32x32xf32>
    %18 = arith.select %15, %13, %17 : vector<32x32xi1>, vector<32x32xf32>
    %19 = arith.truncf %18 : vector<32x32xf32> to vector<32x32xbf16>
    %c0_18 = arith.constant 0 : index
    %c0_19 = arith.constant 0 : index
    %20 = vector.load %arg5[%c0_18, %c0_19] : memref<32x32xbf16, #tpu.memory_space<vmem>>, vector<32x32xbf16>
    %cst_20 = arith.constant dense<0.000000e+00> : vector<32x32xf32>
    %21 = tpu.matmul %19, %20, %cst_20 {dimension_numbers = #tpu.dot_dimension_numbers<[1], [0], [0], [1], [0, 0, 1, 1], [], []>} : vector<32x32xbf16>, vector<32x32xbf16>, vector<32x32xf32> -> vector<32x32xf32>
    %c0_21 = arith.constant 0 : index
    %c0_22 = arith.constant 0 : index
    %22 = vector.load %arg6[%c0_21, %c0_22] : memref<1x32xf32, #tpu.memory_space<vmem>>, vector<1x32xf32>
    %23 = vector.broadcast %22 : vector<1x32xf32> to vector<32x32xf32>
    %24 = arith.addf %21, %23 : vector<32x32xf32>
    %cst_23 = arith.constant 0.000000e+00 : f32
    %25 = vector.broadcast %cst_23 : f32 to vector<32x32xf32>
    %26 = arith.cmpf oge, %24, %25 : vector<32x32xf32>
    %cst_24 = arith.constant 0.00999999977 : f32
    %27 = vector.broadcast %cst_24 : f32 to vector<32x32xf32>
    %28 = arith.mulf %27, %24 : vector<32x32xf32>
    %29 = arith.select %26, %24, %28 : vector<32x32xi1>, vector<32x32xf32>
    %30 = vector.extract_strided_slice %29 {offsets = [0, 0], sizes = [8, 32], strides = [1, 1]} : vector<32x32xf32> to vector<8x32xf32>
    %31 = vector.extract_strided_slice %29 {offsets = [8, 0], sizes = [8, 32], strides = [1, 1]} : vector<32x32xf32> to vector<8x32xf32>
    %32 = arith.maximumf %30, %31 : vector<8x32xf32>
    %33 = vector.extract_strided_slice %29 {offsets = [16, 0], sizes = [8, 32], strides = [1, 1]} : vector<32x32xf32> to vector<8x32xf32>
    %34 = arith.maximumf %32, %33 : vector<8x32xf32>
    %35 = vector.extract_strided_slice %29 {offsets = [24, 0], sizes = [8, 32], strides = [1, 1]} : vector<32x32xf32> to vector<8x32xf32>
    %36 = arith.maximumf %34, %35 : vector<8x32xf32>
    %c0_25 = arith.constant 0 : index
    %c0_26 = arith.constant 0 : index
    %c0_27 = arith.constant 0 : index
    %37 = vector.load %arg7[%c0_25, %c0_26, %c0_27] : memref<1x8x32xf32, #tpu.memory_space<vmem>>, vector<1x8x32xf32>
    %38 = vector.shape_cast %37 : vector<1x8x32xf32> to vector<8x32xf32>
    %39 = vector.shape_cast %36 : vector<8x32xf32> to vector<1x8x32xf32>
    tpu.vector_store %arg7[%c0_25, %c0_26, %c0_27], %39 {strides = array<i32>} : memref<1x8x32xf32, #tpu.memory_space<vmem>>, vector<1x8x32xf32>,
    return
  }
  func.func @transform_0(%arg0: i32, %arg1: i32) -> (i32, i32, i32, i32) {
    %c0_i32 = arith.constant 0 : i32
    %c0_i32_0 = arith.constant 0 : i32
    %c0_i32_1 = arith.constant 0 : i32
    return %arg0, %c0_i32, %arg1, %c0_i32_0 : i32, i32, i32, i32
  }
  func.func @transform_1(%arg0: i32, %arg1: i32) -> (i32, i32) {
    %c0_i32 = arith.constant 0 : i32
    %c0_i32_0 = arith.constant 0 : i32
    %c0_i32_1 = arith.constant 0 : i32
    return %c0_i32, %c0_i32_0 : i32, i32
  }
  func.func @transform_2(%arg0: i32, %arg1: i32) -> (i32, i32) {
    %c0_i32 = arith.constant 0 : i32
    %c0_i32_0 = arith.constant 0 : i32
    %c0_i32_1 = arith.constant 0 : i32
    return %c0_i32, %c0_i32_0 : i32, i32
  }
  func.func @transform_3(%arg0: i32, %arg1: i32) -> (i32, i32) {
    %c0_i32 = arith.constant 0 : i32
    %c0_i32_0 = arith.constant 0 : i32
    %c0_i32_1 = arith.constant 0 : i32
    return %c0_i32, %c0_i32_0 : i32, i32
  }
  func.func @transform_4(%arg0: i32, %arg1: i32) -> (i32, i32) {
    %c0_i32 = arith.constant 0 : i32
    %c0_i32_0 = arith.constant 0 : i32
    %c0_i32_1 = arith.constant 0 : i32
    return %c0_i32, %c0_i32_0 : i32, i32
  }
  func.func @transform_5(%arg0: i32, %arg1: i32) -> (i32, i32, i32) {
    %c0_i32 = arith.constant 0 : i32
    %c0_i32_0 = arith.constant 0 : i32
    return %arg0, %arg1, %c0_i32 : i32, i32, i32
  }
}

module attributes {stable_mosaic.version = 11 : i64} {
  func.func @_oa_kernel(%arg0: i32, %arg1: memref<1x8x32xf32, #tpu.memory_space<vmem>>, %arg2: memref<32x4xbf16, #tpu.memory_space<vmem>>, %arg3: memref<32x4xbf16, #tpu.memory_space<vmem>>, %arg4: memref<32x32xbf16, #tpu.memory_space<vmem>>, %arg5: memref<32x32xbf16, #tpu.memory_space<vmem>>, %arg6: memref<1x32xf32, #tpu.memory_space<vmem>>, %arg7: memref<1x8x32xf32, #tpu.memory_space<vmem>>) attributes {dimension_semantics = [#tpu.dimension_semantics<parallel>], iteration_bounds = array<i64: 2>, scalar_prefetch = 0 : i64, scratch_operands = 0 : i64, tpu.core_type = #tpu.core_type<tc>, window_params = [{transform_indices = @transform_0, window_bounds = array<i64: 1, 8, 32>}, {pipeline_mode = #tpu.pipeline_mode<synchronous>, transform_indices = @transform_1, window_bounds = array<i64: 32, 4>}, {pipeline_mode = #tpu.pipeline_mode<synchronous>, transform_indices = @transform_2, window_bounds = array<i64: 32, 4>}, {pipeline_mode = #tpu.pipeline_mode<synchronous>, transform_indices = @transform_3, window_bounds = array<i64: 32, 32>}, {pipeline_mode = #tpu.pipeline_mode<synchronous>, transform_indices = @transform_4, window_bounds = array<i64: 32, 32>}, {pipeline_mode = #tpu.pipeline_mode<synchronous>, transform_indices = @transform_5, window_bounds = array<i64: 1, 32>}, {transform_indices = @transform_6, window_bounds = array<i64: 1, 8, 32>}]} {
    %c0 = arith.constant 0 : index
    %c0_0 = arith.constant 0 : index
    %c0_1 = arith.constant 0 : index
    %0 = vector.load %arg1[%c0, %c0_0, %c0_1] : memref<1x8x32xf32, #tpu.memory_space<vmem>>, vector<1x8x32xf32>
    %1 = vector.shape_cast %0 : vector<1x8x32xf32> to vector<8x32xf32>
    %2 = arith.truncf %1 : vector<8x32xf32> to vector<8x32xbf16>
    %c0_2 = arith.constant 0 : index
    %c0_3 = arith.constant 0 : index
    %3 = vector.load %arg2[%c0_2, %c0_3] : memref<32x4xbf16, #tpu.memory_space<vmem>>, vector<32x4xbf16>
    %cst = arith.constant dense<0.000000e+00> : vector<8x4xf32>
    %4 = tpu.matmul %2, %3, %cst {dimension_numbers = #tpu.dot_dimension_numbers<[1], [0], [0], [1], [0, 0, 1, 1], [], []>} : vector<8x32xbf16>, vector<32x4xbf16>, vector<8x4xf32> -> vector<8x4xf32>
    %5 = arith.truncf %4 : vector<8x4xf32> to vector<8x4xbf16>
    %cst_4 = arith.constant 0.000000e+00 : f32
    %6 = vector.broadcast %cst_4 : f32 to vector<8x32xf32>
    %cst_5 = arith.constant 0.000000e+00 : f32
    %7 = vector.broadcast %cst_5 : f32 to vector<8x1xf32>
    %c0_6 = arith.constant 0 : index
    %c0_7 = arith.constant 0 : index
    %8 = vector.load %arg3[%c0_6, %c0_7] : memref<32x4xbf16, #tpu.memory_space<vmem>>, vector<32x4xbf16>
    %cst_8 = arith.constant dense<0.000000e+00> : vector<8x4xf32>
    %9 = tpu.matmul %2, %8, %cst_8 {dimension_numbers = #tpu.dot_dimension_numbers<[1], [0], [0], [1], [0, 0, 1, 1], [], []>} : vector<8x32xbf16>, vector<32x4xbf16>, vector<8x4xf32> -> vector<8x4xf32>
    %c0_9 = arith.constant 0 : index
    %c0_10 = arith.constant 0 : index
    %10 = vector.load %arg4[%c0_9, %c0_10] : memref<32x32xbf16, #tpu.memory_space<vmem>>, vector<32x32xbf16>
    %cst_11 = arith.constant dense<0.000000e+00> : vector<8x32xf32>
    %11 = tpu.matmul %2, %10, %cst_11 {dimension_numbers = #tpu.dot_dimension_numbers<[1], [0], [0], [1], [0, 0, 1, 1], [], []>} : vector<8x32xbf16>, vector<32x32xbf16>, vector<8x32xf32> -> vector<8x32xf32>
    %12 = arith.truncf %9 : vector<8x4xf32> to vector<8x4xbf16>
    %cst_12 = arith.constant dense<0.000000e+00> : vector<8x8xf32>
    %13 = tpu.matmul %5, %12, %cst_12 {dimension_numbers = #tpu.dot_dimension_numbers<[1], [1], [0], [0], [0, 0, 1, 0], [], []>} : vector<8x4xbf16>, vector<8x4xbf16>, vector<8x8xf32> -> vector<8x8xf32>
    %cst_13 = arith.constant dense<0xFF800000> : vector<8xf32>
    %14 = vector.multi_reduction <maximumf>, %13, %cst_13 [0] : vector<8x8xf32> to vector<8xf32>
    %15 = vector.shape_cast %14 : vector<8xf32> to vector<1x8xf32>
    %16 = vector.broadcast %15 : vector<1x8xf32> to vector<8x8xf32>
    %17 = arith.subf %13, %16 : vector<8x8xf32>
    %18 = arith.truncf %17 : vector<8x8xf32> to vector<8x8xbf16>
    %19 = math.exp %18 : vector<8x8xbf16>
    %20 = arith.extf %19 : vector<8x8xbf16> to vector<8x8xf32>
    %cst_14 = arith.constant dense<0.000000e+00> : vector<8xf32>
    %21 = vector.multi_reduction <add>, %20, %cst_14 [0] : vector<8x8xf32> to vector<8xf32>
    %22 = vector.shape_cast %21 : vector<8xf32> to vector<1x8xf32>
    %23 = tpu.reciprocal %22 {approx = true} : vector<1x8xf32> -> vector<1x8xf32>
    %24 = vector.broadcast %23 : vector<1x8xf32> to vector<8x8xf32>
    %25 = arith.mulf %20, %24 : vector<8x8xf32>
    %cst_15 = arith.constant dense<0.000000e+00> : vector<8xf32>
    %26 = vector.multi_reduction <add>, %25, %cst_15 [1] : vector<8x8xf32> to vector<8xf32>
    %27 = vector.shape_cast %26 : vector<8xf32> to vector<8x1xf32>
    %28 = arith.addf %7, %27 : vector<8x1xf32>
    %29 = arith.truncf %25 : vector<8x8xf32> to vector<8x8xbf16>
    %30 = arith.truncf %11 : vector<8x32xf32> to vector<8x32xbf16>
    %cst_16 = arith.constant dense<0.000000e+00> : vector<8x32xf32>
    %31 = tpu.matmul %29, %30, %cst_16 {dimension_numbers = #tpu.dot_dimension_numbers<[1], [0], [0], [1], [0, 0, 1, 1], [], []>} : vector<8x8xbf16>, vector<8x32xbf16>, vector<8x32xf32> -> vector<8x32xf32>
    %32 = arith.addf %6, %31 : vector<8x32xf32>
    %cst_17 = arith.constant 9.99999971E-10 : f32
    %33 = vector.broadcast %cst_17 : f32 to vector<8x1xf32>
    %34 = arith.addf %33, %28 : vector<8x1xf32>
    %35 = tpu.reciprocal %34 {approx = true} : vector<8x1xf32> -> vector<8x1xf32>
    %36 = vector.broadcast %35 : vector<8x1xf32> to vector<8x32xf32>
    %37 = arith.mulf %32, %36 : vector<8x32xf32>
    %38 = arith.subf %1, %37 : vector<8x32xf32>
    %39 = arith.truncf %38 : vector<8x32xf32> to vector<8x32xbf16>
    %c0_18 = arith.constant 0 : index
    %c0_19 = arith.constant 0 : index
    %40 = vector.load %arg5[%c0_18, %c0_19] : memref<32x32xbf16, #tpu.memory_space<vmem>>, vector<32x32xbf16>
    %cst_20 = arith.constant dense<0.000000e+00> : vector<8x32xf32>
    %41 = tpu.matmul %39, %40, %cst_20 {dimension_numbers = #tpu.dot_dimension_numbers<[1], [0], [0], [1], [0, 0, 1, 1], [], []>} : vector<8x32xbf16>, vector<32x32xbf16>, vector<8x32xf32> -> vector<8x32xf32>
    %c0_21 = arith.constant 0 : index
    %c0_22 = arith.constant 0 : index
    %42 = vector.load %arg6[%c0_21, %c0_22] : memref<1x32xf32, #tpu.memory_space<vmem>>, vector<1x32xf32>
    %43 = vector.broadcast %42 : vector<1x32xf32> to vector<8x32xf32>
    %44 = arith.addf %41, %43 : vector<8x32xf32>
    %cst_23 = arith.constant 0.000000e+00 : f32
    %45 = vector.broadcast %cst_23 : f32 to vector<8x32xf32>
    %46 = arith.cmpf oge, %44, %45 : vector<8x32xf32>
    %cst_24 = arith.constant 0.00999999977 : f32
    %47 = vector.broadcast %cst_24 : f32 to vector<8x32xf32>
    %48 = arith.mulf %47, %44 : vector<8x32xf32>
    %49 = arith.select %46, %44, %48 : vector<8x32xi1>, vector<8x32xf32>
    %50 = arith.addf %49, %1 : vector<8x32xf32>
    %c0_25 = arith.constant 0 : index
    %c0_26 = arith.constant 0 : index
    %c0_27 = arith.constant 0 : index
    %51 = vector.load %arg7[%c0_25, %c0_26, %c0_27] : memref<1x8x32xf32, #tpu.memory_space<vmem>>, vector<1x8x32xf32>
    %52 = vector.shape_cast %51 : vector<1x8x32xf32> to vector<8x32xf32>
    %53 = vector.shape_cast %50 : vector<8x32xf32> to vector<1x8x32xf32>
    tpu.vector_store %arg7[%c0_25, %c0_26, %c0_27], %53 {strides = array<i32>} : memref<1x8x32xf32, #tpu.memory_space<vmem>>, vector<1x8x32xf32>,
    return
  }
  func.func @transform_0(%arg0: i32) -> (i32, i32, i32) {
    %c0_i32 = arith.constant 0 : i32
    %c0_i32_0 = arith.constant 0 : i32
    %c0_i32_1 = arith.constant 0 : i32
    return %arg0, %c0_i32, %c0_i32_0 : i32, i32, i32
  }
  func.func @transform_1(%arg0: i32) -> (i32, i32) {
    %c0_i32 = arith.constant 0 : i32
    %c0_i32_0 = arith.constant 0 : i32
    %c0_i32_1 = arith.constant 0 : i32
    return %c0_i32, %c0_i32_0 : i32, i32
  }
  func.func @transform_2(%arg0: i32) -> (i32, i32) {
    %c0_i32 = arith.constant 0 : i32
    %c0_i32_0 = arith.constant 0 : i32
    %c0_i32_1 = arith.constant 0 : i32
    return %c0_i32, %c0_i32_0 : i32, i32
  }
  func.func @transform_3(%arg0: i32) -> (i32, i32) {
    %c0_i32 = arith.constant 0 : i32
    %c0_i32_0 = arith.constant 0 : i32
    %c0_i32_1 = arith.constant 0 : i32
    return %c0_i32, %c0_i32_0 : i32, i32
  }
  func.func @transform_4(%arg0: i32) -> (i32, i32) {
    %c0_i32 = arith.constant 0 : i32
    %c0_i32_0 = arith.constant 0 : i32
    %c0_i32_1 = arith.constant 0 : i32
    return %c0_i32, %c0_i32_0 : i32, i32
  }
  func.func @transform_5(%arg0: i32) -> (i32, i32) {
    %c0_i32 = arith.constant 0 : i32
    %c0_i32_0 = arith.constant 0 : i32
    %c0_i32_1 = arith.constant 0 : i32
    return %c0_i32, %c0_i32_0 : i32, i32
  }
  func.func @transform_6(%arg0: i32) -> (i32, i32, i32) {
    %c0_i32 = arith.constant 0 : i32
    %c0_i32_0 = arith.constant 0 : i32
    %c0_i32_1 = arith.constant 0 : i32
    return %arg0, %c0_i32, %c0_i32_0 : i32, i32, i32
  }
}

module attributes {stable_mosaic.version = 11 : i64} {
  func.func @_chain_kernel(%arg0: i32, %arg1: memref<16x128xf32, #tpu.memory_space<vmem>>, %arg2: memref<128x32xbf16, #tpu.memory_space<vmem>>, %arg3: memref<1x32xf32, #tpu.memory_space<vmem>>, %arg4: memref<16x32xbf16, #tpu.memory_space<vmem>>) attributes {dimension_semantics = [#tpu.dimension_semantics<parallel>], iteration_bounds = array<i64: 1>, scalar_prefetch = 0 : i64, scratch_operands = 0 : i64, tpu.core_type = #tpu.core_type<tc>, window_params = [{transform_indices = @transform_0, window_bounds = array<i64: 16, 128>}, {pipeline_mode = #tpu.pipeline_mode<synchronous>, transform_indices = @transform_1, window_bounds = array<i64: 128, 32>}, {pipeline_mode = #tpu.pipeline_mode<synchronous>, transform_indices = @transform_2, window_bounds = array<i64: 1, 32>}, {transform_indices = @transform_3, window_bounds = array<i64: 16, 32>}]} {
    %c0 = arith.constant 0 : index
    %c0_0 = arith.constant 0 : index
    %0 = vector.load %arg1[%c0, %c0_0] : memref<16x128xf32, #tpu.memory_space<vmem>>, vector<16x128xf32>
    %1 = arith.truncf %0 : vector<16x128xf32> to vector<16x128xbf16>
    %c0_1 = arith.constant 0 : index
    %c0_2 = arith.constant 0 : index
    %2 = vector.load %arg2[%c0_1, %c0_2] : memref<128x32xbf16, #tpu.memory_space<vmem>>, vector<128x32xbf16>
    %c0_3 = arith.constant 0 : index
    %c0_4 = arith.constant 0 : index
    %3 = vector.load %arg3[%c0_3, %c0_4] : memref<1x32xf32, #tpu.memory_space<vmem>>, vector<1x32xf32>
    %cst = arith.constant dense<0.000000e+00> : vector<16x32xf32>
    %4 = tpu.matmul %1, %2, %cst {dimension_numbers = #tpu.dot_dimension_numbers<[1], [0], [0], [1], [0, 0, 1, 1], [], []>} : vector<16x128xbf16>, vector<128x32xbf16>, vector<16x32xf32> -> vector<16x32xf32>
    %5 = vector.broadcast %3 : vector<1x32xf32> to vector<16x32xf32>
    %6 = arith.addf %4, %5 : vector<16x32xf32>
    %cst_5 = arith.constant 0.000000e+00 : f32
    %7 = vector.broadcast %cst_5 : f32 to vector<16x32xf32>
    %8 = arith.cmpf oge, %6, %7 : vector<16x32xf32>
    %cst_6 = arith.constant 0.00999999977 : f32
    %9 = vector.broadcast %cst_6 : f32 to vector<16x32xf32>
    %10 = arith.mulf %9, %6 : vector<16x32xf32>
    %11 = arith.select %8, %6, %10 : vector<16x32xi1>, vector<16x32xf32>
    %12 = arith.truncf %11 : vector<16x32xf32> to vector<16x32xbf16>
    %c0_7 = arith.constant 0 : index
    %c0_8 = arith.constant 0 : index
    %13 = vector.load %arg4[%c0_7, %c0_8] : memref<16x32xbf16, #tpu.memory_space<vmem>>, vector<16x32xbf16>
    tpu.vector_store %arg4[%c0_7, %c0_8], %12 {strides = array<i32>} : memref<16x32xbf16, #tpu.memory_space<vmem>>, vector<16x32xbf16>,
    return
  }
  func.func @transform_0(%arg0: i32) -> (i32, i32) {
    %c0_i32 = arith.constant 0 : i32
    %c0_i32_0 = arith.constant 0 : i32
    return %arg0, %c0_i32 : i32, i32
  }
  func.func @transform_1(%arg0: i32) -> (i32, i32) {
    %c0_i32 = arith.constant 0 : i32
    %c0_i32_0 = arith.constant 0 : i32
    %c0_i32_1 = arith.constant 0 : i32
    return %c0_i32, %c0_i32_0 : i32, i32
  }
  func.func @transform_2(%arg0: i32) -> (i32, i32) {
    %c0_i32 = arith.constant 0 : i32
    %c0_i32_0 = arith.constant 0 : i32
    %c0_i32_1 = arith.constant 0 : i32
    return %c0_i32, %c0_i32_0 : i32, i32
  }
  func.func @transform_3(%arg0: i32) -> (i32, i32) {
    %c0_i32 = arith.constant 0 : i32
    %c0_i32_0 = arith.constant 0 : i32
    return %arg0, %c0_i32 : i32, i32
  }
}

module attributes {stable_mosaic.version = 11 : i64} {
  func.func @_gf_kernel(%arg0: i32, %arg1: memref<1x8x32xbf16, #tpu.memory_space<vmem>>, %arg2: memref<1x1x32xf32, #tpu.memory_space<vmem>>, %arg3: memref<1x1x32xf32, #tpu.memory_space<vmem>>) attributes {dimension_semantics = [#tpu.dimension_semantics<parallel>], iteration_bounds = array<i64: 2>, scalar_prefetch = 0 : i64, scratch_operands = 0 : i64, tpu.core_type = #tpu.core_type<tc>, window_params = [{transform_indices = @transform_0, window_bounds = array<i64: 1, 8, 32>}, {transform_indices = @transform_1, window_bounds = array<i64: 1, 1, 32>}, {transform_indices = @transform_2, window_bounds = array<i64: 1, 1, 32>}]} {
    %c0 = arith.constant 0 : index
    %c0_0 = arith.constant 0 : index
    %c0_1 = arith.constant 0 : index
    %0 = vector.load %arg1[%c0, %c0_0, %c0_1] : memref<1x8x32xbf16, #tpu.memory_space<vmem>>, vector<1x8x32xbf16>
    %1 = vector.shape_cast %0 : vector<1x8x32xbf16> to vector<8x32xbf16>
    %2 = arith.extf %1 : vector<8x32xbf16> to vector<8x32xf32>
    %cst = arith.constant dense<0xFF800000> : vector<32xf32>
    %3 = vector.multi_reduction <maximumf>, %2, %cst [0] : vector<8x32xf32> to vector<32xf32>
    %4 = vector.shape_cast %3 : vector<32xf32> to vector<1x32xf32>
    %c0_2 = arith.constant 0 : index
    %c0_3 = arith.constant 0 : index
    %c0_4 = arith.constant 0 : index
    %5 = vector.load %arg2[%c0_2, %c0_3, %c0_4] : memref<1x1x32xf32, #tpu.memory_space<vmem>>, vector<1x1x32xf32>
    %6 = vector.shape_cast %5 : vector<1x1x32xf32> to vector<1x32xf32>
    %7 = vector.shape_cast %4 : vector<1x32xf32> to vector<1x1x32xf32>
    tpu.vector_store %arg2[%c0_2, %c0_3, %c0_4], %7 {strides = array<i32>} : memref<1x1x32xf32, #tpu.memory_space<vmem>>, vector<1x1x32xf32>,
    %cst_5 = arith.constant dense<0.000000e+00> : vector<32xf32>
    %8 = vector.multi_reduction <add>, %2, %cst_5 [0] : vector<8x32xf32> to vector<32xf32>
    %9 = vector.shape_cast %8 : vector<32xf32> to vector<1x32xf32>
    %cst_6 = arith.constant 8.000000e+00 : f32
    %10 = vector.broadcast %cst_6 : f32 to vector<1x32xf32>
    %11 = arith.divf %9, %10 : vector<1x32xf32>
    %c0_7 = arith.constant 0 : index
    %c0_8 = arith.constant 0 : index
    %c0_9 = arith.constant 0 : index
    %12 = vector.load %arg3[%c0_7, %c0_8, %c0_9] : memref<1x1x32xf32, #tpu.memory_space<vmem>>, vector<1x1x32xf32>
    %13 = vector.shape_cast %12 : vector<1x1x32xf32> to vector<1x32xf32>
    %14 = vector.shape_cast %11 : vector<1x32xf32> to vector<1x1x32xf32>
    tpu.vector_store %arg3[%c0_7, %c0_8, %c0_9], %14 {strides = array<i32>} : memref<1x1x32xf32, #tpu.memory_space<vmem>>, vector<1x1x32xf32>,
    return
  }
  func.func @transform_0(%arg0: i32) -> (i32, i32, i32) {
    %c0_i32 = arith.constant 0 : i32
    %c0_i32_0 = arith.constant 0 : i32
    %c0_i32_1 = arith.constant 0 : i32
    return %arg0, %c0_i32, %c0_i32_0 : i32, i32, i32
  }
  func.func @transform_1(%arg0: i32) -> (i32, i32, i32) {
    %c0_i32 = arith.constant 0 : i32
    %c0_i32_0 = arith.constant 0 : i32
    %c0_i32_1 = arith.constant 0 : i32
    return %arg0, %c0_i32, %c0_i32_0 : i32, i32, i32
  }
  func.func @transform_2(%arg0: i32) -> (i32, i32, i32) {
    %c0_i32 = arith.constant 0 : i32
    %c0_i32_0 = arith.constant 0 : i32
    %c0_i32_1 = arith.constant 0 : i32
    return %arg0, %c0_i32, %c0_i32_0 : i32, i32, i32
  }
}

module attributes {stable_mosaic.version = 11 : i64} {
  func.func @_head_kernel(%arg0: i32, %arg1: i32, %arg2: memref<1x8x32xbf16, #tpu.memory_space<vmem>>, %arg3: memref<1x1x32xf32, #tpu.memory_space<vmem>>, %arg4: memref<32x32xbf16, #tpu.memory_space<vmem>>, %arg5: memref<32x32xbf16, #tpu.memory_space<vmem>>, %arg6: memref<1x32xf32, #tpu.memory_space<vmem>>, %arg7: memref<32x5xbf16, #tpu.memory_space<vmem>>, %arg8: memref<1x5xf32, #tpu.memory_space<vmem>>, %arg9: memref<1x8x5xf32, #tpu.memory_space<vmem>>) attributes {dimension_semantics = [#tpu.dimension_semantics<parallel>, #tpu.dimension_semantics<parallel>], iteration_bounds = array<i64: 2, 1>, scalar_prefetch = 0 : i64, scratch_operands = 0 : i64, tpu.core_type = #tpu.core_type<tc>, window_params = [{transform_indices = @transform_0, window_bounds = array<i64: 1, 8, 32>}, {transform_indices = @transform_1, window_bounds = array<i64: 1, 1, 32>}, {pipeline_mode = #tpu.pipeline_mode<synchronous>, transform_indices = @transform_2, window_bounds = array<i64: 32, 32>}, {pipeline_mode = #tpu.pipeline_mode<synchronous>, transform_indices = @transform_3, window_bounds = array<i64: 32, 32>}, {pipeline_mode = #tpu.pipeline_mode<synchronous>, transform_indices = @transform_4, window_bounds = array<i64: 1, 32>}, {pipeline_mode = #tpu.pipeline_mode<synchronous>, transform_indices = @transform_5, window_bounds = array<i64: 32, 5>}, {pipeline_mode = #tpu.pipeline_mode<synchronous>, transform_indices = @transform_6, window_bounds = array<i64: 1, 5>}, {transform_indices = @transform_7, window_bounds = array<i64: 1, 8, 5>}]} {
    %c0 = arith.constant 0 : index
    %c0_0 = arith.constant 0 : index
    %c0_1 = arith.constant 0 : index
    %0 = vector.load %arg2[%c0, %c0_0, %c0_1] : memref<1x8x32xbf16, #tpu.memory_space<vmem>>, vector<1x8x32xbf16>
    %1 = vector.shape_cast %0 : vector<1x8x32xbf16> to vector<8x32xbf16>
    %c0_2 = arith.constant 0 : index
    %c0_3 = arith.constant 0 : index
    %2 = vector.load %arg4[%c0_2, %c0_3] : memref<32x32xbf16, #tpu.memory_space<vmem>>, vector<32x32xbf16>
    %cst = arith.constant dense<0.000000e+00> : vector<8x32xf32>
    %3 = tpu.matmul %1, %2, %cst {dimension_numbers = #tpu.dot_dimension_numbers<[1], [0], [0], [1], [0, 0, 1, 1], [], []>} : vector<8x32xbf16>, vector<32x32xbf16>, vector<8x32xf32> -> vector<8x32xf32>
    %c0_4 = arith.constant 0 : index
    %c0_5 = arith.constant 0 : index
    %c0_6 = arith.constant 0 : index
    %4 = vector.load %arg3[%c0_4, %c0_5, %c0_6] : memref<1x1x32xf32, #tpu.memory_space<vmem>>, vector<1x1x32xf32>
    %5 = vector.shape_cast %4 : vector<1x1x32xf32> to vector<1x32xf32>
    %6 = vector.broadcast %5 : vector<1x32xf32> to vector<8x32xf32>
    %7 = arith.addf %3, %6 : vector<8x32xf32>
    %cst_7 = arith.constant 0.000000e+00 : f32
    %8 = vector.broadcast %cst_7 : f32 to vector<8x32xf32>
    %9 = arith.cmpf oge, %7, %8 : vector<8x32xf32>
    %cst_8 = arith.constant 0.00999999977 : f32
    %10 = vector.broadcast %cst_8 : f32 to vector<8x32xf32>
    %11 = arith.mulf %10, %7 : vector<8x32xf32>
    %12 = arith.select %9, %7, %11 : vector<8x32xi1>, vector<8x32xf32>
    %13 = arith.truncf %12 : vector<8x32xf32> to vector<8x32xbf16>
    %c0_9 = arith.constant 0 : index
    %c0_10 = arith.constant 0 : index
    %14 = vector.load %arg5[%c0_9, %c0_10] : memref<32x32xbf16, #tpu.memory_space<vmem>>, vector<32x32xbf16>
    %cst_11 = arith.constant dense<0.000000e+00> : vector<8x32xf32>
    %15 = tpu.matmul %13, %14, %cst_11 {dimension_numbers = #tpu.dot_dimension_numbers<[1], [0], [0], [1], [0, 0, 1, 1], [], []>} : vector<8x32xbf16>, vector<32x32xbf16>, vector<8x32xf32> -> vector<8x32xf32>
    %c0_12 = arith.constant 0 : index
    %c0_13 = arith.constant 0 : index
    %16 = vector.load %arg6[%c0_12, %c0_13] : memref<1x32xf32, #tpu.memory_space<vmem>>, vector<1x32xf32>
    %17 = vector.broadcast %16 : vector<1x32xf32> to vector<8x32xf32>
    %18 = arith.addf %15, %17 : vector<8x32xf32>
    %cst_14 = arith.constant 0.000000e+00 : f32
    %19 = vector.broadcast %cst_14 : f32 to vector<8x32xf32>
    %20 = arith.cmpf oge, %18, %19 : vector<8x32xf32>
    %cst_15 = arith.constant 0.00999999977 : f32
    %21 = vector.broadcast %cst_15 : f32 to vector<8x32xf32>
    %22 = arith.mulf %21, %18 : vector<8x32xf32>
    %23 = arith.select %20, %18, %22 : vector<8x32xi1>, vector<8x32xf32>
    %24 = arith.truncf %23 : vector<8x32xf32> to vector<8x32xbf16>
    %c0_16 = arith.constant 0 : index
    %c0_17 = arith.constant 0 : index
    %25 = vector.load %arg7[%c0_16, %c0_17] : memref<32x5xbf16, #tpu.memory_space<vmem>>, vector<32x5xbf16>
    %cst_18 = arith.constant dense<0.000000e+00> : vector<8x5xf32>
    %26 = tpu.matmul %24, %25, %cst_18 {dimension_numbers = #tpu.dot_dimension_numbers<[1], [0], [0], [1], [0, 0, 1, 1], [], []>} : vector<8x32xbf16>, vector<32x5xbf16>, vector<8x5xf32> -> vector<8x5xf32>
    %c0_19 = arith.constant 0 : index
    %c0_20 = arith.constant 0 : index
    %27 = vector.load %arg8[%c0_19, %c0_20] : memref<1x5xf32, #tpu.memory_space<vmem>>, vector<1x5xf32>
    %28 = vector.broadcast %27 : vector<1x5xf32> to vector<8x5xf32>
    %29 = arith.addf %26, %28 : vector<8x5xf32>
    %c0_21 = arith.constant 0 : index
    %c0_22 = arith.constant 0 : index
    %c0_23 = arith.constant 0 : index
    %30 = vector.load %arg9[%c0_21, %c0_22, %c0_23] : memref<1x8x5xf32, #tpu.memory_space<vmem>>, vector<1x8x5xf32>
    %31 = vector.shape_cast %30 : vector<1x8x5xf32> to vector<8x5xf32>
    %32 = vector.shape_cast %29 : vector<8x5xf32> to vector<1x8x5xf32>
    tpu.vector_store %arg9[%c0_21, %c0_22, %c0_23], %32 {strides = array<i32>} : memref<1x8x5xf32, #tpu.memory_space<vmem>>, vector<1x8x5xf32>,
    return
  }
  func.func @transform_0(%arg0: i32, %arg1: i32) -> (i32, i32, i32) {
    %c0_i32 = arith.constant 0 : i32
    %c0_i32_0 = arith.constant 0 : i32
    return %arg0, %arg1, %c0_i32 : i32, i32, i32
  }
  func.func @transform_1(%arg0: i32, %arg1: i32) -> (i32, i32, i32) {
    %c0_i32 = arith.constant 0 : i32
    %c0_i32_0 = arith.constant 0 : i32
    %c0_i32_1 = arith.constant 0 : i32
    return %arg0, %c0_i32, %c0_i32_0 : i32, i32, i32
  }
  func.func @transform_2(%arg0: i32, %arg1: i32) -> (i32, i32) {
    %c0_i32 = arith.constant 0 : i32
    %c0_i32_0 = arith.constant 0 : i32
    %c0_i32_1 = arith.constant 0 : i32
    return %c0_i32, %c0_i32_0 : i32, i32
  }
  func.func @transform_3(%arg0: i32, %arg1: i32) -> (i32, i32) {
    %c0_i32 = arith.constant 0 : i32
    %c0_i32_0 = arith.constant 0 : i32
    %c0_i32_1 = arith.constant 0 : i32
    return %c0_i32, %c0_i32_0 : i32, i32
  }
  func.func @transform_4(%arg0: i32, %arg1: i32) -> (i32, i32) {
    %c0_i32 = arith.constant 0 : i32
    %c0_i32_0 = arith.constant 0 : i32
    %c0_i32_1 = arith.constant 0 : i32
    return %c0_i32, %c0_i32_0 : i32, i32
  }
  func.func @transform_5(%arg0: i32, %arg1: i32) -> (i32, i32) {
    %c0_i32 = arith.constant 0 : i32
    %c0_i32_0 = arith.constant 0 : i32
    %c0_i32_1 = arith.constant 0 : i32
    return %c0_i32, %c0_i32_0 : i32, i32
  }
  func.func @transform_6(%arg0: i32, %arg1: i32) -> (i32, i32) {
    %c0_i32 = arith.constant 0 : i32
    %c0_i32_0 = arith.constant 0 : i32
    %c0_i32_1 = arith.constant 0 : i32
    return %c0_i32, %c0_i32_0 : i32, i32
  }
  func.func @transform_7(%arg0: i32, %arg1: i32) -> (i32, i32, i32) {
    %c0_i32 = arith.constant 0 : i32
    %c0_i32_0 = arith.constant 0 : i32
    return %arg0, %arg1, %c0_i32 : i32, i32, i32
  }
}

</mosaic_0001>

<llo_original>
// kernel: sub.6
$region0: #{sub.6}
  %s0 = inlined_call_operand.vmem [shape: f32[16], index: 0, kind: input, shape index: {}]
  %s1 = inlined_call_operand.vmem [shape: f32[2,8], index: 1, kind: output, shape index: {}]
  $region1: #{sub.6} parent=0
    #allocation0 [shape = 'u8[4096]{0}', space=vmem, size = 0x1000, scoped, tag = 'scoped mem for output reshape']
    #allocation1 [shape = 'u8[4096]{0}', space=vmem, size = 0x1000, scoped, tag = 'scoped mem for input reshape']
    %s3 = sshllo.u32 0, 1
    %v4 = vld [vmem:[%s0] sm:%s3]
    %5 = vst [vmem:[#allocation1] sm:%s3] %v4
    %v6 = vld [vmem:[#allocation1] sm:$0x1]
    %vm7 = vcmask 64512
    %8 = vst.msk [vmem:[#allocation0] sm:$0x1] %vm7, %v6
    %v9 = vld [vmem:[#allocation1] sm:$0x1]
    %10 = vrot.lane.b32.xlu0 %v9, 120
    %v11 = vpop.permute.xlu0 %10
    %vm12 = vcmask 64512
    %s13 = scalar_lea.vmem [#allocation0], 1
    %14 = vst.msk [vmem:[%s13] sm:$0x1] %vm12, %v11
    %s16 = sshllo.u32 0, 2
    %v18 = vld [vmem:[#allocation0] sm:%s16]
    %s19 = sshllo.u32 0, 2
    %20 = vst [vmem:[%s1] sm:%s19] %v18

// kernel: pct_forward.9
$region0: #{pct_forward.9}
  #allocation0 [shape = 'u32[]', space=smem, size = 0x4, offset = 0x4, fixed_abs, tag = 'smem constant byte address 0x4 - core index']
  #allocation1 [shape = 'u32[144,128]{1,0:T(1,128)}', space=vmem, size = 0x12000, scoped, tag = 'internal scratch']
  %s0 = inlined_call_operand.vmem [shape: f32[16,3], index: 0, kind: input, shape index: {}]
  %s1 = inlined_call_operand.vmem [shape: bf16[3,16], index: 1, kind: input, shape index: {}]
  %s2 = inlined_call_operand.vmem [shape: f32[1,16], index: 2, kind: input, shape index: {}]
  %s3 = inlined_call_operand.vmem [shape: bf16[16,16], index: 3, kind: input, shape index: {}]
  %s4 = inlined_call_operand.vmem [shape: f32[1,16], index: 4, kind: input, shape index: {}]
  %s5 = inlined_call_operand.vmem [shape: bf16[16,16], index: 5, kind: output, shape index: {}]
  %s6 = sld [smem:[#allocation0]]
  $region30: #{pct_forward.9} parent=0
    _
  %s8 = ssub.s32 1, %s6
  %s9 = scalar_select 0, %s8, %s6
  // Predicated region
  $region2: #{pct_forward.9} parent=0 // pred_check
    _
  $region3: #{pct_forward.9} parent=0 // pred_check_branch
    %11 = sbr.rel (0) target = $region5
  $region4: #{pct_forward.9} parent=0 // pred_region
    _
  $region5: #{pct_forward.9} parent=0 // pred_fallthru
    _
  // Predicated region
  $region6: #{pct_forward.9} parent=0 // pred_check
    _
  $region7: #{pct_forward.9} parent=0 // pred_check_branch
    %13 = sbr.rel (0) target = $region9
  $region8: #{pct_forward.9} parent=0 // pred_region
    _
  $region9: #{pct_forward.9} parent=0 // pred_fallthru
    _
  // Predicated region
  $region10: #{pct_forward.9} parent=0 // pred_check
    _
  $region11: #{pct_forward.9} parent=0 // pred_check_branch
    %15 = sbr.rel (0) target = $region13
  $region12: #{pct_forward.9} parent=0 // pred_region
    _
  $region13: #{pct_forward.9} parent=0 // pred_fallthru
    _
  // Predicated region
  $region14: #{pct_forward.9} parent=0 // pred_check
    _
  $region15: #{pct_forward.9} parent=0 // pred_check_branch
    %17 = sbr.rel (0) target = $region17
  $region16: #{pct_forward.9} parent=0 // pred_region
    _
  $region17: #{pct_forward.9} parent=0 // pred_fallthru
    _
  // Predicated region
  $region18: #{pct_forward.9} parent=0 // pred_check
    _
  $region19: #{pct_forward.9} parent=0 // pred_check_branch
    %19 = sbr.rel (0) target = $region21
  $region20: #{pct_forward.9} parent=0 // pred_region
    _
  $region21: #{pct_forward.9} parent=0 // pred_fallthru
    _
  %v21 = vld [vmem:[%s0] sm:$0xff]
  %v22 = vld [vmem:[%s0 + $0x8] sm:$0xff]
  %v23 = vpack.c.bf16 %v22, %v21
  %v24 = vld [vmem:[%s1] sm:$0x3]
  %v25 = vld [vmem:[%s2] sm:$0x1]
  %v27 = vlaneseq
  %v28 = vshrl.u32 %v27, 7
  %v29 = vsub.s32 0, %v28
  %v30 = vrot.slane %v25, %v29
  %vm32 = vcmask 23552
  %v34 = vsel %vm32, %v23, 0
  %vm36 = vcmask 1040384
  %vm37 = vcmask 1041408
  %v38 = vsel %vm36, 4294967295, 65535
  %v39 = vsel %vm37, %v38, 0
  %v41 = vand.u32 %v24, %v39
  %43 = vmatprep.subr.bf16.mxu0 0
  %44 = vmatpush1.bf16.msra.mxu0 %v41
  %45 = vmatprep.subr.bf16.mxu0 0
  %46 = vmatpush1.bf16.msra.mxu0 0
  %47 = vmatprep.subr.bf16.mxu0 0
  %48 = vmatpush1.bf16.msra.mxu0 0
  %49 = vmatprep.subr.bf16.mxu0 0
  %50 = vmatpush1.bf16.msra.mxu0 0
  %51 = vmatprep.subr.bf16.mxu0 0
  %52 = vmatpush1.bf16.msra.mxu0 0
  %53 = vmatprep.subr.bf16.mxu0 0
  %54 = vmatpush1.bf16.msra.mxu0 0
  %55 = vmatprep.subr.bf16.mxu0 0
  %56 = vmatpush1.bf16.msra.mxu0 0
  %57 = vmatprep.subr.bf16.mxu0 0
  %58 = vmatpush1.bf16.msra.mxu0 0
  %59 = vmatprep.subr.bf16.mxu0 0
  %60 = vmatpush1.bf16.msra.mxu0 0
  %61 = vmatprep.subr.bf16.mxu0 0
  %62 = vmatpush1.bf16.msra.mxu0 0
  %63 = vmatprep.subr.bf16.mxu0 0
  %64 = vmatpush1.bf16.msra.mxu0 0
  %65 = vmatprep.subr.bf16.mxu0 0
  %66 = vmatpush1.bf16.msra.mxu0 0
  %67 = vmatprep.subr.bf16.mxu0 0
  %68 = vmatpush1.bf16.msra.mxu0 0
  %69 = vmatprep.subr.bf16.mxu0 0
  %70 = vmatpush1.bf16.msra.mxu0 0
  %71 = vmatprep.subr.bf16.mxu0 0
  %72 = vmatpush1.bf16.msra.mxu0 0
  %73 = vmatprep.subr.bf16.mxu0 0
  %74 = vmatpush1.bf16.msra.mxu0 0
  %75 = vmatprep.mubr.bf16.mxu0 0
  %76 = vmatmul.mubr.bf16.gmra.mrb[0].mxu0 %v34
  %v77 = vpop.f32.mrb[0].mxu0
  %v78 = vadd.f32 %v30, %v77
  %v79 = vpop.f32.mrb[0].mxu0
  %v80 = vpop.f32.mrb[0].mxu0
  %v81 = vadd.f32 %v30, %v80
  %v82 = vpop.f32.mrb[0].mxu0
  %83 = vdwg.mxu0
  %vm84 = vcmp.ge.f32.partialorder %v78, 0.0
  %vm85 = vcmp.ge.f32.partialorder %v81, 0.0
  %v86 = vmul.f32 %v78, 0.01
  %v87 = vmul.f32 %v81, 0.01
  %v88 = vsel %vm84, %v78, %v86
  %v89 = vsel %vm85, %v81, %v87
  %v90 = vpack.c.bf16 %v89, %v88
  %v91 = vld [vmem:[%s3] sm:$0xf]
  %v92 = vld [vmem:[%s3 + $0x4] sm:$0xf]
  %v93 = vld [vmem:[%s4] sm:$0x1]
  %v95 = vlaneseq
  %v96 = vshrl.u32 %v95, 7
  %v97 = vsub.s32 0, %v96
  %v98 = vrot.slane %v93, %v97
  %v102 = vunpack.c.l.b16 %v91
  %v103 = vunpack.c.l.b16 %v92
  %v104 = vpack.c.b16 %v103, %v102
  %vm106 = vcmask 130048
  %v108 = vsel %vm106, %v90, 0
  %110 = vmatprep.subr.bf16.mxu0 0
  %111 = vmatpush1.bf16.msra.mxu0 %v104
  %112 = vmatprep.subr.bf16.mxu0 0
  %113 = vmatpush1.bf16.msra.mxu0 0
  %114 = vmatprep.subr.bf16.mxu0 0
  %115 = vmatpush1.bf16.msra.mxu0 0
  %116 = vmatprep.subr.bf16.mxu0 0
  %117 = vmatpush1.bf16.msra.mxu0 0
  %118 = vmatprep.subr.bf16.mxu0 0
  %119 = vmatpush1.bf16.msra.mxu0 0
  %120 = vmatprep.subr.bf16.mxu0 0
  %121 = vmatpush1.bf16.msra.mxu0 0
  %122 = vmatprep.subr.bf16.mxu0 0
  %123 = vmatpush1.bf16.msra.mxu0 0
  %124 = vmatprep.subr.bf16.mxu0 0
  %125 = vmatpush1.bf16.msra.mxu0 0
  %126 = vmatprep.subr.bf16.mxu0 0
  %127 = vmatpush1.bf16.msra.mxu0 0
  %128 = vmatprep.subr.bf16.mxu0 0
  %129 = vmatpush1.bf16.msra.mxu0 0
  %130 = vmatprep.subr.bf16.mxu0 0
  %131 = vmatpush1.bf16.msra.mxu0 0
  %132 = vmatprep.subr.bf16.mxu0 0
  %133 = vmatpush1.bf16.msra.mxu0 0
  %134 = vmatprep.subr.bf16.mxu0 0
  %135 = vmatpush1.bf16.msra.mxu0 0
  %136 = vmatprep.subr.bf16.mxu0 0
  %137 = vmatpush1.bf16.msra.mxu0 0
  %138 = vmatprep.subr.bf16.mxu0 0
  %139 = vmatpush1.bf16.msra.mxu0 0
  %140 = vmatprep.subr.bf16.mxu0 0
  %141 = vmatpush1.bf16.msra.mxu0 0
  %142 = vmatprep.mubr.bf16.mxu0 0
  %143 = vmatmul.mubr.bf16.gmra.mrb[0].mxu0 %v108
  %v144 = vpop.f32.mrb[0].mxu0
  %v145 = vadd.f32 %v98, %v144
  %v146 = vpop.f32.mrb[0].mxu0
  %v147 = vpop.f32.mrb[0].mxu0
  %v148 = vadd.f32 %v98, %v147
  %v149 = vpop.f32.mrb[0].mxu0
  %150 = vdwg.mxu0
  %vm151 = vcmp.ge.f32.partialorder %v145, 0.0
  %vm152 = vcmp.ge.f32.partialorder %v148, 0.0
  %v153 = vmul.f32 %v145, 0.01
  %v154 = vmul.f32 %v148, 0.01
  %v155 = vsel %vm151, %v145, %v153
  %v156 = vsel %vm152, %v148, %v154
  %v157 = vpack.c.bf16 %v156, %v155
  %v159 = vunpack.c.l.b16 %v157
  %v160 = vunpack.c.h.b16 %v157
  %v161 = vpack.c.b16 %v159, %v159
  %v162 = vpack.c.b16 %v160, %v160
  %vm165 = vcmask 125952
  %166 = vst.msk [vmem:[%s5] sm:$0xf] %vm165, %v161
  %167 = vst.msk [vmem:[%s5 + $0x4] sm:$0xf] %vm165, %v162
  // Predicated region
  $region22: #{pct_forward.9} parent=0 // pred_check
    _
  $region23: #{pct_forward.9} parent=0 // pred_check_branch
    %169 = sbr.rel (0) target = $region25
  $region24: #{pct_forward.9} parent=0 // pred_region
    _
  $region25: #{pct_forward.9} parent=0 // pred_fallthru
    _
  // Predicated region
  $region26: #{pct_forward.9} parent=0 // pred_check
    _
  $region27: #{pct_forward.9} parent=0 // pred_check_branch
    %171 = sbr.rel (0) target = $region29
  $region28: #{pct_forward.9} parent=0 // pred_region
    _
  $region29: #{pct_forward.9} parent=0 // pred_fallthru
    _

// kernel: pct_forward.10
$region0: #{pct_forward.10}
  #allocation0 [shape = 'u32[]', space=smem, size = 0x4, offset = 0x4, fixed_abs, tag = 'smem constant byte address 0x4 - core index']
  #allocation1 [shape = 'u32[144,128]{1,0:T(1,128)}', space=vmem, size = 0x12000, scoped, tag = 'internal scratch']
  %s0 = inlined_call_operand.vmem [shape: bf16[2,4,8,32], index: 0, kind: input, shape index: {}]
  %s1 = inlined_call_operand.vmem [shape: bf16[32,32], index: 1, kind: input, shape index: {}]
  %s2 = inlined_call_operand.vmem [shape: f32[1,32], index: 2, kind: input, shape index: {}]
  %s3 = inlined_call_operand.vmem [shape: bf16[32,32], index: 3, kind: input, shape index: {}]
  %s4 = inlined_call_operand.vmem [shape: f32[1,32], index: 4, kind: input, shape index: {}]
  %s5 = inlined_call_operand.vmem [shape: f32[2,8,32], index: 5, kind: output, shape index: {}]
  %s6 = sld [smem:[#allocation0]]
  $region53: #{pct_forward.10} parent=0
    _
  %s8 = ssub.s32 1, %s6
  %s9 = scalar_select 0, %s8, %s6
  loop: start=0, step=1, limit=4
  $region2: #{pct_forward.10} parent=0 // loop_pre_header
    _
  $region3: #{pct_forward.10} parent=0 // loop_header
    %s11 = sphi 0, %s15
    %p12 = scmp.ge.s32.totalorder %s11, 4
    %s18 = sphi 0, %s30
    %s19 = sphi 0, %s26
    %s20 = sphi 0, %s18
    %s21 = sphi 0, %s19
    %s22 = sphi 0, %s20
    %s23 = sphi 0, %s21
    %s35 = sphi 0, %s37
    %s38 = sphi 0, %s35
    %s39 = sphi 0, %s38
    %s55 = sphi 0, %s39
    %s59 = sphi 0, %s59
    %s61 = sphi 0, %s59
    %s62 = sphi 0, %s61
    %s76 = sphi 0, %s62
    %s80 = sphi 0, %s80
    %s82 = sphi 0, %s80
    %s83 = sphi 0, %s82
    %s97 = sphi 0, %s83
    %s101 = sphi 0, %s101
    %s103 = sphi 0, %s101
    %s104 = sphi 0, %s103
    %s118 = sphi 0, %s104
    %s122 = sphi 0, %s122
    %s124 = sphi 0, %s122
    %s125 = sphi 0, %s124
    %s139 = sphi 0, %s125
    %s147 = sphi 0, %s149
    %s150 = sphi 0, %s147
    %s151 = sphi 0, %s150
    %s167 = sphi 0, %s151
  $region4: #{pct_forward.10} parent=0 // loop_header_branch
    %14 = sbr.rel (%p12) target = $region8
  $region5: #{pct_forward.10} parent=0 // loop_body
    %s16 = ssub.s32 %s11, 1
    %s17 = ssub.s32 %s11, 2
    %s24 = sadd.s32 1, %s19
    %p25 = scmp.ge.s32.totalorder %s24, 1
    %s26 = scalar_select %p25, 0, %s24
    %s27 = sadd.s32 1, %s18
    %s28 = scalar_select %p25, %s27, %s18
    %p29 = scmp.ge.s32.totalorder %s28, 2
    %s30 = scalar_select %p29, 0, %s28
    %s31 = ssub.s32 %s18, %s30
    %s32 = ssub.s32 %s19, %s26
    %s33 = sor.u32 %s31, %s32
    %p34 = scmp.eq.s32.totalorder %s33, 0
    %s36 = sadd.s32 %s35, 1
    %s37 = scalar_select %p34, %s35, %s36
    %p40 = pneg %p34
    %p41 = scmp.eq.s32.totalorder %s11, 1
    %p42 = por %p40, %p41
    %p43 = scmp.ne.s32.totalorder %s35, %s38
    %p44 = scmp.eq.s32.totalorder %s11, 0
    %p45 = por %p43, %p44
    %p46 = scmp.ne.s32.totalorder %s35, %s38
    %p47 = scmp.eq.s32.totalorder %s16, 1
    %p48 = por %p46, %p47
    %p49 = scmp.ne.s32.totalorder %s38, %s39
    %p50 = scmp.eq.s32.totalorder %s16, 0
    %p51 = por %p49, %p50
    %p52 = scmp.ne.s32.totalorder %s38, %s39
    %p53 = scmp.eq.s32.totalorder %s17, 1
    %p54 = por %p52, %p53
    %p56 = scmp.ne.s32.totalorder %s39, %s55
    %p57 = scmp.eq.s32.totalorder %s17, 0
    %p58 = por %p56, %p57
    %s60 = sadd.s32 %s59, 1
    %p63 = scmp.eq.s32.totalorder %s11, 1
    %p64 = scmp.ne.s32.totalorder %s59, %s61
    %p65 = scmp.eq.s32.totalorder %s11, 0
    %p66 = por %p64, %p65
    %p67 = scmp.ne.s32.totalorder %s59, %s61
    %p68 = scmp.eq.s32.totalorder %s16, 1
    %p69 = por %p67, %p68
    %p70 = scmp.ne.s32.totalorder %s61, %s62
    %p71 = scmp.eq.s32.totalorder %s16, 0
    %p72 = por %p70, %p71
    %p73 = scmp.ne.s32.totalorder %s61, %s62
    %p74 = scmp.eq.s32.totalorder %s17, 1
    %p75 = por %p73, %p74
    %p77 = scmp.ne.s32.totalorder %s62, %s76
    %p78 = scmp.eq.s32.totalorder %s17, 0
    %p79 = por %p77, %p78
    %s81 = sadd.s32 %s80, 1
    %p84 = scmp.eq.s32.totalorder %s11, 1
    %p85 = scmp.ne.s32.totalorder %s80, %s82
    %p86 = scmp.eq.s32.totalorder %s11, 0
    %p87 = por %p85, %p86
    %p88 = scmp.ne.s32.totalorder %s80, %s82
    %p89 = scmp.eq.s32.totalorder %s16, 1
    %p90 = por %p88, %p89
    %p91 = scmp.ne.s32.totalorder %s82, %s83
    %p92 = scmp.eq.s32.totalorder %s16, 0
    %p93 = por %p91, %p92
    %p94 = scmp.ne.s32.totalorder %s82, %s83
    %p95 = scmp.eq.s32.totalorder %s17, 1
    %p96 = por %p94, %p95
    %p98 = scmp.ne.s32.totalorder %s83, %s97
    %p99 = scmp.eq.s32.totalorder %s17, 0
    %p100 = por %p98, %p99
    %s102 = sadd.s32 %s101, 1
    %p105 = scmp.eq.s32.totalorder %s11, 1
    %p106 = scmp.ne.s32.totalorder %s101, %s103
    %p107 = scmp.eq.s32.totalorder %s11, 0
    %p108 = por %p106, %p107
    %p109 = scmp.ne.s32.totalorder %s101, %s103
    %p110 = scmp.eq.s32.totalorder %s16, 1
    %p111 = por %p109, %p110
    %p112 = scmp.ne.s32.totalorder %s103, %s104
    %p113 = scmp.eq.s32.totalorder %s16, 0
    %p114 = por %p112, %p113
    %p115 = scmp.ne.s32.totalorder %s103, %s104
    %p116 = scmp.eq.s32.totalorder %s17, 1
    %p117 = por %p115, %p116
    %p119 = scmp.ne.s32.totalorder %s104, %s118
    %p120 = scmp.eq.s32.totalorder %s17, 0
    %p121 = por %p119, %p120
    %s123 = sadd.s32 %s122, 1
    %p126 = scmp.eq.s32.totalorder %s11, 1
    %p127 = scmp.ne.s32.totalorder %s122, %s124
    %p128 = scmp.eq.s32.totalorder %s11, 0
    %p129 = por %p127, %p128
    %p130 = scmp.ne.s32.totalorder %s122, %s124
    %p131 = scmp.eq.s32.totalorder %s16, 1
    %p132 = por %p130, %p131
    %p133 = scmp.ne.s32.totalorder %s124, %s125
    %p134 = scmp.eq.s32.totalorder %s16, 0
    %p135 = por %p133, %p134
    %p136 = scmp.ne.s32.totalorder %s124, %s125
    %p137 = scmp.eq.s32.totalorder %s17, 1
    %p138 = por %p136, %p137
    %p140 = scmp.ne.s32.totalorder %s125, %s139
    %p141 = scmp.eq.s32.totalorder %s17, 0
    %p142 = por %p140, %p141
    %s143 = ssub.s32 %s18, %s30
    %s144 = ssub.s32 %s19, %s26
    %s145 = sor.u32 %s143, %s144
    %p146 = scmp.eq.s32.totalorder %s145, 0
    %s148 = sadd.s32 %s147, 1
    %s149 = scalar_select %p146, %s147, %s148
    %p152 = pneg %p146
    %p153 = scmp.eq.s32.totalorder %s11, 1
    %p154 = por %p152, %p153
    %p155 = scmp.ne.s32.totalorder %s147, %s150
    %p156 = scmp.eq.s32.totalorder %s11, 0
    %p157 = por %p155, %p156
    %p158 = scmp.ne.s32.totalorder %s147, %s150
    %p159 = scmp.eq.s32.totalorder %s16, 1
    %p160 = por %p158, %p159
    %p161 = scmp.ne.s32.totalorder %s150, %s151
    %p162 = scmp.eq.s32.totalorder %s16, 0
    %p163 = por %p161, %p162
    %p164 = scmp.ne.s32.totalorder %s150, %s151
    %p165 = scmp.eq.s32.totalorder %s17, 1
    %p166 = por %p164, %p165
    %p168 = scmp.ne.s32.totalorder %s151, %s167
    %p169 = scmp.eq.s32.totalorder %s17, 0
    %p170 = por %p168, %p169
    %p171 = scmp.le.s32.totalorder 1, %s11
    %p172 = scmp.lt.s32.totalorder %s11, 3
    %p173 = pnand %p171, %p172
    %p174 = pneg %p173
    // Predicated region
    $region9: #{pct_forward.10} parent=5 // pred_check
      _
    $region10: #{pct_forward.10} parent=5 // pred_check_branch
      %176 = sbr.rel (%p173) target = $region12
    $region11: #{pct_forward.10} parent=5 // pred_region
      %s177 = ssub.s32 %s11, 1
      // Predicated region
      $region13: #{pct_forward.10} parent=11 // pred_check
        %p178 = pneg %p72
      $region14: #{pct_forward.10} parent=11 // pred_check_branch
        %180 = sbr.rel (%p178) target = $region16
      $region15: #{pct_forward.10} parent=11 // pred_region
        _
      $region16: #{pct_forward.10} parent=11 // pred_fallthru
        _
      // Predicated region
      $region17: #{pct_forward.10} parent=11 // pred_check
        %p181 = pneg %p93
      $region18: #{pct_forward.10} parent=11 // pred_check_branch
        %183 = sbr.rel (%p181) target = $region20
      $region19: #{pct_forward.10} parent=11 // pred_region
        _
      $region20: #{pct_forward.10} parent=11 // pred_fallthru
        _
      // Predicated region
      $region21: #{pct_forward.10} parent=11 // pred_check
        %p184 = pneg %p114
      $region22: #{pct_forward.10} parent=11 // pred_check_branch
        %186 = sbr.rel (%p184) target = $region24
      $region23: #{pct_forward.10} parent=11 // pred_region
        _
      $region24: #{pct_forward.10} parent=11 // pred_fallthru
        _
      // Predicated region
      $region25: #{pct_forward.10} parent=11 // pred_check
        %p187 = pneg %p135
      $region26: #{pct_forward.10} parent=11 // pred_check_branch
        %189 = sbr.rel (%p187) target = $region28
      $region27: #{pct_forward.10} parent=11 // pred_region
        _
      $region28: #{pct_forward.10} parent=11 // pred_fallthru
        _
    $region12: #{pct_forward.10} parent=5 // pred_fallthru
      _
    %p190 = scmp.lt.s32.totalorder %s11, 2
    // Predicated region
    $region29: #{pct_forward.10} parent=5 // pred_check
      %p191 = pneg %p190
    $region30: #{pct_forward.10} parent=5 // pred_check_branch
      %193 = sbr.rel (%p191) target = $region32
    $region31: #{pct_forward.10} parent=5 // pred_region
      // Predicated region
      $region33: #{pct_forward.10} parent=31 // pred_check
        %p194 = pneg %p45
      $region34: #{pct_forward.10} parent=31 // pred_check_branch
        %196 = sbr.rel (%p194) target = $region36
      $region35: #{pct_forward.10} parent=31 // pred_region
        %p197 = scmp.lt.s32.totalorder %s18, 1
        %s198 = scalar_select %p197, %s18, 1
        %p199 = scmp.lt.s32.totalorder %s19, 0
        %s200 = scalar_select %p199, %s19, 0
        %s201 = smul.addr %s198, 4
        %s202 = sadd.s32 %s200, %s201
        %s203 = smul.addr %s202, 4
        %s204 = scalar_lea.vmem %s0, %s203
      $region36: #{pct_forward.10} parent=31 // pred_fallthru
        _
    $region32: #{pct_forward.10} parent=5 // pred_fallthru
      _
    %p205 = scmp.le.s32.totalorder 1, %s11
    %p206 = scmp.lt.s32.totalorder %s11, 3
    %p207 = pnand %p205, %p206
    %p208 = pneg %p207
    // Predicated region
    $region37: #{pct_forward.10} parent=5 // pred_check
      _
    $region38: #{pct_forward.10} parent=5 // pred_check_branch
      %210 = sbr.rel (%p207) target = $region40
    $region39: #{pct_forward.10} parent=5 // pred_region
      %s211 = ssub.s32 %s11, 1
      %p212 = scmp.lt.s32.totalorder %s20, 1
      %s213 = scalar_select %p212, %s20, 1
      %p214 = scmp.lt.s32.totalorder %s21, 0
      %s215 = scalar_select %p214, %s21, 0
      %s216 = smul.addr %s213, 4
      %s217 = sadd.s32 %s215, %s216
      %s218 = smul.addr %s217, 4
      %s219 = scalar_lea.vmem %s0, %s218
      %p220 = pneg %p51
      %p221 = pneg %p48
      %p222 = pneg %p72
      %p223 = pneg %p69
      %p224 = pneg %p93
      %p225 = pneg %p90
      %p226 = pneg %p114
      %p227 = pneg %p111
      %p228 = pneg %p135
      %p229 = pneg %p132
      %p230 = pneg %p163
      %p231 = pneg %p160
      %p232 = scmp.lt.s32.totalorder %s20, 1
      %s233 = scalar_select %p232, %s20, 1
      %p234 = scmp.lt.s32.totalorder %s21, 0
      %s235 = scalar_select %p234, %s21, 0
      %s236 = sadd.s32 %s235, %s233
      %s237 = smul.addr %s236, 8
      %s238 = scalar_lea.vmem %s5, %s237
      %p239 = scmp.lt.s32.totalorder %s20, 1
      %s240 = scalar_select %p239, %s20, 1
      %p241 = scmp.lt.s32.totalorder %s21, 0
      %s242 = scalar_select %p241, %s21, 0
      %s243 = smul.addr %s240, 4
      %s244 = sadd.s32 %s242, %s243
      %s245 = smul.addr %s244, 4
      %s246 = scalar_lea.vmem %s0, %s245
      %p247 = scmp.lt.s32.totalorder %s20, 1
      %s248 = scalar_select %p247, %s20, 1
      %p249 = scmp.lt.s32.totalorder %s21, 0
      %s250 = scalar_select %p249, %s21, 0
      %s251 = sadd.s32 %s250, %s248
      %s252 = smul.addr %s251, 8
      %s253 = scalar_lea.vmem %s5, %s252
      %v255 = vld [vmem:[%s246] sm:$0xf]
      %s256 = scalar_lea.vmem %s246, 4
      %v257 = vld [vmem:[%s256] sm:$0xf]
      %s258 = scalar_lea.vmem %s246, 8
      %v259 = vld [vmem:[%s258] sm:$0xf]
      %s260 = scalar_lea.vmem %s246, 12
      %v261 = vld [vmem:[%s260] sm:$0xf]
      %v263 = vunpack.c.l.b16 %v257
      %v264 = vpack.c.b16 %v263, %v263
      %v266 = vunpack.c.l.b16 %v261
      %v267 = vpack.c.b16 %v266, %v266
      %vm268 = vcmask 1043456
      %v271 = vsel %vm268, %v255, %v264
      %v274 = vsel %vm268, %v259, %v267
      %v275 = vld [vmem:[%s1] sm:$0xf]
      %v276 = vld [vmem:[%s1 + $0x4] sm:$0xf]
      %v277 = vld [vmem:[%s1 + $0x8] sm:$0xf]
      %v278 = vld [vmem:[%s1 + $0xc] sm:$0xf]
      %v279 = vld [vmem:[%s2] sm:$0x1]
      %v281 = vlaneseq
      %v282 = vshrl.u32 %v281, 7
      %v283 = vsub.s32 0, %v282
      %v284 = vrot.slane %v279, %v283
      %v290 = vunpack.c.l.b16 %v275
      %v291 = vunpack.c.l.b16 %v276
      %v292 = vunpack.c.l.b16 %v277
      %v293 = vunpack.c.l.b16 %v278
      %v294 = vpack.c.b16 %v291, %v290
      %v295 = vpack.c.b16 %v293, %v292
      %vm298 = vcmask 261120
      %v299 = vsel %vm298, %v271, 0
      %v301 = vsel %vm298, %v274, 0
      %303 = vmatprep.subr.bf16.mxu0 0
      %304 = vmatpush1.bf16.msra.mxu0 %v294
      %305 = vmatprep.subr.bf16.mxu0 0
      %306 = vmatpush1.bf16.msra.mxu0 %v295
      %307 = vmatprep.subr.bf16.mxu0 0
      %308 = vmatpush1.bf16.msra.mxu0 0
      %309 = vmatprep.subr.bf16.mxu0 0
      %310 = vmatpush1.bf16.msra.mxu0 0
      %311 = vmatprep.subr.bf16.mxu0 0
      %312 = vmatpush1.bf16.msra.mxu0 0
      %313 = vmatprep.subr.bf16.mxu0 0
      %314 = vmatpush1.bf16.msra.mxu0 0
      %315 = vmatprep.subr.bf16.mxu0 0
      %316 = vmatpush1.bf16.msra.mxu0 0
      %317 = vmatprep.subr.bf16.mxu0 0
      %318 = vmatpush1.bf16.msra.mxu0 0
      %319 = vmatprep.subr.bf16.mxu0 0
      %320 = vmatpush1.bf16.msra.mxu0 0
      %321 = vmatprep.subr.bf16.mxu0 0
      %322 = vmatpush1.bf16.msra.mxu0 0
      %323 = vmatprep.subr.bf16.mxu0 0
      %324 = vmatpush1.bf16.msra.mxu0 0
      %325 = vmatprep.subr.bf16.mxu0 0
      %326 = vmatpush1.bf16.msra.mxu0 0
      %327 = vmatprep.subr.bf16.mxu0 0
      %328 = vmatpush1.bf16.msra.mxu0 0
      %329 = vmatprep.subr.bf16.mxu0 0
      %330 = vmatpush1.bf16.msra.mxu0 0
      %331 = vmatprep.subr.bf16.mxu0 0
      %332 = vmatpush1.bf16.msra.mxu0 0
      %333 = vmatprep.subr.bf16.mxu0 0
      %334 = vmatpush1.bf16.msra.mxu0 0
      %335 = vmatprep.mubr.bf16.mxu0 0
      %336 = vmatmul.mubr.bf16.gmra.mrb[0].mxu0 %v299
      %v337 = vpop.f32.mrb[0].mxu0
      %v338 = vadd.f32 %v284, %v337
      %v339 = vpop.f32.mrb[0].mxu0
      %v340 = vpop.f32.mrb[0].mxu0
      %v341 = vadd.f32 %v284, %v340
      %v342 = vpop.f32.mrb[0].mxu0
      %343 = vmatprep.mubr.bf16.mxu0 0
      %344 = vmatmul.mubr.bf16.gmra.mrb[0].mxu0 %v301
      %v345 = vpop.f32.mrb[0].mxu0
      %v346 = vadd.f32 %v284, %v345
      %v347 = vpop.f32.mrb[0].mxu0
      %v348 = vpop.f32.mrb[0].mxu0
      %v349 = vadd.f32 %v284, %v348
      %v350 = vpop.f32.mrb[0].mxu0
      %351 = vdwg.mxu0
      %vm352 = vcmp.ge.f32.partialorder %v338, 0.0
      %vm353 = vcmp.ge.f32.partialorder %v341, 0.0
      %vm354 = vcmp.ge.f32.partialorder %v346, 0.0
      %vm355 = vcmp.ge.f32.partialorder %v349, 0.0
      %v356 = vmul.f32 %v338, 0.01
      %v357 = vmul.f32 %v341, 0.01
      %v358 = vmul.f32 %v346, 0.01
      %v359 = vmul.f32 %v349, 0.01
      %v360 = vsel %vm352, %v338, %v356
      %v361 = vsel %vm353, %v341, %v357
      %v362 = vsel %vm354, %v346, %v358
      %v363 = vsel %vm355, %v349, %v359
      %v364 = vpack.c.bf16 %v361, %v360
      %v365 = vpack.c.bf16 %v363, %v362
      %v366 = vld [vmem:[%s3] sm:$0xf]
      %v367 = vld [vmem:[%s3 + $0x4] sm:$0xf]
      %v368 = vld [vmem:[%s3 + $0x8] sm:$0xf]
      %v369 = vld [vmem:[%s3 + $0xc] sm:$0xf]
      %v370 = vld [vmem:[%s4] sm:$0x1]
      %v372 = vlaneseq
      %v373 = vshrl.u32 %v372, 7
      %v374 = vsub.s32 0, %v373
      %v375 = vrot.slane %v370, %v374
      %v381 = vunpack.c.l.b16 %v366
      %v382 = vunpack.c.l.b16 %v367
      %v383 = vunpack.c.l.b16 %v368
      %v384 = vunpack.c.l.b16 %v369
      %v385 = vpack.c.b16 %v382, %v381
      %v386 = vpack.c.b16 %v384, %v383
      %v390 = vsel %vm298, %v364, 0
      %v393 = vsel %vm298, %v365, 0
      %395 = vmatprep.subr.bf16.mxu0 0
      %396 = vmatpush1.bf16.msra.mxu0 %v385
      %397 = vmatprep.subr.bf16.mxu0 0
      %398 = vmatpush1.bf16.msra.mxu0 %v386
      %399 = vmatprep.subr.bf16.mxu0 0
      %400 = vmatpush1.bf16.msra.mxu0 0
      %401 = vmatprep.subr.bf16.mxu0 0
      %402 = vmatpush1.bf16.msra.mxu0 0
      %403 = vmatprep.subr.bf16.mxu0 0
      %404 = vmatpush1.bf16.msra.mxu0 0
      %405 = vmatprep.subr.bf16.mxu0 0
      %406 = vmatpush1.bf16.msra.mxu0 0
      %407 = vmatprep.subr.bf16.mxu0 0
      %408 = vmatpush1.bf16.msra.mxu0 0
      %409 = vmatprep.subr.bf16.mxu0 0
      %410 = vmatpush1.bf16.msra.mxu0 0
      %411 = vmatprep.subr.bf16.mxu0 0
      %412 = vmatpush1.bf16.msra.mxu0 0
      %413 = vmatprep.subr.bf16.mxu0 0
      %414 = vmatpush1.bf16.msra.mxu0 0
      %415 = vmatprep.subr.bf16.mxu0 0
      %416 = vmatpush1.bf16.msra.mxu0 0
      %417 = vmatprep.subr.bf16.mxu0 0
      %418 = vmatpush1.bf16.msra.mxu0 0
      %419 = vmatprep.subr.bf16.mxu0 0
      %420 = vmatpush1.bf16.msra.mxu0 0
      %421 = vmatprep.subr.bf16.mxu0 0
      %422 = vmatpush1.bf16.msra.mxu0 0
      %423 = vmatprep.subr.bf16.mxu0 0
      %424 = vmatpush1.bf16.msra.mxu0 0
      %425 = vmatprep.subr.bf16.mxu0 0
      %426 = vmatpush1.bf16.msra.mxu0 0
      %427 = vmatprep.mubr.bf16.mxu0 0
      %428 = vmatmul.mubr.bf16.gmra.mrb[0].mxu0 %v390
      %v429 = vpop.f32.mrb[0].mxu0
      %v430 = vadd.f32 %v375, %v429
      %v431 = vpop.f32.mrb[0].mxu0
      %v432 = vpop.f32.mrb[0].mxu0
      %v433 = vadd.f32 %v375, %v432
      %v434 = vpop.f32.mrb[0].mxu0
      %435 = vmatprep.mubr.bf16.mxu0 0
      %436 = vmatmul.mubr.bf16.gmra.mrb[0].mxu0 %v393
      %v437 = vpop.f32.mrb[0].mxu0
      %v438 = vadd.f32 %v375, %v437
      %v439 = vpop.f32.mrb[0].mxu0
      %v440 = vpop.f32.mrb[0].mxu0
      %v441 = vadd.f32 %v375, %v440
      %v442 = vpop.f32.mrb[0].mxu0
      %443 = vdwg.mxu0
      %vm444 = vcmp.ge.f32.partialorder %v430, 0.0
      %vm445 = vcmp.ge.f32.partialorder %v433, 0.0
      %vm446 = vcmp.ge.f32.partialorder %v438, 0.0
      %vm447 = vcmp.ge.f32.partialorder %v441, 0.0
      %v448 = vmul.f32 %v430, 0.01
      %v449 = vmul.f32 %v433, 0.01
      %v450 = vmul.f32 %v438, 0.01
      %v451 = vmul.f32 %v441, 0.01
      %v452 = vsel %vm444, %v430, %v448
      %v453 = vsel %vm445, %v433, %v449
      %v454 = vsel %vm446, %v438, %v450
      %v455 = vsel %vm447, %v441, %v451
      %v456 = vmax.f32 %v452, %v453
      %v457 = vmax.f32 %v456, %v454
      %v458 = vmax.f32 %v457, %v455
      %459 = vst.msk [vmem:[%s253] sm:$0xff] %vm298, %v458
      %p460 = scmp.lt.s32.totalorder %s20, 1
      %s461 = scalar_select %p460, %s20, 1
      %p462 = scmp.lt.s32.totalorder %s21, 0
      %s463 = scalar_select %p462, %s21, 0
      %s464 = sadd.s32 %s463, %s461
      %s465 = smul.addr %s464, 8
      %s466 = scalar_lea.vmem %s5, %s465
      // Predicated region
      $region41: #{pct_forward.10} parent=39 // pred_check
        %p467 = pneg %p160
      $region42: #{pct_forward.10} parent=39 // pred_check_branch
        %469 = sbr.rel (%p467) target = $region44
      $region43: #{pct_forward.10} parent=39 // pred_region
        _
      $region44: #{pct_forward.10} parent=39 // pred_fallthru
        _
    $region40: #{pct_forward.10} parent=5 // pred_fallthru
      _
    %p470 = scmp.le.s32.totalorder 2, %s11
    // Predicated region
    $region45: #{pct_forward.10} parent=5 // pred_check
      %p471 = pneg %p470
    $region46: #{pct_forward.10} parent=5 // pred_check_branch
      %473 = sbr.rel (%p471) target = $region48
    $region47: #{pct_forward.10} parent=5 // pred_region
      %s474 = ssub.s32 %s11, 2
      // Predicated region
      $region49: #{pct_forward.10} parent=47 // pred_check
        %p475 = pneg %p166
      $region50: #{pct_forward.10} parent=47 // pred_check_branch
        %477 = sbr.rel (%p475) target = $region52
      $region51: #{pct_forward.10} parent=47 // pred_region
        %p478 = scmp.lt.s32.totalorder %s22, 1
        %s479 = scalar_select %p478, %s22, 1
        %p480 = scmp.lt.s32.totalorder %s23, 0
        %s481 = scalar_select %p480, %s23, 0
        %s482 = sadd.s32 %s481, %s479
        %s483 = smul.addr %s482, 8
        %s484 = scalar_lea.vmem %s5, %s483
      $region52: #{pct_forward.10} parent=47 // pred_fallthru
        _
    $region48: #{pct_forward.10} parent=5 // pred_fallthru
      _
  $region6: #{pct_forward.10} parent=0 // loop_footer
    %s15 = sadd.s32 1, %s11
  $region7: #{pct_forward.10} parent=0 // loop_footer_branch
    %10 = sbr.rel target = $region3
  $region8: #{pct_forward.10} parent=0 // loop_exit
    _

// kernel: pct_forward.11
$region0: #{pct_forward.11}
  #allocation0 [shape = 'u32[]', space=smem, size = 0x4, offset = 0x4, fixed_abs, tag = 'smem constant byte address 0x4 - core index']
  #allocation1 [shape = 'u32[144,128]{1,0:T(1,128)}', space=vmem, size = 0x12000, scoped, tag = 'internal scratch']
  %s0 = inlined_call_operand.vmem [shape: f32[2,8,32], index: 0, kind: input, shape index: {}]
  %s1 = inlined_call_operand.vmem [shape: bf16[32,4], index: 1, kind: input, shape index: {}]
  %s2 = inlined_call_operand.vmem [shape: bf16[32,4], index: 2, kind: input, shape index: {}]
  %s3 = inlined_call_operand.vmem [shape: bf16[32,32], index: 3, kind: input, shape index: {}]
  %s4 = inlined_call_operand.vmem [shape: bf16[32,32], index: 4, kind: input, shape index: {}]
  %s5 = inlined_call_operand.vmem [shape: f32[1,32], index: 5, kind: input, shape index: {}]
  %s6 = inlined_call_operand.vmem [shape: f32[2,8,32], index: 6, kind: output, shape index: {}]
  %s7 = sld [smem:[#allocation0]]
  $region57: #{pct_forward.11} parent=0
    _
  %s9 = ssub.s32 1, %s7
  %s10 = scalar_select 0, %s9, %s7
  loop: start=0, step=1, limit=4
  $region2: #{pct_forward.11} parent=0 // loop_pre_header
    _
  $region3: #{pct_forward.11} parent=0 // loop_header
    %s12 = sphi 0, %s16
    %p13 = scmp.ge.s32.totalorder %s12, 4
    %s22 = sphi 0, %s24
    %s25 = sphi 0, %s22
    %s26 = sphi 0, %s25
    %s42 = sphi 0, %s26
    %s46 = sphi 0, %s46
    %s48 = sphi 0, %s46
    %s49 = sphi 0, %s48
    %s63 = sphi 0, %s49
    %s67 = sphi 0, %s67
    %s69 = sphi 0, %s67
    %s70 = sphi 0, %s69
    %s84 = sphi 0, %s70
    %s88 = sphi 0, %s88
    %s90 = sphi 0, %s88
    %s91 = sphi 0, %s90
    %s105 = sphi 0, %s91
    %s109 = sphi 0, %s109
    %s111 = sphi 0, %s109
    %s112 = sphi 0, %s111
    %s126 = sphi 0, %s112
    %s130 = sphi 0, %s130
    %s132 = sphi 0, %s130
    %s133 = sphi 0, %s132
    %s147 = sphi 0, %s133
    %s153 = sphi 0, %s155
    %s156 = sphi 0, %s153
    %s157 = sphi 0, %s156
    %s173 = sphi 0, %s157
  $region4: #{pct_forward.11} parent=0 // loop_header_branch
    %15 = sbr.rel (%p13) target = $region8
  $region5: #{pct_forward.11} parent=0 // loop_body
    %s17 = ssub.s32 %s12, 1
    %s18 = ssub.s32 %s12, 2
    %s19 = sadd.s32 %s12, 1
    %s20 = ssub.s32 %s12, %s19
    %p21 = scmp.eq.s32.totalorder %s20, 0
    %s23 = sadd.s32 %s22, 1
    %s24 = scalar_select %p21, %s22, %s23
    %p27 = pneg %p21
    %p28 = scmp.eq.s32.totalorder %s12, 1
    %p29 = por %p27, %p28
    %p30 = scmp.ne.s32.totalorder %s22, %s25
    %p31 = scmp.eq.s32.totalorder %s12, 0
    %p32 = por %p30, %p31
    %p33 = scmp.ne.s32.totalorder %s22, %s25
    %p34 = scmp.eq.s32.totalorder %s17, 1
    %p35 = por %p33, %p34
    %p36 = scmp.ne.s32.totalorder %s25, %s26
    %p37 = scmp.eq.s32.totalorder %s17, 0
    %p38 = por %p36, %p37
    %p39 = scmp.ne.s32.totalorder %s25, %s26
    %p40 = scmp.eq.s32.totalorder %s18, 1
    %p41 = por %p39, %p40
    %p43 = scmp.ne.s32.totalorder %s26, %s42
    %p44 = scmp.eq.s32.totalorder %s18, 0
    %p45 = por %p43, %p44
    %s47 = sadd.s32 %s46, 1
    %p50 = scmp.eq.s32.totalorder %s12, 1
    %p51 = scmp.ne.s32.totalorder %s46, %s48
    %p52 = scmp.eq.s32.totalorder %s12, 0
    %p53 = por %p51, %p52
    %p54 = scmp.ne.s32.totalorder %s46, %s48
    %p55 = scmp.eq.s32.totalorder %s17, 1
    %p56 = por %p54, %p55
    %p57 = scmp.ne.s32.totalorder %s48, %s49
    %p58 = scmp.eq.s32.totalorder %s17, 0
    %p59 = por %p57, %p58
    %p60 = scmp.ne.s32.totalorder %s48, %s49
    %p61 = scmp.eq.s32.totalorder %s18, 1
    %p62 = por %p60, %p61
    %p64 = scmp.ne.s32.totalorder %s49, %s63
    %p65 = scmp.eq.s32.totalorder %s18, 0
    %p66 = por %p64, %p65
    %s68 = sadd.s32 %s67, 1
    %p71 = scmp.eq.s32.totalorder %s12, 1
    %p72 = scmp.ne.s32.totalorder %s67, %s69
    %p73 = scmp.eq.s32.totalorder %s12, 0
    %p74 = por %p72, %p73
    %p75 = scmp.ne.s32.totalorder %s67, %s69
    %p76 = scmp.eq.s32.totalorder %s17, 1
    %p77 = por %p75, %p76
    %p78 = scmp.ne.s32.totalorder %s69, %s70
    %p79 = scmp.eq.s32.totalorder %s17, 0
    %p80 = por %p78, %p79
    %p81 = scmp.ne.s32.totalorder %s69, %s70
    %p82 = scmp.eq.s32.totalorder %s18, 1
    %p83 = por %p81, %p82
    %p85 = scmp.ne.s32.totalorder %s70, %s84
    %p86 = scmp.eq.s32.totalorder %s18, 0
    %p87 = por %p85, %p86
    %s89 = sadd.s32 %s88, 1
    %p92 = scmp.eq.s32.totalorder %s12, 1
    %p93 = scmp.ne.s32.totalorder %s88, %s90
    %p94 = scmp.eq.s32.totalorder %s12, 0
    %p95 = por %p93, %p94
    %p96 = scmp.ne.s32.totalorder %s88, %s90
    %p97 = scmp.eq.s32.totalorder %s17, 1
    %p98 = por %p96, %p97
    %p99 = scmp.ne.s32.totalorder %s90, %s91
    %p100 = scmp.eq.s32.totalorder %s17, 0
    %p101 = por %p99, %p100
    %p102 = scmp.ne.s32.totalorder %s90, %s91
    %p103 = scmp.eq.s32.totalorder %s18, 1
    %p104 = por %p102, %p103
    %p106 = scmp.ne.s32.totalorder %s91, %s105
    %p107 = scmp.eq.s32.totalorder %s18, 0
    %p108 = por %p106, %p107
    %s110 = sadd.s32 %s109, 1
    %p113 = scmp.eq.s32.totalorder %s12, 1
    %p114 = scmp.ne.s32.totalorder %s109, %s111
    %p115 = scmp.eq.s32.totalorder %s12, 0
    %p116 = por %p114, %p115
    %p117 = scmp.ne.s32.totalorder %s109, %s111
    %p118 = scmp.eq.s32.totalorder %s17, 1
    %p119 = por %p117, %p118
    %p120 = scmp.ne.s32.totalorder %s111, %s112
    %p121 = scmp.eq.s32.totalorder %s17, 0
    %p122 = por %p120, %p121
    %p123 = scmp.ne.s32.totalorder %s111, %s112
    %p124 = scmp.eq.s32.totalorder %s18, 1
    %p125 = por %p123, %p124
    %p127 = scmp.ne.s32.totalorder %s112, %s126
    %p128 = scmp.eq.s32.totalorder %s18, 0
    %p129 = por %p127, %p128
    %s131 = sadd.s32 %s130, 1
    %p134 = scmp.eq.s32.totalorder %s12, 1
    %p135 = scmp.ne.s32.totalorder %s130, %s132
    %p136 = scmp.eq.s32.totalorder %s12, 0
    %p137 = por %p135, %p136
    %p138 = scmp.ne.s32.totalorder %s130, %s132
    %p139 = scmp.eq.s32.totalorder %s17, 1
    %p140 = por %p138, %p139
    %p141 = scmp.ne.s32.totalorder %s132, %s133
    %p142 = scmp.eq.s32.totalorder %s17, 0
    %p143 = por %p141, %p142
    %p144 = scmp.ne.s32.totalorder %s132, %s133
    %p145 = scmp.eq.s32.totalorder %s18, 1
    %p146 = por %p144, %p145
    %p148 = scmp.ne.s32.totalorder %s133, %s147
    %p149 = scmp.eq.s32.totalorder %s18, 0
    %p150 = por %p148, %p149
    %s151 = ssub.s32 %s12, %s19
    %p152 = scmp.eq.s32.totalorder %s151, 0
    %s154 = sadd.s32 %s153, 1
    %s155 = scalar_select %p152, %s153, %s154
    %p158 = pneg %p152
    %p159 = scmp.eq.s32.totalorder %s12, 1
    %p160 = por %p158, %p159
    %p161 = scmp.ne.s32.totalorder %s153, %s156
    %p162 = scmp.eq.s32.totalorder %s12, 0
    %p163 = por %p161, %p162
    %p164 = scmp.ne.s32.totalorder %s153, %s156
    %p165 = scmp.eq.s32.totalorder %s17, 1
    %p166 = por %p164, %p165
    %p167 = scmp.ne.s32.totalorder %s156, %s157
    %p168 = scmp.eq.s32.totalorder %s17, 0
    %p169 = por %p167, %p168
    %p170 = scmp.ne.s32.totalorder %s156, %s157
    %p171 = scmp.eq.s32.totalorder %s18, 1
    %p172 = por %p170, %p171
    %p174 = scmp.ne.s32.totalorder %s157, %s173
    %p175 = scmp.eq.s32.totalorder %s18, 0
    %p176 = por %p174, %p175
    %p177 = scmp.le.s32.totalorder 1, %s12
    %p178 = scmp.lt.s32.totalorder %s12, 3
    %p179 = pnand %p177, %p178
    %p180 = pneg %p179
    // Predicated region
    $region9: #{pct_forward.11} parent=5 // pred_check
      _
    $region10: #{pct_forward.11} parent=5 // pred_check_branch
      %182 = sbr.rel (%p179) target = $region12
    $region11: #{pct_forward.11} parent=5 // pred_region
      %s183 = ssub.s32 %s12, 1
      // Predicated region
      $region13: #{pct_forward.11} parent=11 // pred_check
        %p184 = pneg %p59
      $region14: #{pct_forward.11} parent=11 // pred_check_branch
        %186 = sbr.rel (%p184) target = $region16
      $region15: #{pct_forward.11} parent=11 // pred_region
        _
      $region16: #{pct_forward.11} parent=11 // pred_fallthru
        _
      // Predicated region
      $region17: #{pct_forward.11} parent=11 // pred_check
        %p187 = pneg %p80
      $region18: #{pct_forward.11} parent=11 // pred_check_branch
        %189 = sbr.rel (%p187) target = $region20
      $region19: #{pct_forward.11} parent=11 // pred_region
        _
      $region20: #{pct_forward.11} parent=11 // pred_fallthru
        _
      // Predicated region
      $region21: #{pct_forward.11} parent=11 // pred_check
        %p190 = pneg %p101
      $region22: #{pct_forward.11} parent=11 // pred_check_branch
        %192 = sbr.rel (%p190) target = $region24
      $region23: #{pct_forward.11} parent=11 // pred_region
        _
      $region24: #{pct_forward.11} parent=11 // pred_fallthru
        _
      // Predicated region
      $region25: #{pct_forward.11} parent=11 // pred_check
        %p193 = pneg %p122
      $region26: #{pct_forward.11} parent=11 // pred_check_branch
        %195 = sbr.rel (%p193) target = $region28
      $region27: #{pct_forward.11} parent=11 // pred_region
        _
      $region28: #{pct_forward.11} parent=11 // pred_fallthru
        _
      // Predicated region
      $region29: #{pct_forward.11} parent=11 // pred_check
        %p196 = pneg %p143
      $region30: #{pct_forward.11} parent=11 // pred_check_branch
        %198 = sbr.rel (%p196) target = $region32
      $region31: #{pct_forward.11} parent=11 // pred_region
        _
      $region32: #{pct_forward.11} parent=11 // pred_fallthru
        _
    $region12: #{pct_forward.11} parent=5 // pred_fallthru
      _
    %p199 = scmp.lt.s32.totalorder %s12, 2
    // Predicated region
    $region33: #{pct_forward.11} parent=5 // pred_check
      %p200 = pneg %p199
    $region34: #{pct_forward.11} parent=5 // pred_check_branch
      %202 = sbr.rel (%p200) target = $region36
    $region35: #{pct_forward.11} parent=5 // pred_region
      // Predicated region
      $region37: #{pct_forward.11} parent=35 // pred_check
        %p203 = pneg %p32
      $region38: #{pct_forward.11} parent=35 // pred_check_branch
        %205 = sbr.rel (%p203) target = $region40
      $region39: #{pct_forward.11} parent=35 // pred_region
        %p206 = scmp.lt.s32.totalorder %s12, 1
        %s207 = scalar_select %p206, %s12, 1
        %s208 = smul.addr %s207, 8
        %s209 = scalar_lea.vmem %s0, %s208
      $region40: #{pct_forward.11} parent=35 // pred_fallthru
        _
    $region36: #{pct_forward.11} parent=5 // pred_fallthru
      _
    %p210 = scmp.le.s32.totalorder 1, %s12
    %p211 = scmp.lt.s32.totalorder %s12, 3
    %p212 = pnand %p210, %p211
    %p213 = pneg %p212
    // Predicated region
    $region41: #{pct_forward.11} parent=5 // pred_check
      _
    $region42: #{pct_forward.11} parent=5 // pred_check_branch
      %215 = sbr.rel (%p212) target = $region44
    $region43: #{pct_forward.11} parent=5 // pred_region
      %s216 = ssub.s32 %s12, 1
      %p217 = scmp.lt.s32.totalorder %s17, 1
      %s218 = scalar_select %p217, %s17, 1
      %s219 = smul.addr %s218, 8
      %s220 = scalar_lea.vmem %s0, %s219
      %p221 = pneg %p38
      %p222 = pneg %p35
      %p223 = pneg %p59
      %p224 = pneg %p56
      %p225 = pneg %p80
      %p226 = pneg %p77
      %p227 = pneg %p101
      %p228 = pneg %p98
      %p229 = pneg %p122
      %p230 = pneg %p119
      %p231 = pneg %p143
      %p232 = pneg %p140
      %p233 = pneg %p169
      %p234 = pneg %p166
      %p235 = scmp.lt.s32.totalorder %s17, 1
      %s236 = scalar_select %p235, %s17, 1
      %s237 = smul.addr %s236, 8
      %s238 = scalar_lea.vmem %s6, %s237
      %p239 = scmp.lt.s32.totalorder %s17, 1
      %s240 = scalar_select %p239, %s17, 1
      %s241 = smul.addr %s240, 8
      %s242 = scalar_lea.vmem %s0, %s241
      %p243 = scmp.lt.s32.totalorder %s17, 1
      %s244 = scalar_select %p243, %s17, 1
      %s245 = smul.addr %s244, 8
      %s246 = scalar_lea.vmem %s6, %s245
      %v248 = vld [vmem:[%s242] sm:$0xff]
      %v249 = vpack.c.bf16 %v248, %v248
      %v250 = vld [vmem:[%s1] sm:$0xf]
      %v251 = vld [vmem:[%s1 + $0x4] sm:$0xf]
      %v252 = vld [vmem:[%s1 + $0x8] sm:$0xf]
      %v253 = vld [vmem:[%s1 + $0xc] sm:$0xf]
      %v258 = vunpack.c.l.b16 %v250
      %v259 = vunpack.c.l.b16 %v251
      %v260 = vunpack.c.l.b16 %v252
      %v261 = vunpack.c.l.b16 %v253
      %v262 = vpack.c.b16 %v259, %v258
      %v263 = vpack.c.b16 %v261, %v260
      %vm266 = vcmask 261120
      %v268 = vsel %vm266, %v249, 0
      %270 = vmatprep.subr.bf16.mxu0 0
      %271 = vmatpush1.bf16.msra.mxu0 %v262
      %272 = vmatprep.subr.bf16.mxu0 0
      %273 = vmatpush1.bf16.msra.mxu0 %v263
      %274 = vmatprep.subr.bf16.mxu0 0
      %275 = vmatpush1.bf16.msra.mxu0 0
      %276 = vmatprep.subr.bf16.mxu0 0
      %277 = vmatpush1.bf16.msra.mxu0 0
      %278 = vmatprep.subr.bf16.mxu0 0
      %279 = vmatpush1.bf16.msra.mxu0 0
      %280 = vmatprep.subr.bf16.mxu0 0
      %281 = vmatpush1.bf16.msra.mxu0 0
      %282 = vmatprep.subr.bf16.mxu0 0
      %283 = vmatpush1.bf16.msra.mxu0 0
      %284 = vmatprep.subr.bf16.mxu0 0
      %285 = vmatpush1.bf16.msra.mxu0 0
      %286 = vmatprep.subr.bf16.mxu0 0
      %287 = vmatpush1.bf16.msra.mxu0 0
      %288 = vmatprep.subr.bf16.mxu0 0
      %289 = vmatpush1.bf16.msra.mxu0 0
      %290 = vmatprep.subr.bf16.mxu0 0
      %291 = vmatpush1.bf16.msra.mxu0 0
      %292 = vmatprep.subr.bf16.mxu0 0
      %293 = vmatpush1.bf16.msra.mxu0 0
      %294 = vmatprep.subr.bf16.mxu0 0
      %295 = vmatpush1.bf16.msra.mxu0 0
      %296 = vmatprep.subr.bf16.mxu0 0
      %297 = vmatpush1.bf16.msra.mxu0 0
      %298 = vmatprep.subr.bf16.mxu0 0
      %299 = vmatpush1.bf16.msra.mxu0 0
      %300 = vmatprep.subr.bf16.mxu0 0
      %301 = vmatpush1.bf16.msra.mxu0 0
      %302 = vmatprep.mubr.bf16.mxu0 0
      %303 = vmatmul.mubr.bf16.gmra.mrb[0].mxu0 %v268
      %v304 = vpop.f32.mrb[0].mxu0
      %v305 = vadd.f32 0.0, %v304
      %v306 = vpop.f32.mrb[0].mxu0
      %v307 = vpop.f32.mrb[0].mxu0
      %v308 = vpop.f32.mrb[0].mxu0
      %309 = vdwg.mxu0
      %v310 = vpack.c.bf16 %v305, %v305
      %v311 = vld [vmem:[%s2] sm:$0xf]
      %v312 = vld [vmem:[%s2 + $0x4] sm:$0xf]
      %v313 = vld [vmem:[%s2 + $0x8] sm:$0xf]
      %v314 = vld [vmem:[%s2 + $0xc] sm:$0xf]
      %v319 = vunpack.c.l.b16 %v311
      %v320 = vunpack.c.l.b16 %v312
      %v321 = vunpack.c.l.b16 %v313
      %v322 = vunpack.c.l.b16 %v314
      %v323 = vpack.c.b16 %v320, %v319
      %v324 = vpack.c.b16 %v322, %v321
      %327 = vmatprep.subr.bf16.mxu0 0
      %328 = vmatpush1.bf16.msra.mxu0 %v323
      %329 = vmatprep.subr.bf16.mxu0 0
      %330 = vmatpush1.bf16.msra.mxu0 %v324
      %331 = vmatprep.subr.bf16.mxu0 0
      %332 = vmatpush1.bf16.msra.mxu0 0
      %333 = vmatprep.subr.bf16.mxu0 0
      %334 = vmatpush1.bf16.msra.mxu0 0
      %335 = vmatprep.subr.bf16.mxu0 0
      %336 = vmatpush1.bf16.msra.mxu0 0
      %337 = vmatprep.subr.bf16.mxu0 0
      %338 = vmatpush1.bf16.msra.mxu0 0
      %339 = vmatprep.subr.bf16.mxu0 0
      %340 = vmatpush1.bf16.msra.mxu0 0
      %341 = vmatprep.subr.bf16.mxu0 0
      %342 = vmatpush1.bf16.msra.mxu0 0
      %343 = vmatprep.subr.bf16.mxu0 0
      %344 = vmatpush1.bf16.msra.mxu0 0
      %345 = vmatprep.subr.bf16.mxu0 0
      %346 = vmatpush1.bf16.msra.mxu0 0
      %347 = vmatprep.subr.bf16.mxu0 0
      %348 = vmatpush1.bf16.msra.mxu0 0
      %349 = vmatprep.subr.bf16.mxu0 0
      %350 = vmatpush1.bf16.msra.mxu0 0
      %351 = vmatprep.subr.bf16.mxu0 0
      %352 = vmatpush1.bf16.msra.mxu0 0
      %353 = vmatprep.subr.bf16.mxu0 0
      %354 = vmatpush1.bf16.msra.mxu0 0
      %355 = vmatprep.subr.bf16.mxu0 0
      %356 = vmatpush1.bf16.msra.mxu0 0
      %357 = vmatprep.subr.bf16.mxu0 0
      %358 = vmatpush1.bf16.msra.mxu0 0
      %359 = vmatprep.mubr.bf16.mxu0 0
      %360 = vmatmul.mubr.bf16.gmra.mrb[0].mxu0 %v268
      %v361 = vpop.f32.mrb[0].mxu0
      %v362 = vadd.f32 0.0, %v361
      %v363 = vpop.f32.mrb[0].mxu0
      %v364 = vpop.f32.mrb[0].mxu0
      %v365 = vpop.f32.mrb[0].mxu0
      %366 = vdwg.mxu0
      %v367 = vld [vmem:[%s3] sm:$0xf]
      %v368 = vld [vmem:[%s3 + $0x4] sm:$0xf]
      %v369 = vld [vmem:[%s3 + $0x8] sm:$0xf]
      %v370 = vld [vmem:[%s3 + $0xc] sm:$0xf]
      %v375 = vunpack.c.l.b16 %v367
      %v376 = vunpack.c.l.b16 %v368
      %v377 = vunpack.c.l.b16 %v369
      %v378 = vunpack.c.l.b16 %v370
      %v379 = vpack.c.b16 %v376, %v375
      %v380 = vpack.c.b16 %v378, %v377
      %383 = vmatprep.subr.bf16.mxu0 0
      %384 = vmatpush1.bf16.msra.mxu0 %v379
      %385 = vmatprep.subr.bf16.mxu0 0
      %386 = vmatpush1.bf16.msra.mxu0 %v380
      %387 = vmatprep.subr.bf16.mxu0 0
      %388 = vmatpush1.bf16.msra.mxu0 0
      %389 = vmatprep.subr.bf16.mxu0 0
      %390 = vmatpush1.bf16.msra.mxu0 0
      %391 = vmatprep.subr.bf16.mxu0 0
      %392 = vmatpush1.bf16.msra.mxu0 0
      %393 = vmatprep.subr.bf16.mxu0 0
      %394 = vmatpush1.bf16.msra.mxu0 0
      %395 = vmatprep.subr.bf16.mxu0 0
      %396 = vmatpush1.bf16.msra.mxu0 0
      %397 = vmatprep.subr.bf16.mxu0 0
      %398 = vmatpush1.bf16.msra.mxu0 0
      %399 = vmatprep.subr.bf16.mxu0 0
      %400 = vmatpush1.bf16.msra.mxu0 0
      %401 = vmatprep.subr.bf16.mxu0 0
      %402 = vmatpush1.bf16.msra.mxu0 0
      %403 = vmatprep.subr.bf16.mxu0 0
      %404 = vmatpush1.bf16.msra.mxu0 0
      %405 = vmatprep.subr.bf16.mxu0 0
      %406 = vmatpush1.bf16.msra.mxu0 0
      %407 = vmatprep.subr.bf16.mxu0 0
      %408 = vmatpush1.bf16.msra.mxu0 0
      %409 = vmatprep.subr.bf16.mxu0 0
      %410 = vmatpush1.bf16.msra.mxu0 0
      %411 = vmatprep.subr.bf16.mxu0 0
      %412 = vmatpush1.bf16.msra.mxu0 0
      %413 = vmatprep.subr.bf16.mxu0 0
      %414 = vmatpush1.bf16.msra.mxu0 0
      %415 = vmatprep.mubr.bf16.mxu0 0
      %416 = vmatmul.mubr.bf16.gmra.mrb[0].mxu0 %v268
      %v417 = vpop.f32.mrb[0].mxu0
      %v418 = vadd.f32 0.0, %v417
      %v419 = vpop.f32.mrb[0].mxu0
      %v420 = vpop.f32.mrb[0].mxu0
      %v421 = vpop.f32.mrb[0].mxu0
      %422 = vdwg.mxu0
      %v423 = vpack.c.bf16 %v362, %v362
      %vm424 = vcmask 31744
      %v426 = vsel %vm424, %v310, 0
      %v429 = vsel %vm424, %v423, 0
      %431 = vmatprep.subr.bf16.mxu0 0
      %432 = vmatpush1.bf16.xpose.msra.mxu0 %v429
      %433 = vmatprep.subr.bf16.mxu0 0
      %434 = vmatpush1.bf16.xpose.msra.mxu0 0
      %435 = vmatprep.subr.bf16.mxu0 0
      %436 = vmatpush1.bf16.xpose.msra.mxu0 0
      %437 = vmatprep.subr.bf16.mxu0 0
      %438 = vmatpush1.bf16.xpose.msra.mxu0 0
      %439 = vmatprep.subr.bf16.mxu0 0
      %440 = vmatpush1.bf16.xpose.msra.mxu0 0
      %441 = vmatprep.subr.bf16.mxu0 0
      %442 = vmatpush1.bf16.xpose.msra.mxu0 0
      %443 = vmatprep.subr.bf16.mxu0 0
      %444 = vmatpush1.bf16.xpose.msra.mxu0 0
      %445 = vmatprep.subr.bf16.mxu0 0
      %446 = vmatpush1.bf16.xpose.msra.mxu0 0
      %447 = vmatprep.subr.bf16.mxu0 0
      %448 = vmatpush1.bf16.xpose.msra.mxu0 0
      %449 = vmatprep.subr.bf16.mxu0 0
      %450 = vmatpush1.bf16.xpose.msra.mxu0 0
      %451 = vmatprep.subr.bf16.mxu0 0
      %452 = vmatpush1.bf16.xpose.msra.mxu0 0
      %453 = vmatprep.subr.bf16.mxu0 0
      %454 = vmatpush1.bf16.xpose.msra.mxu0 0
      %455 = vmatprep.subr.bf16.mxu0 0
      %456 = vmatpush1.bf16.xpose.msra.mxu0 0
      %457 = vmatprep.subr.bf16.mxu0 0
      %458 = vmatpush1.bf16.xpose.msra.mxu0 0
      %459 = vmatprep.subr.bf16.mxu0 0
      %460 = vmatpush1.bf16.xpose.msra.mxu0 0
      %461 = vmatprep.subr.bf16.mxu0 0
      %462 = vmatpush1.bf16.xpose.msra.mxu0 0
      %463 = vmatprep.mubr.bf16.mxu0 0
      %464 = vmatmul.mubr.bf16.gmra.mrb[0].mxu0 %v426
      %v465 = vpop.f32.mrb[0].mxu0
      %v466 = vadd.f32 0.0, %v465
      %v467 = vpop.f32.mrb[0].mxu0
      %v468 = vpop.f32.mrb[0].mxu0
      %v469 = vpop.f32.mrb[0].mxu0
      %470 = vdwg.mxu0
      %vm471 = vcmask 64512
      %v472 = vsel %vm471, %v466, -inf
      %v473 = vrot.slane %v472, 4
      %v474 = vmax.f32 %v472, %v473
      %v475 = vrot.slane %v474, 2
      %v476 = vmax.f32 %v474, %v475
      %v477 = vrot.slane %v476, 1
      %v478 = vmax.f32 %v476, %v477
      %v479 = vsub.f32 %v466, %v478
      %v480 = vpack.c.bf16 %v479, %v479
      %v482 = vmul.bf16 %v480, 1069105081
      %v483 = vpow.bf16.pop %v482
      %v484 = vunpack.c.l.bf16 %v483
      %v485 = vsel %vm471, %v484, 0.0
      %v486 = vrot.slane %v485, 4
      %v487 = vadd.f32 %v485, %v486
      %v488 = vrot.slane %v487, 2
      %v489 = vadd.f32 %v487, %v488
      %v490 = vrot.slane %v489, 1
      %v491 = vadd.f32 %v489, %v490
      %v492 = vrcp.pop %v491
      %v493 = vmul.f32 %v484, %v492
      %v494 = vsel %vm471, %v493, 0.0
      %495 = vadd.xlane.f32.xlu0 %v494
      %v496 = vpop.xlane.xlu0 %495
      %v497 = vadd.f32 %v496, 0.0
      %v498 = vpack.c.bf16 %v493, %v493
      %v499 = vpack.c.bf16 %v418, %v418
      %v501 = vsel %vm471, %v498, 0
      %vm503 = vcmask 1043456
      %v505 = vsel %vm503, %v499, 0
      %507 = vmatprep.subr.bf16.mxu0 0
      %508 = vmatpush1.bf16.msra.mxu0 %v505
      %509 = vmatprep.subr.bf16.mxu0 0
      %510 = vmatpush1.bf16.msra.mxu0 0
      %511 = vmatprep.subr.bf16.mxu0 0
      %512 = vmatpush1.bf16.msra.mxu0 0
      %513 = vmatprep.subr.bf16.mxu0 0
      %514 = vmatpush1.bf16.msra.mxu0 0
      %515 = vmatprep.subr.bf16.mxu0 0
      %516 = vmatpush1.bf16.msra.mxu0 0
      %517 = vmatprep.subr.bf16.mxu0 0
      %518 = vmatpush1.bf16.msra.mxu0 0
      %519 = vmatprep.subr.bf16.mxu0 0
      %520 = vmatpush1.bf16.msra.mxu0 0
      %521 = vmatprep.subr.bf16.mxu0 0
      %522 = vmatpush1.bf16.msra.mxu0 0
      %523 = vmatprep.subr.bf16.mxu0 0
      %524 = vmatpush1.bf16.msra.mxu0 0
      %525 = vmatprep.subr.bf16.mxu0 0
      %526 = vmatpush1.bf16.msra.mxu0 0
      %527 = vmatprep.subr.bf16.mxu0 0
      %528 = vmatpush1.bf16.msra.mxu0 0
      %529 = vmatprep.subr.bf16.mxu0 0
      %530 = vmatpush1.bf16.msra.mxu0 0
      %531 = vmatprep.subr.bf16.mxu0 0
      %532 = vmatpush1.bf16.msra.mxu0 0
      %533 = vmatprep.subr.bf16.mxu0 0
      %534 = vmatpush1.bf16.msra.mxu0 0
      %535 = vmatprep.subr.bf16.mxu0 0
      %536 = vmatpush1.bf16.msra.mxu0 0
      %537 = vmatprep.subr.bf16.mxu0 0
      %538 = vmatpush1.bf16.msra.mxu0 0
      %539 = vmatprep.mubr.bf16.mxu0 0
      %540 = vmatmul.mubr.bf16.gmra.mrb[0].mxu0 %v501
      %v541 = vpop.f32.mrb[0].mxu0
      %v542 = vadd.f32 0.0, %v541
      %v543 = vpop.f32.mrb[0].mxu0
      %v544 = vpop.f32.mrb[0].mxu0
      %v545 = vpop.f32.mrb[0].mxu0
      %546 = vdwg.mxu0
      %v547 = vadd.f32 %v497, 1e-09
      %v548 = vrcp.pop %v547
      %v549 = vmul.f32 %v542, %v548
      %v550 = vsub.f32 %v248, %v549
      %v551 = vpack.c.bf16 %v550, %v550
      %v552 = vld [vmem:[%s4] sm:$0xf]
      %v553 = vld [vmem:[%s4 + $0x4] sm:$0xf]
      %v554 = vld [vmem:[%s4 + $0x8] sm:$0xf]
      %v555 = vld [vmem:[%s4 + $0xc] sm:$0xf]
      %v556 = vld [vmem:[%s5] sm:$0x1]
      %v558 = vlaneseq
      %v559 = vshrl.u32 %v558, 7
      %v560 = vsub.s32 0, %v559
      %v561 = vrot.slane %v556, %v560
      %v567 = vunpack.c.l.b16 %v552
      %v568 = vunpack.c.l.b16 %v553
      %v569 = vunpack.c.l.b16 %v554
      %v570 = vunpack.c.l.b16 %v555
      %v571 = vpack.c.b16 %v568, %v567
      %v572 = vpack.c.b16 %v570, %v569
      %v576 = vsel %vm266, %v551, 0
      %578 = vmatprep.subr.bf16.mxu0 0
      %579 = vmatpush1.bf16.msra.mxu0 %v571
      %580 = vmatprep.subr.bf16.mxu0 0
      %581 = vmatpush1.bf16.msra.mxu0 %v572
      %582 = vmatprep.subr.bf16.mxu0 0
      %583 = vmatpush1.bf16.msra.mxu0 0
      %584 = vmatprep.subr.bf16.mxu0 0
      %585 = vmatpush1.bf16.msra.mxu0 0
      %586 = vmatprep.subr.bf16.mxu0 0
      %587 = vmatpush1.bf16.msra.mxu0 0
      %588 = vmatprep.subr.bf16.mxu0 0
      %589 = vmatpush1.bf16.msra.mxu0 0
      %590 = vmatprep.subr.bf16.mxu0 0
      %591 = vmatpush1.bf16.msra.mxu0 0
      %592 = vmatprep.subr.bf16.mxu0 0
      %593 = vmatpush1.bf16.msra.mxu0 0
      %594 = vmatprep.subr.bf16.mxu0 0
      %595 = vmatpush1.bf16.msra.mxu0 0
      %596 = vmatprep.subr.bf16.mxu0 0
      %597 = vmatpush1.bf16.msra.mxu0 0
      %598 = vmatprep.subr.bf16.mxu0 0
      %599 = vmatpush1.bf16.msra.mxu0 0
      %600 = vmatprep.subr.bf16.mxu0 0
      %601 = vmatpush1.bf16.msra.mxu0 0
      %602 = vmatprep.subr.bf16.mxu0 0
      %603 = vmatpush1.bf16.msra.mxu0 0
      %604 = vmatprep.subr.bf16.mxu0 0
      %605 = vmatpush1.bf16.msra.mxu0 0
      %606 = vmatprep.subr.bf16.mxu0 0
      %607 = vmatpush1.bf16.msra.mxu0 0
      %608 = vmatprep.subr.bf16.mxu0 0
      %609 = vmatpush1.bf16.msra.mxu0 0
      %610 = vmatprep.mubr.bf16.mxu0 0
      %611 = vmatmul.mubr.bf16.gmra.mrb[0].mxu0 %v576
      %v612 = vpop.f32.mrb[0].mxu0
      %v613 = vadd.f32 %v561, %v612
      %v614 = vpop.f32.mrb[0].mxu0
      %v615 = vpop.f32.mrb[0].mxu0
      %v616 = vpop.f32.mrb[0].mxu0
      %617 = vdwg.mxu0
      %vm618 = vcmp.ge.f32.partialorder %v613, 0.0
      %v619 = vmul.f32 %v613, 0.01
      %v620 = vsel %vm618, %v613, %v619
      %v621 = vadd.f32 %v620, %v248
      %622 = vst.msk [vmem:[%s246] sm:$0xff] %vm266, %v621
      %p623 = scmp.lt.s32.totalorder %s17, 1
      %s624 = scalar_select %p623, %s17, 1
      %s625 = smul.addr %s624, 8
      %s626 = scalar_lea.vmem %s6, %s625
      // Predicated region
      $region45: #{pct_forward.11} parent=43 // pred_check
        %p627 = pneg %p166
      $region46: #{pct_forward.11} parent=43 // pred_check_branch
        %629 = sbr.rel (%p627) target = $region48
      $region47: #{pct_forward.11} parent=43 // pred_region
        _
      $region48: #{pct_forward.11} parent=43 // pred_fallthru
        _
    $region44: #{pct_forward.11} parent=5 // pred_fallthru
      _
    %p630 = scmp.le.s32.totalorder 2, %s12
    // Predicated region
    $region49: #{pct_forward.11} parent=5 // pred_check
      %p631 = pneg %p630
    $region50: #{pct_forward.11} parent=5 // pred_check_branch
      %633 = sbr.rel (%p631) target = $region52
    $region51: #{pct_forward.11} parent=5 // pred_region
      %s634 = ssub.s32 %s12, 2
      // Predicated region
      $region53: #{pct_forward.11} parent=51 // pred_check
        %p635 = pneg %p172
      $region54: #{pct_forward.11} parent=51 // pred_check_branch
        %637 = sbr.rel (%p635) target = $region56
      $region55: #{pct_forward.11} parent=51 // pred_region
        %p638 = scmp.lt.s32.totalorder %s18, 1
        %s639 = scalar_select %p638, %s18, 1
        %s640 = smul.addr %s639, 8
        %s641 = scalar_lea.vmem %s6, %s640
      $region56: #{pct_forward.11} parent=51 // pred_fallthru
        _
    $region52: #{pct_forward.11} parent=5 // pred_fallthru
      _
  $region6: #{pct_forward.11} parent=0 // loop_footer
    %s16 = sadd.s32 1, %s12
  $region7: #{pct_forward.11} parent=0 // loop_footer_branch
    %11 = sbr.rel target = $region3
  $region8: #{pct_forward.11} parent=0 // loop_exit
    _

// kernel: pct_forward.15
$region0: #{pct_forward.15}
  #allocation0 [shape = 'u32[]', space=smem, size = 0x4, offset = 0x4, fixed_abs, tag = 'smem constant byte address 0x4 - core index']
  #allocation1 [shape = 'u32[144,128]{1,0:T(1,128)}', space=vmem, size = 0x12000, scoped, tag = 'internal scratch']
  %s0 = inlined_call_operand.vmem [shape: f32[16,128], index: 0, kind: input, shape index: {}]
  %s1 = inlined_call_operand.vmem [shape: bf16[128,32], index: 1, kind: input, shape index: {}]
  %s2 = inlined_call_operand.vmem [shape: f32[1,32], index: 2, kind: input, shape index: {}]
  %s3 = inlined_call_operand.vmem [shape: bf16[16,32], index: 3, kind: output, shape index: {}]
  %s4 = sld [smem:[#allocation0]]
  $region22: #{pct_forward.15} parent=0
    _
  %s6 = ssub.s32 1, %s4
  %s7 = scalar_select 0, %s6, %s4
  // Predicated region
  $region2: #{pct_forward.15} parent=0 // pred_check
    _
  $region3: #{pct_forward.15} parent=0 // pred_check_branch
    %9 = sbr.rel (0) target = $region5
  $region4: #{pct_forward.15} parent=0 // pred_region
    _
  $region5: #{pct_forward.15} parent=0 // pred_fallthru
    _
  // Predicated region
  $region6: #{pct_forward.15} parent=0 // pred_check
    _
  $region7: #{pct_forward.15} parent=0 // pred_check_branch
    %11 = sbr.rel (0) target = $region9
  $region8: #{pct_forward.15} parent=0 // pred_region
    _
  $region9: #{pct_forward.15} parent=0 // pred_fallthru
    _
  // Predicated region
  $region10: #{pct_forward.15} parent=0 // pred_check
    _
  $region11: #{pct_forward.15} parent=0 // pred_check_branch
    %13 = sbr.rel (0) target = $region13
  $region12: #{pct_forward.15} parent=0 // pred_region
    _
  $region13: #{pct_forward.15} parent=0 // pred_fallthru
    _
  %v15 = vld [vmem:[%s0] sm:$0xff]
  %v16 = vld [vmem:[%s0 + $0x8] sm:$0xff]
  %v17 = vpack.c.bf16 %v16, %v15
  %v18 = vld [vmem:[%s1] sm:$0xf]
  %v19 = vld [vmem:[%s1 + $0x4] sm:$0xf]
  %v20 = vld [vmem:[%s1 + $0x8] sm:$0xf]
  %v21 = vld [vmem:[%s1 + $0xc] sm:$0xf]
  %v22 = vld [vmem:[%s1 + $0x10] sm:$0xf]
  %v23 = vld [vmem:[%s1 + $0x14] sm:$0xf]
  %v24 = vld [vmem:[%s1 + $0x18] sm:$0xf]
  %v25 = vld [vmem:[%s1 + $0x1c] sm:$0xf]
  %v26 = vld [vmem:[%s1 + $0x20] sm:$0xf]
  %v27 = vld [vmem:[%s1 + $0x24] sm:$0xf]
  %v28 = vld [vmem:[%s1 + $0x28] sm:$0xf]
  %v29 = vld [vmem:[%s1 + $0x2c] sm:$0xf]
  %v30 = vld [vmem:[%s1 + $0x30] sm:$0xf]
  %v31 = vld [vmem:[%s1 + $0x34] sm:$0xf]
  %v32 = vld [vmem:[%s1 + $0x38] sm:$0xf]
  %v33 = vld [vmem:[%s1 + $0x3c] sm:$0xf]
  %v34 = vld [vmem:[%s2] sm:$0x1]
  %v36 = vlaneseq
  %v37 = vshrl.u32 %v36, 7
  %v38 = vsub.s32 0, %v37
  %v39 = vrot.slane %v34, %v38
  %v57 = vunpack.c.l.b16 %v18
  %v58 = vunpack.c.l.b16 %v19
  %v59 = vunpack.c.l.b16 %v20
  %v60 = vunpack.c.l.b16 %v21
  %v61 = vunpack.c.l.b16 %v22
  %v62 = vunpack.c.l.b16 %v23
  %v63 = vunpack.c.l.b16 %v24
  %v64 = vunpack.c.l.b16 %v25
  %v65 = vunpack.c.l.b16 %v26
  %v66 = vunpack.c.l.b16 %v27
  %v67 = vunpack.c.l.b16 %v28
  %v68 = vunpack.c.l.b16 %v29
  %v69 = vunpack.c.l.b16 %v30
  %v70 = vunpack.c.l.b16 %v31
  %v71 = vunpack.c.l.b16 %v32
  %v72 = vunpack.c.l.b16 %v33
  %v73 = vpack.c.b16 %v58, %v57
  %v74 = vpack.c.b16 %v60, %v59
  %v75 = vpack.c.b16 %v62, %v61
  %v76 = vpack.c.b16 %v64, %v63
  %v77 = vpack.c.b16 %v66, %v65
  %v78 = vpack.c.b16 %v68, %v67
  %v79 = vpack.c.b16 %v70, %v69
  %v80 = vpack.c.b16 %v72, %v71
  %89 = vmatprep.subr.bf16.mxu0 0
  %90 = vmatpush1.bf16.msra.mxu0 %v73
  %91 = vmatprep.subr.bf16.mxu0 0
  %92 = vmatpush1.bf16.msra.mxu0 %v74
  %93 = vmatprep.subr.bf16.mxu0 0
  %94 = vmatpush1.bf16.msra.mxu0 %v75
  %95 = vmatprep.subr.bf16.mxu0 0
  %96 = vmatpush1.bf16.msra.mxu0 %v76
  %97 = vmatprep.subr.bf16.mxu0 0
  %98 = vmatpush1.bf16.msra.mxu0 %v77
  %99 = vmatprep.subr.bf16.mxu0 0
  %100 = vmatpush1.bf16.msra.mxu0 %v78
  %101 = vmatprep.subr.bf16.mxu0 0
  %102 = vmatpush1.bf16.msra.mxu0 %v79
  %103 = vmatprep.subr.bf16.mxu0 0
  %104 = vmatpush1.bf16.msra.mxu0 %v80
  %105 = vmatprep.subr.bf16.mxu0 0
  %106 = vmatpush1.bf16.msra.mxu0 0
  %107 = vmatprep.subr.bf16.mxu0 0
  %108 = vmatpush1.bf16.msra.mxu0 0
  %109 = vmatprep.subr.bf16.mxu0 0
  %110 = vmatpush1.bf16.msra.mxu0 0
  %111 = vmatprep.subr.bf16.mxu0 0
  %112 = vmatpush1.bf16.msra.mxu0 0
  %113 = vmatprep.subr.bf16.mxu0 0
  %114 = vmatpush1.bf16.msra.mxu0 0
  %115 = vmatprep.subr.bf16.mxu0 0
  %116 = vmatpush1.bf16.msra.mxu0 0
  %117 = vmatprep.subr.bf16.mxu0 0
  %118 = vmatpush1.bf16.msra.mxu0 0
  %119 = vmatprep.subr.bf16.mxu0 0
  %120 = vmatpush1.bf16.msra.mxu0 0
  %121 = vmatprep.mubr.bf16.mxu0 0
  %122 = vmatmul.mubr.bf16.gmra.mrb[0].mxu0 %v17
  %v123 = vpop.f32.mrb[0].mxu0
  %v124 = vadd.f32 %v39, %v123
  %v125 = vpop.f32.mrb[0].mxu0
  %v126 = vpop.f32.mrb[0].mxu0
  %v127 = vadd.f32 %v39, %v126
  %v128 = vpop.f32.mrb[0].mxu0
  %129 = vdwg.mxu0
  %vm130 = vcmp.ge.f32.partialorder %v124, 0.0
  %vm131 = vcmp.ge.f32.partialorder %v127, 0.0
  %v132 = vmul.f32 %v124, 0.01
  %v133 = vmul.f32 %v127, 0.01
  %v134 = vsel %vm130, %v124, %v132
  %v135 = vsel %vm131, %v127, %v133
  %v136 = vpack.c.bf16 %v135, %v134
  %v138 = vunpack.c.l.b16 %v136
  %v139 = vunpack.c.h.b16 %v136
  %v140 = vpack.c.b16 %v138, %v138
  %v141 = vpack.c.b16 %v139, %v139
  %vm144 = vcmask 257024
  %145 = vst.msk [vmem:[%s3] sm:$0xf] %vm144, %v140
  %146 = vst.msk [vmem:[%s3 + $0x4] sm:$0xf] %vm144, %v141
  // Predicated region
  $region14: #{pct_forward.15} parent=0 // pred_check
    _
  $region15: #{pct_forward.15} parent=0 // pred_check_branch
    %148 = sbr.rel (0) target = $region17
  $region16: #{pct_forward.15} parent=0 // pred_region
    _
  $region17: #{pct_forward.15} parent=0 // pred_fallthru
    _
  // Predicated region
  $region18: #{pct_forward.15} parent=0 // pred_check
    _
  $region19: #{pct_forward.15} parent=0 // pred_check_branch
    %150 = sbr.rel (0) target = $region21
  $region20: #{pct_forward.15} parent=0 // pred_region
    _
  $region21: #{pct_forward.15} parent=0 // pred_fallthru
    _

// kernel: pct_forward.16
$region0: #{pct_forward.16}
  #allocation0 [shape = 'u32[]', space=smem, size = 0x4, offset = 0x4, fixed_abs, tag = 'smem constant byte address 0x4 - core index']
  #allocation1 [shape = 'u32[144,128]{1,0:T(1,128)}', space=vmem, size = 0x12000, scoped, tag = 'internal scratch']
  %s0 = inlined_call_operand.vmem [shape: bf16[2,8,32], index: 0, kind: input, shape index: {}]
  %s1 = inlined_call_operand.vmem [shape: f32[2,1,32], index: 1, kind: output, shape index: {0}]
  %s2 = inlined_call_operand.vmem [shape: f32[2,1,32], index: 2, kind: output, shape index: {1}]
  %3 = xla_tuple %s1, %s2
  %s4 = sld [smem:[#allocation0]]
  $region45: #{pct_forward.16} parent=0
    _
  %s6 = ssub.s32 1, %s4
  %s7 = scalar_select 0, %s6, %s4
  loop: start=0, step=1, limit=4
  $region2: #{pct_forward.16} parent=0 // loop_pre_header
    _
  $region3: #{pct_forward.16} parent=0 // loop_header
    %s9 = sphi 0, %s13
    %p10 = scmp.ge.s32.totalorder %s9, 4
    %s19 = sphi 0, %s21
    %s22 = sphi 0, %s19
    %s23 = sphi 0, %s22
    %s39 = sphi 0, %s23
    %s45 = sphi 0, %s47
    %s48 = sphi 0, %s45
    %s49 = sphi 0, %s48
    %s65 = sphi 0, %s49
    %s71 = sphi 0, %s73
    %s74 = sphi 0, %s71
    %s75 = sphi 0, %s74
    %s91 = sphi 0, %s75
  $region4: #{pct_forward.16} parent=0 // loop_header_branch
    %12 = sbr.rel (%p10) target = $region8
  $region5: #{pct_forward.16} parent=0 // loop_body
    %s14 = ssub.s32 %s9, 1
    %s15 = ssub.s32 %s9, 2
    %s16 = sadd.s32 %s9, 1
    %s17 = ssub.s32 %s9, %s16
    %p18 = scmp.eq.s32.totalorder %s17, 0
    %s20 = sadd.s32 %s19, 1
    %s21 = scalar_select %p18, %s19, %s20
    %p24 = pneg %p18
    %p25 = scmp.eq.s32.totalorder %s9, 1
    %p26 = por %p24, %p25
    %p27 = scmp.ne.s32.totalorder %s19, %s22
    %p28 = scmp.eq.s32.totalorder %s9, 0
    %p29 = por %p27, %p28
    %p30 = scmp.ne.s32.totalorder %s19, %s22
    %p31 = scmp.eq.s32.totalorder %s14, 1
    %p32 = por %p30, %p31
    %p33 = scmp.ne.s32.totalorder %s22, %s23
    %p34 = scmp.eq.s32.totalorder %s14, 0
    %p35 = por %p33, %p34
    %p36 = scmp.ne.s32.totalorder %s22, %s23
    %p37 = scmp.eq.s32.totalorder %s15, 1
    %p38 = por %p36, %p37
    %p40 = scmp.ne.s32.totalorder %s23, %s39
    %p41 = scmp.eq.s32.totalorder %s15, 0
    %p42 = por %p40, %p41
    %s43 = ssub.s32 %s9, %s16
    %p44 = scmp.eq.s32.totalorder %s43, 0
    %s46 = sadd.s32 %s45, 1
    %s47 = scalar_select %p44, %s45, %s46
    %p50 = pneg %p44
    %p51 = scmp.eq.s32.totalorder %s9, 1
    %p52 = por %p50, %p51
    %p53 = scmp.ne.s32.totalorder %s45, %s48
    %p54 = scmp.eq.s32.totalorder %s9, 0
    %p55 = por %p53, %p54
    %p56 = scmp.ne.s32.totalorder %s45, %s48
    %p57 = scmp.eq.s32.totalorder %s14, 1
    %p58 = por %p56, %p57
    %p59 = scmp.ne.s32.totalorder %s48, %s49
    %p60 = scmp.eq.s32.totalorder %s14, 0
    %p61 = por %p59, %p60
    %p62 = scmp.ne.s32.totalorder %s48, %s49
    %p63 = scmp.eq.s32.totalorder %s15, 1
    %p64 = por %p62, %p63
    %p66 = scmp.ne.s32.totalorder %s49, %s65
    %p67 = scmp.eq.s32.totalorder %s15, 0
    %p68 = por %p66, %p67
    %s69 = ssub.s32 %s9, %s16
    %p70 = scmp.eq.s32.totalorder %s69, 0
    %s72 = sadd.s32 %s71, 1
    %s73 = scalar_select %p70, %s71, %s72
    %p76 = pneg %p70
    %p77 = scmp.eq.s32.totalorder %s9, 1
    %p78 = por %p76, %p77
    %p79 = scmp.ne.s32.totalorder %s71, %s74
    %p80 = scmp.eq.s32.totalorder %s9, 0
    %p81 = por %p79, %p80
    %p82 = scmp.ne.s32.totalorder %s71, %s74
    %p83 = scmp.eq.s32.totalorder %s14, 1
    %p84 = por %p82, %p83
    %p85 = scmp.ne.s32.totalorder %s74, %s75
    %p86 = scmp.eq.s32.totalorder %s14, 0
    %p87 = por %p85, %p86
    %p88 = scmp.ne.s32.totalorder %s74, %s75
    %p89 = scmp.eq.s32.totalorder %s15, 1
    %p90 = por %p88, %p89
    %p92 = scmp.ne.s32.totalorder %s75, %s91
    %p93 = scmp.eq.s32.totalorder %s15, 0
    %p94 = por %p92, %p93
    %p95 = scmp.le.s32.totalorder 1, %s9
    %p96 = scmp.lt.s32.totalorder %s9, 3
    %p97 = pnand %p95, %p96
    %p98 = pneg %p97
    // Predicated region
    $region9: #{pct_forward.16} parent=5 // pred_check
      _
    $region10: #{pct_forward.16} parent=5 // pred_check_branch
      %100 = sbr.rel (%p97) target = $region12
    $region11: #{pct_forward.16} parent=5 // pred_region
      %s101 = ssub.s32 %s9, 1
    $region12: #{pct_forward.16} parent=5 // pred_fallthru
      _
    %p102 = scmp.lt.s32.totalorder %s9, 2
    // Predicated region
    $region13: #{pct_forward.16} parent=5 // pred_check
      %p103 = pneg %p102
    $region14: #{pct_forward.16} parent=5 // pred_check_branch
      %105 = sbr.rel (%p103) target = $region16
    $region15: #{pct_forward.16} parent=5 // pred_region
      // Predicated region
      $region17: #{pct_forward.16} parent=15 // pred_check
        %p106 = pneg %p29
      $region18: #{pct_forward.16} parent=15 // pred_check_branch
        %108 = sbr.rel (%p106) target = $region20
      $region19: #{pct_forward.16} parent=15 // pred_region
        %p109 = scmp.lt.s32.totalorder %s9, 1
        %s110 = scalar_select %p109, %s9, 1
        %s111 = smul.addr %s110, 4
        %s112 = scalar_lea.vmem %s0, %s111
      $region20: #{pct_forward.16} parent=15 // pred_fallthru
        _
    $region16: #{pct_forward.16} parent=5 // pred_fallthru
      _
    %p113 = scmp.le.s32.totalorder 1, %s9
    %p114 = scmp.lt.s32.totalorder %s9, 3
    %p115 = pnand %p113, %p114
    %p116 = pneg %p115
    // Predicated region
    $region21: #{pct_forward.16} parent=5 // pred_check
      _
    $region22: #{pct_forward.16} parent=5 // pred_check_branch
      %118 = sbr.rel (%p115) target = $region24
    $region23: #{pct_forward.16} parent=5 // pred_region
      %s119 = ssub.s32 %s9, 1
      %p120 = scmp.lt.s32.totalorder %s14, 1
      %s121 = scalar_select %p120, %s14, 1
      %s122 = smul.addr %s121, 4
      %s123 = scalar_lea.vmem %s0, %s122
      %p124 = pneg %p35
      %p125 = pneg %p32
      %p126 = pneg %p61
      %p127 = pneg %p58
      %p128 = scmp.lt.s32.totalorder %s14, 1
      %s129 = scalar_select %p128, %s14, 1
      %s130 = scalar_lea.vmem %s1, %s129
      %p131 = pneg %p87
      %p132 = pneg %p84
      %p133 = scmp.lt.s32.totalorder %s14, 1
      %s134 = scalar_select %p133, %s14, 1
      %s135 = scalar_lea.vmem %s2, %s134
      %p136 = scmp.lt.s32.totalorder %s14, 1
      %s137 = scalar_select %p136, %s14, 1
      %s138 = smul.addr %s137, 4
      %s139 = scalar_lea.vmem %s0, %s138
      %p140 = scmp.lt.s32.totalorder %s14, 1
      %s141 = scalar_select %p140, %s14, 1
      %s142 = scalar_lea.vmem %s1, %s141
      %p143 = scmp.lt.s32.totalorder %s14, 1
      %s144 = scalar_select %p143, %s14, 1
      %s145 = scalar_lea.vmem %s2, %s144
      %v146 = vld [vmem:[%s139] sm:$0xf]
      %v147 = vunpack.c.l.bf16 %v146
      %vm148 = vcmask 261120
      %v149 = vsel %vm148, %v147, -inf
      %v150 = vrot.slane %v149, 4
      %v151 = vmax.f32 %v149, %v150
      %v152 = vrot.slane %v151, 2
      %v153 = vmax.f32 %v151, %v152
      %v154 = vrot.slane %v153, 1
      %v155 = vmax.f32 %v153, %v154
      %vm156 = vcmask 253952
      %157 = vst.msk [vmem:[%s142] sm:$0x1] %vm156, %v155
      %v158 = vsel %vm148, %v147, 0.0
      %v159 = vrot.slane %v158, 4
      %v160 = vadd.f32 %v158, %v159
      %v161 = vrot.slane %v160, 2
      %v162 = vadd.f32 %v160, %v161
      %v163 = vrot.slane %v162, 1
      %v164 = vadd.f32 %v162, %v163
      %v165 = vrcp.pop 8.0
      %v166 = vmul.f32 %v164, %v165
      %167 = vst.msk [vmem:[%s145] sm:$0x1] %vm156, %v166
      %p168 = scmp.lt.s32.totalorder %s14, 1
      %s169 = scalar_select %p168, %s14, 1
      %s170 = scalar_lea.vmem %s1, %s169
      %p171 = scmp.lt.s32.totalorder %s14, 1
      %s172 = scalar_select %p171, %s14, 1
      %s173 = scalar_lea.vmem %s2, %s172
      // Predicated region
      $region25: #{pct_forward.16} parent=23 // pred_check
        %p174 = pneg %p58
      $region26: #{pct_forward.16} parent=23 // pred_check_branch
        %176 = sbr.rel (%p174) target = $region28
      $region27: #{pct_forward.16} parent=23 // pred_region
        _
      $region28: #{pct_forward.16} parent=23 // pred_fallthru
        _
      // Predicated region
      $region29: #{pct_forward.16} parent=23 // pred_check
        %p177 = pneg %p84
      $region30: #{pct_forward.16} parent=23 // pred_check_branch
        %179 = sbr.rel (%p177) target = $region32
      $region31: #{pct_forward.16} parent=23 // pred_region
        _
      $region32: #{pct_forward.16} parent=23 // pred_fallthru
        _
    $region24: #{pct_forward.16} parent=5 // pred_fallthru
      _
    %p180 = scmp.le.s32.totalorder 2, %s9
    // Predicated region
    $region33: #{pct_forward.16} parent=5 // pred_check
      %p181 = pneg %p180
    $region34: #{pct_forward.16} parent=5 // pred_check_branch
      %183 = sbr.rel (%p181) target = $region36
    $region35: #{pct_forward.16} parent=5 // pred_region
      %s184 = ssub.s32 %s9, 2
      // Predicated region
      $region37: #{pct_forward.16} parent=35 // pred_check
        %p185 = pneg %p64
      $region38: #{pct_forward.16} parent=35 // pred_check_branch
        %187 = sbr.rel (%p185) target = $region40
      $region39: #{pct_forward.16} parent=35 // pred_region
        %p188 = scmp.lt.s32.totalorder %s15, 1
        %s189 = scalar_select %p188, %s15, 1
        %s190 = scalar_lea.vmem %s1, %s189
      $region40: #{pct_forward.16} parent=35 // pred_fallthru
        _
      // Predicated region
      $region41: #{pct_forward.16} parent=35 // pred_check
        %p191 = pneg %p90
      $region42: #{pct_forward.16} parent=35 // pred_check_branch
        %193 = sbr.rel (%p191) target = $region44
      $region43: #{pct_forward.16} parent=35 // pred_region
        %p194 = scmp.lt.s32.totalorder %s15, 1
        %s195 = scalar_select %p194, %s15, 1
        %s196 = scalar_lea.vmem %s2, %s195
      $region44: #{pct_forward.16} parent=35 // pred_fallthru
        _
    $region36: #{pct_forward.16} parent=5 // pred_fallthru
      _
  $region6: #{pct_forward.16} parent=0 // loop_footer
    %s13 = sadd.s32 1, %s9
  $region7: #{pct_forward.16} parent=0 // loop_footer_branch
    %8 = sbr.rel target = $region3
  $region8: #{pct_forward.16} parent=0 // loop_exit
    _

// kernel: pct_forward.17
$region0: #{pct_forward.17}
  #allocation0 [shape = 'u32[]', space=smem, size = 0x4, offset = 0x4, fixed_abs, tag = 'smem constant byte address 0x4 - core index']
  #allocation1 [shape = 'u32[144,128]{1,0:T(1,128)}', space=vmem, size = 0x12000, scoped, tag = 'internal scratch']
  %s0 = inlined_call_operand.vmem [shape: bf16[2,8,32], index: 0, kind: input, shape index: {}]
  %s1 = inlined_call_operand.vmem [shape: f32[2,1,32], index: 1, kind: input, shape index: {}]
  %s2 = inlined_call_operand.vmem [shape: bf16[32,32], index: 2, kind: input, shape index: {}]
  %s3 = inlined_call_operand.vmem [shape: bf16[32,32], index: 3, kind: input, shape index: {}]
  %s4 = inlined_call_operand.vmem [shape: f32[1,32], index: 4, kind: input, shape index: {}]
  %s5 = inlined_call_operand.vmem [shape: bf16[32,5], index: 5, kind: input, shape index: {}]
  %s6 = inlined_call_operand.vmem [shape: f32[1,5], index: 6, kind: input, shape index: {}]
  %s7 = inlined_call_operand.vmem [shape: f32[2,8,5], index: 7, kind: output, shape index: {}]
  %s8 = sld [smem:[#allocation0]]
  $region61: #{pct_forward.17} parent=0
    _
  %s10 = ssub.s32 1, %s8
  %s11 = scalar_select 0, %s10, %s8
  loop: start=0, step=1, limit=4
  $region2: #{pct_forward.17} parent=0 // loop_pre_header
    _
  $region3: #{pct_forward.17} parent=0 // loop_header
    %s13 = sphi 0, %s17
    %p14 = scmp.ge.s32.totalorder %s13, 4
    %s20 = sphi 0, %s32
    %s21 = sphi 0, %s28
    %s22 = sphi 0, %s20
    %s23 = sphi 0, %s21
    %s24 = sphi 0, %s22
    %s25 = sphi 0, %s23
    %s37 = sphi 0, %s39
    %s40 = sphi 0, %s37
    %s41 = sphi 0, %s40
    %s57 = sphi 0, %s41
    %s63 = sphi 0, %s65
    %s66 = sphi 0, %s63
    %s67 = sphi 0, %s66
    %s83 = sphi 0, %s67
    %s87 = sphi 0, %s87
    %s89 = sphi 0, %s87
    %s90 = sphi 0, %s89
    %s104 = sphi 0, %s90
    %s108 = sphi 0, %s108
    %s110 = sphi 0, %s108
    %s111 = sphi 0, %s110
    %s125 = sphi 0, %s111
    %s129 = sphi 0, %s129
    %s131 = sphi 0, %s129
    %s132 = sphi 0, %s131
    %s146 = sphi 0, %s132
    %s150 = sphi 0, %s150
    %s152 = sphi 0, %s150
    %s153 = sphi 0, %s152
    %s167 = sphi 0, %s153
    %s171 = sphi 0, %s171
    %s173 = sphi 0, %s171
    %s174 = sphi 0, %s173
    %s188 = sphi 0, %s174
    %s196 = sphi 0, %s198
    %s199 = sphi 0, %s196
    %s200 = sphi 0, %s199
    %s216 = sphi 0, %s200
  $region4: #{pct_forward.17} parent=0 // loop_header_branch
    %16 = sbr.rel (%p14) target = $region8
  $region5: #{pct_forward.17} parent=0 // loop_body
    %s18 = ssub.s32 %s13, 1
    %s19 = ssub.s32 %s13, 2
    %s26 = sadd.s32 1, %s21
    %p27 = scmp.ge.s32.totalorder %s26, 1
    %s28 = scalar_select %p27, 0, %s26
    %s29 = sadd.s32 1, %s20
    %s30 = scalar_select %p27, %s29, %s20
    %p31 = scmp.ge.s32.totalorder %s30, 2
    %s32 = scalar_select %p31, 0, %s30
    %s33 = ssub.s32 %s20, %s32
    %s34 = ssub.s32 %s21, %s28
    %s35 = sor.u32 %s33, %s34
    %p36 = scmp.eq.s32.totalorder %s35, 0
    %s38 = sadd.s32 %s37, 1
    %s39 = scalar_select %p36, %s37, %s38
    %p42 = pneg %p36
    %p43 = scmp.eq.s32.totalorder %s13, 1
    %p44 = por %p42, %p43
    %p45 = scmp.ne.s32.totalorder %s37, %s40
    %p46 = scmp.eq.s32.totalorder %s13, 0
    %p47 = por %p45, %p46
    %p48 = scmp.ne.s32.totalorder %s37, %s40
    %p49 = scmp.eq.s32.totalorder %s18, 1
    %p50 = por %p48, %p49
    %p51 = scmp.ne.s32.totalorder %s40, %s41
    %p52 = scmp.eq.s32.totalorder %s18, 0
    %p53 = por %p51, %p52
    %p54 = scmp.ne.s32.totalorder %s40, %s41
    %p55 = scmp.eq.s32.totalorder %s19, 1
    %p56 = por %p54, %p55
    %p58 = scmp.ne.s32.totalorder %s41, %s57
    %p59 = scmp.eq.s32.totalorder %s19, 0
    %p60 = por %p58, %p59
    %s61 = ssub.s32 %s20, %s32
    %p62 = scmp.eq.s32.totalorder %s61, 0
    %s64 = sadd.s32 %s63, 1
    %s65 = scalar_select %p62, %s63, %s64
    %p68 = pneg %p62
    %p69 = scmp.eq.s32.totalorder %s13, 1
    %p70 = por %p68, %p69
    %p71 = scmp.ne.s32.totalorder %s63, %s66
    %p72 = scmp.eq.s32.totalorder %s13, 0
    %p73 = por %p71, %p72
    %p74 = scmp.ne.s32.totalorder %s63, %s66
    %p75 = scmp.eq.s32.totalorder %s18, 1
    %p76 = por %p74, %p75
    %p77 = scmp.ne.s32.totalorder %s66, %s67
    %p78 = scmp.eq.s32.totalorder %s18, 0
    %p79 = por %p77, %p78
    %p80 = scmp.ne.s32.totalorder %s66, %s67
    %p81 = scmp.eq.s32.totalorder %s19, 1
    %p82 = por %p80, %p81
    %p84 = scmp.ne.s32.totalorder %s67, %s83
    %p85 = scmp.eq.s32.totalorder %s19, 0
    %p86 = por %p84, %p85
    %s88 = sadd.s32 %s87, 1
    %p91 = scmp.eq.s32.totalorder %s13, 1
    %p92 = scmp.ne.s32.totalorder %s87, %s89
    %p93 = scmp.eq.s32.totalorder %s13, 0
    %p94 = por %p92, %p93
    %p95 = scmp.ne.s32.totalorder %s87, %s89
    %p96 = scmp.eq.s32.totalorder %s18, 1
    %p97 = por %p95, %p96
    %p98 = scmp.ne.s32.totalorder %s89, %s90
    %p99 = scmp.eq.s32.totalorder %s18, 0
    %p100 = por %p98, %p99
    %p101 = scmp.ne.s32.totalorder %s89, %s90
    %p102 = scmp.eq.s32.totalorder %s19, 1
    %p103 = por %p101, %p102
    %p105 = scmp.ne.s32.totalorder %s90, %s104
    %p106 = scmp.eq.s32.totalorder %s19, 0
    %p107 = por %p105, %p106
    %s109 = sadd.s32 %s108, 1
    %p112 = scmp.eq.s32.totalorder %s13, 1
    %p113 = scmp.ne.s32.totalorder %s108, %s110
    %p114 = scmp.eq.s32.totalorder %s13, 0
    %p115 = por %p113, %p114
    %p116 = scmp.ne.s32.totalorder %s108, %s110
    %p117 = scmp.eq.s32.totalorder %s18, 1
    %p118 = por %p116, %p117
    %p119 = scmp.ne.s32.totalorder %s110, %s111
    %p120 = scmp.eq.s32.totalorder %s18, 0
    %p121 = por %p119, %p120
    %p122 = scmp.ne.s32.totalorder %s110, %s111
    %p123 = scmp.eq.s32.totalorder %s19, 1
    %p124 = por %p122, %p123
    %p126 = scmp.ne.s32.totalorder %s111, %s125
    %p127 = scmp.eq.s32.totalorder %s19, 0
    %p128 = por %p126, %p127
    %s130 = sadd.s32 %s129, 1
    %p133 = scmp.eq.s32.totalorder %s13, 1
    %p134 = scmp.ne.s32.totalorder %s129, %s131
    %p135 = scmp.eq.s32.totalorder %s13, 0
    %p136 = por %p134, %p135
    %p137 = scmp.ne.s32.totalorder %s129, %s131
    %p138 = scmp.eq.s32.totalorder %s18, 1
    %p139 = por %p137, %p138
    %p140 = scmp.ne.s32.totalorder %s131, %s132
    %p141 = scmp.eq.s32.totalorder %s18, 0
    %p142 = por %p140, %p141
    %p143 = scmp.ne.s32.totalorder %s131, %s132
    %p144 = scmp.eq.s32.totalorder %s19, 1
    %p145 = por %p143, %p144
    %p147 = scmp.ne.s32.totalorder %s132, %s146
    %p148 = scmp.eq.s32.totalorder %s19, 0
    %p149 = por %p147, %p148
    %s151 = sadd.s32 %s150, 1
    %p154 = scmp.eq.s32.totalorder %s13, 1
    %p155 = scmp.ne.s32.totalorder %s150, %s152
    %p156 = scmp.eq.s32.totalorder %s13, 0
    %p157 = por %p155, %p156
    %p158 = scmp.ne.s32.totalorder %s150, %s152
    %p159 = scmp.eq.s32.totalorder %s18, 1
    %p160 = por %p158, %p159
    %p161 = scmp.ne.s32.totalorder %s152, %s153
    %p162 = scmp.eq.s32.totalorder %s18, 0
    %p163 = por %p161, %p162
    %p164 = scmp.ne.s32.totalorder %s152, %s153
    %p165 = scmp.eq.s32.totalorder %s19, 1
    %p166 = por %p164, %p165
    %p168 = scmp.ne.s32.totalorder %s153, %s167
    %p169 = scmp.eq.s32.totalorder %s19, 0
    %p170 = por %p168, %p169
    %s172 = sadd.s32 %s171, 1
    %p175 = scmp.eq.s32.totalorder %s13, 1
    %p176 = scmp.ne.s32.totalorder %s171, %s173
    %p177 = scmp.eq.s32.totalorder %s13, 0
    %p178 = por %p176, %p177
    %p179 = scmp.ne.s32.totalorder %s171, %s173
    %p180 = scmp.eq.s32.totalorder %s18, 1
    %p181 = por %p179, %p180
    %p182 = scmp.ne.s32.totalorder %s173, %s174
    %p183 = scmp.eq.s32.totalorder %s18, 0
    %p184 = por %p182, %p183
    %p185 = scmp.ne.s32.totalorder %s173, %s174
    %p186 = scmp.eq.s32.totalorder %s19, 1
    %p187 = por %p185, %p186
    %p189 = scmp.ne.s32.totalorder %s174, %s188
    %p190 = scmp.eq.s32.totalorder %s19, 0
    %p191 = por %p189, %p190
    %s192 = ssub.s32 %s20, %s32
    %s193 = ssub.s32 %s21, %s28
    %s194 = sor.u32 %s192, %s193
    %p195 = scmp.eq.s32.totalorder %s194, 0
    %s197 = sadd.s32 %s196, 1
    %s198 = scalar_select %p195, %s196, %s197
    %p201 = pneg %p195
    %p202 = scmp.eq.s32.totalorder %s13, 1
    %p203 = por %p201, %p202
    %p204 = scmp.ne.s32.totalorder %s196, %s199
    %p205 = scmp.eq.s32.totalorder %s13, 0
    %p206 = por %p204, %p205
    %p207 = scmp.ne.s32.totalorder %s196, %s199
    %p208 = scmp.eq.s32.totalorder %s18, 1
    %p209 = por %p207, %p208
    %p210 = scmp.ne.s32.totalorder %s199, %s200
    %p211 = scmp.eq.s32.totalorder %s18, 0
    %p212 = por %p210, %p211
    %p213 = scmp.ne.s32.totalorder %s199, %s200
    %p214 = scmp.eq.s32.totalorder %s19, 1
    %p215 = por %p213, %p214
    %p217 = scmp.ne.s32.totalorder %s200, %s216
    %p218 = scmp.eq.s32.totalorder %s19, 0
    %p219 = por %p217, %p218
    %p220 = scmp.le.s32.totalorder 1, %s13
    %p221 = scmp.lt.s32.totalorder %s13, 3
    %p222 = pnand %p220, %p221
    %p223 = pneg %p222
    // Predicated region
    $region9: #{pct_forward.17} parent=5 // pred_check
      _
    $region10: #{pct_forward.17} parent=5 // pred_check_branch
      %225 = sbr.rel (%p222) target = $region12
    $region11: #{pct_forward.17} parent=5 // pred_region
      %s226 = ssub.s32 %s13, 1
      // Predicated region
      $region13: #{pct_forward.17} parent=11 // pred_check
        %p227 = pneg %p100
      $region14: #{pct_forward.17} parent=11 // pred_check_branch
        %229 = sbr.rel (%p227) target = $region16
      $region15: #{pct_forward.17} parent=11 // pred_region
        _
      $region16: #{pct_forward.17} parent=11 // pred_fallthru
        _
      // Predicated region
      $region17: #{pct_forward.17} parent=11 // pred_check
        %p230 = pneg %p121
      $region18: #{pct_forward.17} parent=11 // pred_check_branch
        %232 = sbr.rel (%p230) target = $region20
      $region19: #{pct_forward.17} parent=11 // pred_region
        _
      $region20: #{pct_forward.17} parent=11 // pred_fallthru
        _
      // Predicated region
      $region21: #{pct_forward.17} parent=11 // pred_check
        %p233 = pneg %p142
      $region22: #{pct_forward.17} parent=11 // pred_check_branch
        %235 = sbr.rel (%p233) target = $region24
      $region23: #{pct_forward.17} parent=11 // pred_region
        _
      $region24: #{pct_forward.17} parent=11 // pred_fallthru
        _
      // Predicated region
      $region25: #{pct_forward.17} parent=11 // pred_check
        %p236 = pneg %p163
      $region26: #{pct_forward.17} parent=11 // pred_check_branch
        %238 = sbr.rel (%p236) target = $region28
      $region27: #{pct_forward.17} parent=11 // pred_region
        _
      $region28: #{pct_forward.17} parent=11 // pred_fallthru
        _
      // Predicated region
      $region29: #{pct_forward.17} parent=11 // pred_check
        %p239 = pneg %p184
      $region30: #{pct_forward.17} parent=11 // pred_check_branch
        %241 = sbr.rel (%p239) target = $region32
      $region31: #{pct_forward.17} parent=11 // pred_region
        _
      $region32: #{pct_forward.17} parent=11 // pred_fallthru
        _
    $region12: #{pct_forward.17} parent=5 // pred_fallthru
      _
    %p242 = scmp.lt.s32.totalorder %s13, 2
    // Predicated region
    $region33: #{pct_forward.17} parent=5 // pred_check
      %p243 = pneg %p242
    $region34: #{pct_forward.17} parent=5 // pred_check_branch
      %245 = sbr.rel (%p243) target = $region36
    $region35: #{pct_forward.17} parent=5 // pred_region
      // Predicated region
      $region37: #{pct_forward.17} parent=35 // pred_check
        %p246 = pneg %p47
      $region38: #{pct_forward.17} parent=35 // pred_check_branch
        %248 = sbr.rel (%p246) target = $region40
      $region39: #{pct_forward.17} parent=35 // pred_region
        %p249 = scmp.lt.s32.totalorder %s20, 1
        %s250 = scalar_select %p249, %s20, 1
        %p251 = scmp.lt.s32.totalorder %s21, 0
        %s252 = scalar_select %p251, %s21, 0
        %s253 = sadd.s32 %s252, %s250
        %s254 = smul.addr %s253, 4
        %s255 = scalar_lea.vmem %s0, %s254
      $region40: #{pct_forward.17} parent=35 // pred_fallthru
        _
      // Predicated region
      $region41: #{pct_forward.17} parent=35 // pred_check
        %p256 = pneg %p73
      $region42: #{pct_forward.17} parent=35 // pred_check_branch
        %258 = sbr.rel (%p256) target = $region44
      $region43: #{pct_forward.17} parent=35 // pred_region
        %p259 = scmp.lt.s32.totalorder %s20, 1
        %s260 = scalar_select %p259, %s20, 1
        %s261 = scalar_lea.vmem %s1, %s260
      $region44: #{pct_forward.17} parent=35 // pred_fallthru
        _
    $region36: #{pct_forward.17} parent=5 // pred_fallthru
      _
    %p262 = scmp.le.s32.totalorder 1, %s13
    %p263 = scmp.lt.s32.totalorder %s13, 3
    %p264 = pnand %p262, %p263
    %p265 = pneg %p264
    // Predicated region
    $region45: #{pct_forward.17} parent=5 // pred_check
      _
    $region46: #{pct_forward.17} parent=5 // pred_check_branch
      %267 = sbr.rel (%p264) target = $region48
    $region47: #{pct_forward.17} parent=5 // pred_region
      %s268 = ssub.s32 %s13, 1
      %p269 = scmp.lt.s32.totalorder %s22, 1
      %s270 = scalar_select %p269, %s22, 1
      %p271 = scmp.lt.s32.totalorder %s23, 0
      %s272 = scalar_select %p271, %s23, 0
      %s273 = sadd.s32 %s272, %s270
      %s274 = smul.addr %s273, 4
      %s275 = scalar_lea.vmem %s0, %s274
      %p276 = pneg %p53
      %p277 = pneg %p50
      %p278 = scmp.lt.s32.totalorder %s22, 1
      %s279 = scalar_select %p278, %s22, 1
      %s280 = scalar_lea.vmem %s1, %s279
      %p281 = pneg %p79
      %p282 = pneg %p76
      %p283 = pneg %p100
      %p284 = pneg %p97
      %p285 = pneg %p121
      %p286 = pneg %p118
      %p287 = pneg %p142
      %p288 = pneg %p139
      %p289 = pneg %p163
      %p290 = pneg %p160
      %p291 = pneg %p184
      %p292 = pneg %p181
      %p293 = pneg %p212
      %p294 = pneg %p209
      %p295 = scmp.lt.s32.totalorder %s22, 1
      %s296 = scalar_select %p295, %s22, 1
      %p297 = scmp.lt.s32.totalorder %s23, 0
      %s298 = scalar_select %p297, %s23, 0
      %s299 = sadd.s32 %s298, %s296
      %s300 = smul.addr %s299, 8
      %s301 = scalar_lea.vmem %s7, %s300
      %p302 = scmp.lt.s32.totalorder %s22, 1
      %s303 = scalar_select %p302, %s22, 1
      %p304 = scmp.lt.s32.totalorder %s23, 0
      %s305 = scalar_select %p304, %s23, 0
      %s306 = sadd.s32 %s305, %s303
      %s307 = smul.addr %s306, 4
      %s308 = scalar_lea.vmem %s0, %s307
      %p309 = scmp.lt.s32.totalorder %s22, 1
      %s310 = scalar_select %p309, %s22, 1
      %s311 = scalar_lea.vmem %s1, %s310
      %p312 = scmp.lt.s32.totalorder %s22, 1
      %s313 = scalar_select %p312, %s22, 1
      %p314 = scmp.lt.s32.totalorder %s23, 0
      %s315 = scalar_select %p314, %s23, 0
      %s316 = sadd.s32 %s315, %s313
      %s317 = smul.addr %s316, 8
      %s318 = scalar_lea.vmem %s7, %s317
      %v320 = vld [vmem:[%s308] sm:$0xf]
      %v321 = vld [vmem:[%s2] sm:$0xf]
      %v322 = vld [vmem:[%s2 + $0x4] sm:$0xf]
      %v323 = vld [vmem:[%s2 + $0x8] sm:$0xf]
      %v324 = vld [vmem:[%s2 + $0xc] sm:$0xf]
      %v325 = vld [vmem:[%s311] sm:$0x1]
      %v327 = vlaneseq
      %v328 = vshrl.u32 %v327, 7
      %v329 = vsub.s32 0, %v328
      %v330 = vrot.slane %v325, %v329
      %v336 = vunpack.c.l.b16 %v321
      %v337 = vunpack.c.l.b16 %v322
      %v338 = vunpack.c.l.b16 %v323
      %v339 = vunpack.c.l.b16 %v324
      %v340 = vpack.c.b16 %v337, %v336
      %v341 = vpack.c.b16 %v339, %v338
      %vm344 = vcmask 261120
      %v346 = vsel %vm344, %v320, 0
      %348 = vmatprep.subr.bf16.mxu0 0
      %349 = vmatpush1.bf16.msra.mxu0 %v340
      %350 = vmatprep.subr.bf16.mxu0 0
      %351 = vmatpush1.bf16.msra.mxu0 %v341
      %352 = vmatprep.subr.bf16.mxu0 0
      %353 = vmatpush1.bf16.msra.mxu0 0
      %354 = vmatprep.subr.bf16.mxu0 0
      %355 = vmatpush1.bf16.msra.mxu0 0
      %356 = vmatprep.subr.bf16.mxu0 0
      %357 = vmatpush1.bf16.msra.mxu0 0
      %358 = vmatprep.subr.bf16.mxu0 0
      %359 = vmatpush1.bf16.msra.mxu0 0
      %360 = vmatprep.subr.bf16.mxu0 0
      %361 = vmatpush1.bf16.msra.mxu0 0
      %362 = vmatprep.subr.bf16.mxu0 0
      %363 = vmatpush1.bf16.msra.mxu0 0
      %364 = vmatprep.subr.bf16.mxu0 0
      %365 = vmatpush1.bf16.msra.mxu0 0
      %366 = vmatprep.subr.bf16.mxu0 0
      %367 = vmatpush1.bf16.msra.mxu0 0
      %368 = vmatprep.subr.bf16.mxu0 0
      %369 = vmatpush1.bf16.msra.mxu0 0
      %370 = vmatprep.subr.bf16.mxu0 0
      %371 = vmatpush1.bf16.msra.mxu0 0
      %372 = vmatprep.subr.bf16.mxu0 0
      %373 = vmatpush1.bf16.msra.mxu0 0
      %374 = vmatprep.subr.bf16.mxu0 0
      %375 = vmatpush1.bf16.msra.mxu0 0
      %376 = vmatprep.subr.bf16.mxu0 0
      %377 = vmatpush1.bf16.msra.mxu0 0
      %378 = vmatprep.subr.bf16.mxu0 0
      %379 = vmatpush1.bf16.msra.mxu0 0
      %380 = vmatprep.mubr.bf16.mxu0 0
      %381 = vmatmul.mubr.bf16.gmra.mrb[0].mxu0 %v346
      %v382 = vpop.f32.mrb[0].mxu0
      %v383 = vadd.f32 %v330, %v382
      %v384 = vpop.f32.mrb[0].mxu0
      %v385 = vpop.f32.mrb[0].mxu0
      %v386 = vpop.f32.mrb[0].mxu0
      %387 = vdwg.mxu0
      %vm388 = vcmp.ge.f32.partialorder %v383, 0.0
      %v389 = vmul.f32 %v383, 0.01
      %v390 = vsel %vm388, %v383, %v389
      %v391 = vpack.c.bf16 %v390, %v390
      %v392 = vld [vmem:[%s3] sm:$0xf]
      %v393 = vld [vmem:[%s3 + $0x4] sm:$0xf]
      %v394 = vld [vmem:[%s3 + $0x8] sm:$0xf]
      %v395 = vld [vmem:[%s3 + $0xc] sm:$0xf]
      %v396 = vld [vmem:[%s4] sm:$0x1]
      %v398 = vlaneseq
      %v399 = vshrl.u32 %v398, 7
      %v400 = vsub.s32 0, %v399
      %v401 = vrot.slane %v396, %v400
      %v407 = vunpack.c.l.b16 %v392
      %v408 = vunpack.c.l.b16 %v393
      %v409 = vunpack.c.l.b16 %v394
      %v410 = vunpack.c.l.b16 %v395
      %v411 = vpack.c.b16 %v408, %v407
      %v412 = vpack.c.b16 %v410, %v409
      %v416 = vsel %vm344, %v391, 0
      %418 = vmatprep.subr.bf16.mxu0 0
      %419 = vmatpush1.bf16.msra.mxu0 %v411
      %420 = vmatprep.subr.bf16.mxu0 0
      %421 = vmatpush1.bf16.msra.mxu0 %v412
      %422 = vmatprep.subr.bf16.mxu0 0
      %423 = vmatpush1.bf16.msra.mxu0 0
      %424 = vmatprep.subr.bf16.mxu0 0
      %425 = vmatpush1.bf16.msra.mxu0 0
      %426 = vmatprep.subr.bf16.mxu0 0
      %427 = vmatpush1.bf16.msra.mxu0 0
      %428 = vmatprep.subr.bf16.mxu0 0
      %429 = vmatpush1.bf16.msra.mxu0 0
      %430 = vmatprep.subr.bf16.mxu0 0
      %431 = vmatpush1.bf16.msra.mxu0 0
      %432 = vmatprep.subr.bf16.mxu0 0
      %433 = vmatpush1.bf16.msra.mxu0 0
      %434 = vmatprep.subr.bf16.mxu0 0
      %435 = vmatpush1.bf16.msra.mxu0 0
      %436 = vmatprep.subr.bf16.mxu0 0
      %437 = vmatpush1.bf16.msra.mxu0 0
      %438 = vmatprep.subr.bf16.mxu0 0
      %439 = vmatpush1.bf16.msra.mxu0 0
      %440 = vmatprep.subr.bf16.mxu0 0
      %441 = vmatpush1.bf16.msra.mxu0 0
      %442 = vmatprep.subr.bf16.mxu0 0
      %443 = vmatpush1.bf16.msra.mxu0 0
      %444 = vmatprep.subr.bf16.mxu0 0
      %445 = vmatpush1.bf16.msra.mxu0 0
      %446 = vmatprep.subr.bf16.mxu0 0
      %447 = vmatpush1.bf16.msra.mxu0 0
      %448 = vmatprep.subr.bf16.mxu0 0
      %449 = vmatpush1.bf16.msra.mxu0 0
      %450 = vmatprep.mubr.bf16.mxu0 0
      %451 = vmatmul.mubr.bf16.gmra.mrb[0].mxu0 %v416
      %v452 = vpop.f32.mrb[0].mxu0
      %v453 = vadd.f32 %v401, %v452
      %v454 = vpop.f32.mrb[0].mxu0
      %v455 = vpop.f32.mrb[0].mxu0
      %v456 = vpop.f32.mrb[0].mxu0
      %457 = vdwg.mxu0
      %vm458 = vcmp.ge.f32.partialorder %v453, 0.0
      %v459 = vmul.f32 %v453, 0.01
      %v460 = vsel %vm458, %v453, %v459
      %v461 = vpack.c.bf16 %v460, %v460
      %v462 = vld [vmem:[%s5] sm:$0xf]
      %v463 = vld [vmem:[%s5 + $0x4] sm:$0xf]
      %v464 = vld [vmem:[%s5 + $0x8] sm:$0xf]
      %v465 = vld [vmem:[%s5 + $0xc] sm:$0xf]
      %v466 = vld [vmem:[%s6] sm:$0x1]
      %v468 = vlaneseq
      %v469 = vshrl.u32 %v468, 7
      %v470 = vsub.s32 0, %v469
      %v471 = vrot.slane %v466, %v470
      %v477 = vunpack.c.l.b16 %v462
      %v478 = vunpack.c.l.b16 %v463
      %v479 = vunpack.c.l.b16 %v464
      %v480 = vunpack.c.l.b16 %v465
      %v481 = vpack.c.b16 %v478, %v477
      %v482 = vpack.c.b16 %v480, %v479
      %v486 = vsel %vm344, %v461, 0
      %488 = vmatprep.subr.bf16.mxu0 0
      %489 = vmatpush1.bf16.msra.mxu0 %v481
      %490 = vmatprep.subr.bf16.mxu0 0
      %491 = vmatpush1.bf16.msra.mxu0 %v482
      %492 = vmatprep.subr.bf16.mxu0 0
      %493 = vmatpush1.bf16.msra.mxu0 0
      %494 = vmatprep.subr.bf16.mxu0 0
      %495 = vmatpush1.bf16.msra.mxu0 0
      %496 = vmatprep.subr.bf16.mxu0 0
      %497 = vmatpush1.bf16.msra.mxu0 0
      %498 = vmatprep.subr.bf16.mxu0 0
      %499 = vmatpush1.bf16.msra.mxu0 0
      %500 = vmatprep.subr.bf16.mxu0 0
      %501 = vmatpush1.bf16.msra.mxu0 0
      %502 = vmatprep.subr.bf16.mxu0 0
      %503 = vmatpush1.bf16.msra.mxu0 0
      %504 = vmatprep.subr.bf16.mxu0 0
      %505 = vmatpush1.bf16.msra.mxu0 0
      %506 = vmatprep.subr.bf16.mxu0 0
      %507 = vmatpush1.bf16.msra.mxu0 0
      %508 = vmatprep.subr.bf16.mxu0 0
      %509 = vmatpush1.bf16.msra.mxu0 0
      %510 = vmatprep.subr.bf16.mxu0 0
      %511 = vmatpush1.bf16.msra.mxu0 0
      %512 = vmatprep.subr.bf16.mxu0 0
      %513 = vmatpush1.bf16.msra.mxu0 0
      %514 = vmatprep.subr.bf16.mxu0 0
      %515 = vmatpush1.bf16.msra.mxu0 0
      %516 = vmatprep.subr.bf16.mxu0 0
      %517 = vmatpush1.bf16.msra.mxu0 0
      %518 = vmatprep.subr.bf16.mxu0 0
      %519 = vmatpush1.bf16.msra.mxu0 0
      %520 = vmatprep.mubr.bf16.mxu0 0
      %521 = vmatmul.mubr.bf16.gmra.mrb[0].mxu0 %v486
      %v522 = vpop.f32.mrb[0].mxu0
      %v523 = vadd.f32 %v471, %v522
      %v524 = vpop.f32.mrb[0].mxu0
      %v525 = vpop.f32.mrb[0].mxu0
      %v526 = vpop.f32.mrb[0].mxu0
      %527 = vdwg.mxu0
      %vm528 = vcmask 39936
      %529 = vst.msk [vmem:[%s318] sm:$0xff] %vm528, %v523
      %p530 = scmp.lt.s32.totalorder %s22, 1
      %s531 = scalar_select %p530, %s22, 1
      %p532 = scmp.lt.s32.totalorder %s23, 0
      %s533 = scalar_select %p532, %s23, 0
      %s534 = sadd.s32 %s533, %s531
      %s535 = smul.addr %s534, 8
      %s536 = scalar_lea.vmem %s7, %s535
      // Predicated region
      $region49: #{pct_forward.17} parent=47 // pred_check
        %p537 = pneg %p209
      $region50: #{pct_forward.17} parent=47 // pred_check_branch
        %539 = sbr.rel (%p537) target = $region52
      $region51: #{pct_forward.17} parent=47 // pred_region
        _
      $region52: #{pct_forward.17} parent=47 // pred_fallthru
        _
    $region48: #{pct_forward.17} parent=5 // pred_fallthru
      _
    %p540 = scmp.le.s32.totalorder 2, %s13
    // Predicated region
    $region53: #{pct_forward.17} parent=5 // pred_check
      %p541 = pneg %p540
    $region54: #{pct_forward.17} parent=5 // pred_check_branch
      %543 = sbr.rel (%p541) target = $region56
    $region55: #{pct_forward.17} parent=5 // pred_region
      %s544 = ssub.s32 %s13, 2
      // Predicated region
      $region57: #{pct_forward.17} parent=55 // pred_check
        %p545 = pneg %p215
      $region58: #{pct_forward.17} parent=55 // pred_check_branch
        %547 = sbr.rel (%p545) target = $region60
      $region59: #{pct_forward.17} parent=55 // pred_region
        %p548 = scmp.lt.s32.totalorder %s24, 1
        %s549 = scalar_select %p548, %s24, 1
        %p550 = scmp.lt.s32.totalorder %s25, 0
        %s551 = scalar_select %p550, %s25, 0
        %s552 = sadd.s32 %s551, %s549
        %s553 = smul.addr %s552, 8
        %s554 = scalar_lea.vmem %s7, %s553
      $region60: #{pct_forward.17} parent=55 // pred_fallthru
        _
    $region56: #{pct_forward.17} parent=5 // pred_fallthru
      _
  $region6: #{pct_forward.17} parent=0 // loop_footer
    %s17 = sadd.s32 1, %s13
  $region7: #{pct_forward.17} parent=0 // loop_footer_branch
    %12 = sbr.rel target = $region3
  $region8: #{pct_forward.17} parent=0 // loop_exit
    _

</llo_original>
